<compile_context>
chip_gen: v7x
topology: tpu7x:2x2x1
jax: 0.10.0
libtpu: 0.0.40
codegen_flags: <defaults>
</compile_context>

<pallas_src>
import math
import jax
import jax.numpy as jnp
from jax import lax
from jax.experimental import pallas as pl
from jax.experimental.pallas import tpu as pltpu

# ---------------- config (small, consistent with the module) ----------------
VOCAB = 11
VPAD = 128                      # lane-padded vocab dim for projection / loss
D_MODEL = 32
NHEAD = 4
NLAYERS = 2
DFF = 64
B = 2
S = 8
BS = B * S
HEAD_DIM = D_MODEL // NHEAD
LN_EPS = 1e-5
MASK_TOKEN_ID = VOCAB - 1
NEG_BIG = -1e30


def _layernorm(x, w, b):
    mu = jnp.mean(x, axis=-1, keepdims=True)
    var = jnp.mean((x - mu) ** 2, axis=-1, keepdims=True)
    return (x - mu) * lax.rsqrt(var + LN_EPS) * w + b


# ------------------------------ fused kernel ---------------------------------
def llada_kernel(ids_ref, tgt_ref, maskf_ref, bias_ref, pe_ref, table_ref,
                 wqkv_ref, bqkv_ref, wo_ref, bo_ref, ln1w_ref, ln1b_ref,
                 w1_ref, b1_ref, w2_ref, b2_ref, ln2w_ref, ln2b_ref,
                 wout_ref, bout_ref, mr_ref,
                 logits_ref, loss_ref):
    # ---- embedding: in-kernel one-hot (iota compare) -> table matmul --------
    ids = ids_ref[...]                                            # [BS, 1] int32
    vlanes = lax.broadcasted_iota(jnp.int32, (BS, VOCAB), 1)
    onehot = (vlanes == ids).astype(jnp.float32)                  # [BS, VOCAB]
    h = jnp.dot(onehot, table_ref[...], preferred_element_type=jnp.float32)
    h = h * jnp.float32(math.sqrt(D_MODEL)) + pe_ref[...]         # [BS, D]

    bias = bias_ref[...]                                          # [BS, BS] block-diag
    scale = jnp.float32(1.0 / math.sqrt(HEAD_DIM))

    # ---- NLAYERS post-norm TransformerEncoderLayers, all resident in VMEM ---
    for l in range(NLAYERS):
        x = h                                                     # [BS, D]
        qkv = jnp.dot(x, wqkv_ref[l],
                      preferred_element_type=jnp.float32) + bqkv_ref[l]  # [BS, 3D]
        wo = wo_ref[l]
        attn = jnp.zeros((BS, D_MODEL), jnp.float32)
        # concat over heads folded into the output projection:
        #   concat_h(o_h) @ Wo == sum_h o_h @ Wo[h*Dh:(h+1)*Dh, :]
        for hh in range(NHEAD):
            sl = slice(hh * HEAD_DIM, (hh + 1) * HEAD_DIM)
            qh = qkv[:, hh * HEAD_DIM:(hh + 1) * HEAD_DIM]
            kh = qkv[:, D_MODEL + hh * HEAD_DIM:D_MODEL + (hh + 1) * HEAD_DIM]
            vh = qkv[:, 2 * D_MODEL + hh * HEAD_DIM:2 * D_MODEL + (hh + 1) * HEAD_DIM]
            # q @ k^T for the whole flattened batch; cross-batch entries are
            # pushed to -1e30 by the additive block-diagonal bias.
            scores = lax.dot_general(qh, kh, (((1,), (1,)), ((), ())),
                                     preferred_element_type=jnp.float32)
            scores = scores * scale + bias                        # [BS, BS]
            m = jnp.max(scores, axis=-1, keepdims=True)
            e = jnp.exp(scores - m)
            p = e * pl.reciprocal(jnp.sum(e, axis=-1, keepdims=True), approx=True)
            oh = jnp.dot(p, vh, preferred_element_type=jnp.float32)        # [BS, Dh]
            attn = attn + jnp.dot(oh, wo[sl, :], preferred_element_type=jnp.float32)
        attn = attn + bo_ref[l]

        x1 = _layernorm(x + attn, ln1w_ref[l], ln1b_ref[l])
        hmid = jnp.maximum(
            jnp.dot(x1, w1_ref[l], preferred_element_type=jnp.float32) + b1_ref[l],
            0.0)
        ff = jnp.dot(hmid, w2_ref[l], preferred_element_type=jnp.float32) + b2_ref[l]
        h = _layernorm(x1 + ff, ln2w_ref[l], ln2b_ref[l])

    # ---- vocab projection (lane-padded to VPAD=128, dense store) ------------
    logits = jnp.dot(h, wout_ref[...],
                     preferred_element_type=jnp.float32) + bout_ref[...]   # [BS, VPAD]
    logits_ref[...] = logits

    # ---- masked cross-entropy loss ------------------------------------------
    vplanes = lax.broadcasted_iota(jnp.int32, (BS, VPAD), 1)
    valid = vplanes < VOCAB
    logits_m = jnp.where(valid, logits, jnp.float32(NEG_BIG))     # mask pad lanes
    mx = jnp.max(logits_m, axis=-1, keepdims=True)
    lse = jnp.log(jnp.sum(jnp.exp(logits_m - mx), axis=-1, keepdims=True)) + mx
    tgt = tgt_ref[...]                                            # [BS, 1] int32
    tgt_oh = (vplanes == tgt).astype(jnp.float32)                 # [BS, VPAD]
    picked = jnp.sum(tgt_oh * logits, axis=-1, keepdims=True)     # padded lanes: 0
    ce = lse - picked                                             # [BS, 1]
    maskf = maskf_ref[...]                                        # [BS, 1]
    mask_sum = jnp.sum(maskf) + 1e-10
    loss_ref[0, 0] = jnp.sum(ce * maskf) / mask_sum / mr_ref[0, 0]


# ------------------------------ wrapper --------------------------------------
def fused_forward(ids, tgt, maskf, mr, attn_bias, pe, params):
    inputs = [ids, tgt, maskf, attn_bias, pe, params["embed"],
              params["wqkv"], params["bqkv"], params["wo"], params["bo"],
              params["ln1w"], params["ln1b"], params["w1"], params["b1"],
              params["w2"], params["b2"], params["ln2w"], params["ln2b"],
              params["wout"], params["bout"], mr]
    in_specs = []
    for a in inputs[:-1]:                              # all VMEM, full-array block
        in_specs.append(pl.BlockSpec(a.shape, lambda i, _nd=a.ndim: (0,) * _nd))
    in_specs.append(pl.BlockSpec(memory_space=pltpu.MemorySpace.SMEM))   # mr scalar

    return pl.pallas_call(
        llada_kernel,
        grid=(1,),
        out_shape=(jax.ShapeDtypeStruct((BS, VPAD), jnp.float32),
                   jax.ShapeDtypeStruct((1, 1), jnp.float32)),
        in_specs=in_specs,
        out_specs=(pl.BlockSpec((BS, VPAD), lambda i: (0, 0)),
                   pl.BlockSpec(memory_space=pltpu.MemorySpace.SMEM)),
        compiler_params=pltpu.CompilerParams(dimension_semantics=("arbitrary",)),
    )(*inputs)


# ---------------------------- params / glue ----------------------------------
def init_params(key):
    ks = jax.random.split(key, 8)

    def rn(k, shape, scale=0.05):
        return jax.random.normal(k, shape, jnp.float32) * scale

    wout = rn(ks[6], (D_MODEL, VOCAB))
    wout_pad = jnp.zeros((D_MODEL, VPAD), jnp.float32).at[:, :VOCAB].set(wout)

    return dict(
        embed=rn(ks[0], (VOCAB, D_MODEL), 0.1),
        wqkv=rn(ks[1], (NLAYERS, D_MODEL, 3 * D_MODEL)),
        bqkv=jnp.zeros((NLAYERS, 1, 3 * D_MODEL), jnp.float32),
        wo=rn(ks[2], (NLAYERS, D_MODEL, D_MODEL)),
        bo=jnp.zeros((NLAYERS, 1, D_MODEL), jnp.float32),
        ln1w=jnp.ones((NLAYERS, 1, D_MODEL), jnp.float32),
        ln1b=jnp.zeros((NLAYERS, 1, D_MODEL), jnp.float32),
        w1=rn(ks[3], (NLAYERS, D_MODEL, DFF)),
        b1=jnp.zeros((NLAYERS, 1, DFF), jnp.float32),
        w2=rn(ks[4], (NLAYERS, DFF, D_MODEL)),
        b2=jnp.zeros((NLAYERS, 1, D_MODEL), jnp.float32),
        ln2w=jnp.ones((NLAYERS, 1, D_MODEL), jnp.float32),
        ln2b=jnp.zeros((NLAYERS, 1, D_MODEL), jnp.float32),
        wout=wout_pad,
        bout=jnp.zeros((1, VPAD), jnp.float32),
    )


def make_pe(seq_len, d_model):
    position = jnp.arange(seq_len, dtype=jnp.float32)[:, None]
    div_term = jnp.exp(jnp.arange(0, d_model, 2, dtype=jnp.float32)
                       * (-math.log(10000.0) / d_model))
    pe = jnp.zeros((seq_len, d_model), jnp.float32)
    pe = pe.at[:, 0::2].set(jnp.sin(position * div_term))
    pe = pe.at[:, 1::2].set(jnp.cos(position * div_term))
    return pe[None]                                               # [1, S, D]


def llada_forward(params, x, mask_ratio, key):
    # bernoulli token masking (attention_mask=None branch of the PyTorch module)
    mask = jax.random.bernoulli(key, mask_ratio, x.shape)
    masked_input = jnp.where(mask, MASK_TOKEN_ID, x).astype(jnp.int32)

    ids = masked_input.reshape(BS, 1)
    tgt = x.astype(jnp.int32).reshape(BS, 1)
    maskf = mask.astype(jnp.float32).reshape(BS, 1)
    mr = jnp.full((1, 1), mask_ratio, jnp.float32)

    pe = jnp.broadcast_to(make_pe(S, D_MODEL), (B, S, D_MODEL)).reshape(BS, D_MODEL)
    bid = jnp.repeat(jnp.arange(B, dtype=jnp.int32), S)
    attn_bias = jnp.where(bid[:, None] == bid[None, :], 0.0, NEG_BIG).astype(jnp.float32)

    logits_pad, loss = fused_forward(ids, tgt, maskf, mr, attn_bias, pe, params)
    logits = logits_pad.reshape(B, S, VPAD)[:, :, :VOCAB]
    return {"loss": loss[0, 0], "logits": logits, "mask": mask}


if __name__ == "__main__":
    key = jax.random.PRNGKey(0)
    k_param, k_tok, k_mask = jax.random.split(key, 3)
    params = init_params(k_param)
    x = jax.random.randint(k_tok, (B, S), 0, VOCAB - 1, dtype=jnp.int32)

    out = llada_forward(params, x, 0.5, k_mask)
    jax.block_until_ready(out["loss"])
    jax.block_until_ready(out["logits"])
    jax.block_until_ready(out["mask"])
    print("KERNEL_OK")
</pallas_src>

<mosaic_0001>
module attributes {stable_mosaic.version = 11 : i64} {
  func.func @llada_kernel(%arg0: i32, %arg1: memref<16x1xi32, #tpu.memory_space<vmem>>, %arg2: memref<16x1xi32, #tpu.memory_space<vmem>>, %arg3: memref<16x1xf32, #tpu.memory_space<vmem>>, %arg4: memref<16x16xf32, #tpu.memory_space<vmem>>, %arg5: memref<16x32xf32, #tpu.memory_space<vmem>>, %arg6: memref<11x32xf32, #tpu.memory_space<vmem>>, %arg7: memref<2x32x96xf32, #tpu.memory_space<vmem>>, %arg8: memref<2x1x96xf32, #tpu.memory_space<vmem>>, %arg9: memref<2x32x32xf32, #tpu.memory_space<vmem>>, %arg10: memref<2x1x32xf32, #tpu.memory_space<vmem>>, %arg11: memref<2x1x32xf32, #tpu.memory_space<vmem>>, %arg12: memref<2x1x32xf32, #tpu.memory_space<vmem>>, %arg13: memref<2x32x64xf32, #tpu.memory_space<vmem>>, %arg14: memref<2x1x64xf32, #tpu.memory_space<vmem>>, %arg15: memref<2x64x32xf32, #tpu.memory_space<vmem>>, %arg16: memref<2x1x32xf32, #tpu.memory_space<vmem>>, %arg17: memref<2x1x32xf32, #tpu.memory_space<vmem>>, %arg18: memref<2x1x32xf32, #tpu.memory_space<vmem>>, %arg19: memref<32x128xf32, #tpu.memory_space<vmem>>, %arg20: memref<1x128xf32, #tpu.memory_space<vmem>>, %arg21: memref<1x1xf32, #tpu.memory_space<smem>>, %arg22: memref<16x128xf32, #tpu.memory_space<vmem>>, %arg23: memref<1x1xf32, #tpu.memory_space<smem>>) attributes {dimension_semantics = [#tpu.dimension_semantics<arbitrary>], iteration_bounds = array<i64: 1>, scalar_prefetch = 0 : i64, scratch_operands = 0 : i64, tpu.core_type = #tpu.core_type<tc>, window_params = [{pipeline_mode = #tpu.pipeline_mode<synchronous>, transform_indices = @transform_0, window_bounds = array<i64: 16, 1>}, {pipeline_mode = #tpu.pipeline_mode<synchronous>, transform_indices = @transform_1, window_bounds = array<i64: 16, 1>}, {pipeline_mode = #tpu.pipeline_mode<synchronous>, transform_indices = @transform_2, window_bounds = array<i64: 16, 1>}, {pipeline_mode = #tpu.pipeline_mode<synchronous>, transform_indices = @transform_3, window_bounds = array<i64: 16, 16>}, {pipeline_mode = #tpu.pipeline_mode<synchronous>, transform_indices = @transform_4, window_bounds = array<i64: 16, 32>}, {pipeline_mode = #tpu.pipeline_mode<synchronous>, transform_indices = @transform_5, window_bounds = array<i64: 11, 32>}, {pipeline_mode = #tpu.pipeline_mode<synchronous>, transform_indices = @transform_6, window_bounds = array<i64: 2, 32, 96>}, {pipeline_mode = #tpu.pipeline_mode<synchronous>, transform_indices = @transform_7, window_bounds = array<i64: 2, 1, 96>}, {pipeline_mode = #tpu.pipeline_mode<synchronous>, transform_indices = @transform_8, window_bounds = array<i64: 2, 32, 32>}, {pipeline_mode = #tpu.pipeline_mode<synchronous>, transform_indices = @transform_9, window_bounds = array<i64: 2, 1, 32>}, {pipeline_mode = #tpu.pipeline_mode<synchronous>, transform_indices = @transform_10, window_bounds = array<i64: 2, 1, 32>}, {pipeline_mode = #tpu.pipeline_mode<synchronous>, transform_indices = @transform_11, window_bounds = array<i64: 2, 1, 32>}, {pipeline_mode = #tpu.pipeline_mode<synchronous>, transform_indices = @transform_12, window_bounds = array<i64: 2, 32, 64>}, {pipeline_mode = #tpu.pipeline_mode<synchronous>, transform_indices = @transform_13, window_bounds = array<i64: 2, 1, 64>}, {pipeline_mode = #tpu.pipeline_mode<synchronous>, transform_indices = @transform_14, window_bounds = array<i64: 2, 64, 32>}, {pipeline_mode = #tpu.pipeline_mode<synchronous>, transform_indices = @transform_15, window_bounds = array<i64: 2, 1, 32>}, {pipeline_mode = #tpu.pipeline_mode<synchronous>, transform_indices = @transform_16, window_bounds = array<i64: 2, 1, 32>}, {pipeline_mode = #tpu.pipeline_mode<synchronous>, transform_indices = @transform_17, window_bounds = array<i64: 2, 1, 32>}, {pipeline_mode = #tpu.pipeline_mode<synchronous>, transform_indices = @transform_18, window_bounds = array<i64: 32, 128>}, {pipeline_mode = #tpu.pipeline_mode<synchronous>, transform_indices = @transform_19, window_bounds = array<i64: 1, 128>}, {transform_indices = @transform_20, window_bounds = array<i64: 1, 1>}, {pipeline_mode = #tpu.pipeline_mode<synchronous>, transform_indices = @transform_21, window_bounds = array<i64: 16, 128>}, {transform_indices = @transform_22, window_bounds = array<i64: 1, 1>}]} {
    %c0 = arith.constant 0 : index
    %c0_0 = arith.constant 0 : index
    %0 = vector.load %arg1[%c0, %c0_0] : memref<16x1xi32, #tpu.memory_space<vmem>>, vector<16x1xi32>
    %1 = tpu.iota {dimensions = array<i32: 1>} : vector<16x11xi32>
    %2 = vector.broadcast %0 : vector<16x1xi32> to vector<16x11xi32>
    %3 = arith.cmpi eq, %1, %2 : vector<16x11xi32>
    %4 = arith.extui %3 : vector<16x11xi1> to vector<16x11xi32>
    %5 = arith.sitofp %4 : vector<16x11xi32> to vector<16x11xf32>
    %c0_1 = arith.constant 0 : index
    %c0_2 = arith.constant 0 : index
    %6 = vector.load %arg6[%c0_1, %c0_2] : memref<11x32xf32, #tpu.memory_space<vmem>>, vector<11x32xf32>
    %cst = arith.constant dense<0.000000e+00> : vector<16x32xf32>
    %7 = tpu.matmul %5, %6, %cst {dimension_numbers = #tpu.dot_dimension_numbers<[1], [0], [0], [1], [0, 0, 1, 1], [], []>} : vector<16x11xf32>, vector<11x32xf32>, vector<16x32xf32> -> vector<16x32xf32>
    %cst_3 = arith.constant 5.65685415 : f32
    %8 = vector.broadcast %cst_3 : f32 to vector<16x32xf32>
    %9 = arith.mulf %7, %8 : vector<16x32xf32>
    %c0_4 = arith.constant 0 : index
    %c0_5 = arith.constant 0 : index
    %10 = vector.load %arg5[%c0_4, %c0_5] : memref<16x32xf32, #tpu.memory_space<vmem>>, vector<16x32xf32>
    %11 = arith.addf %9, %10 : vector<16x32xf32>
    %c0_6 = arith.constant 0 : index
    %c0_7 = arith.constant 0 : index
    %12 = vector.load %arg4[%c0_6, %c0_7] : memref<16x16xf32, #tpu.memory_space<vmem>>, vector<16x16xf32>
    %c0_8 = arith.constant 0 : index
    %c0_9 = arith.constant 0 : index
    %c0_10 = arith.constant 0 : index
    %13 = vector.load %arg7[%c0_8, %c0_9, %c0_10] : memref<2x32x96xf32, #tpu.memory_space<vmem>>, vector<1x32x96xf32>
    %14 = vector.shape_cast %13 : vector<1x32x96xf32> to vector<32x96xf32>
    %cst_11 = arith.constant dense<0.000000e+00> : vector<16x96xf32>
    %15 = tpu.matmul %11, %14, %cst_11 {dimension_numbers = #tpu.dot_dimension_numbers<[1], [0], [0], [1], [0, 0, 1, 1], [], []>} : vector<16x32xf32>, vector<32x96xf32>, vector<16x96xf32> -> vector<16x96xf32>
    %c0_12 = arith.constant 0 : index
    %c0_13 = arith.constant 0 : index
    %c0_14 = arith.constant 0 : index
    %16 = vector.load %arg8[%c0_12, %c0_13, %c0_14] : memref<2x1x96xf32, #tpu.memory_space<vmem>>, vector<1x1x96xf32>
    %17 = vector.shape_cast %16 : vector<1x1x96xf32> to vector<1x96xf32>
    %18 = vector.broadcast %17 : vector<1x96xf32> to vector<16x96xf32>
    %19 = arith.addf %15, %18 : vector<16x96xf32>
    %c0_15 = arith.constant 0 : index
    %c0_16 = arith.constant 0 : index
    %c0_17 = arith.constant 0 : index
    %20 = vector.load %arg9[%c0_15, %c0_16, %c0_17] : memref<2x32x32xf32, #tpu.memory_space<vmem>>, vector<1x32x32xf32>
    %21 = vector.shape_cast %20 : vector<1x32x32xf32> to vector<32x32xf32>
    %cst_18 = arith.constant 0.000000e+00 : f32
    %22 = vector.broadcast %cst_18 : f32 to vector<16x32xf32>
    %23 = vector.extract_strided_slice %19 {offsets = [0, 0], sizes = [16, 8], strides = [1, 1]} : vector<16x96xf32> to vector<16x8xf32>
    %24 = vector.extract_strided_slice %19 {offsets = [0, 32], sizes = [16, 8], strides = [1, 1]} : vector<16x96xf32> to vector<16x8xf32>
    %25 = vector.extract_strided_slice %19 {offsets = [0, 64], sizes = [16, 8], strides = [1, 1]} : vector<16x96xf32> to vector<16x8xf32>
    %cst_19 = arith.constant dense<0.000000e+00> : vector<16x16xf32>
    %26 = tpu.matmul %23, %24, %cst_19 {dimension_numbers = #tpu.dot_dimension_numbers<[1], [1], [0], [0], [0, 0, 1, 0], [], []>} : vector<16x8xf32>, vector<16x8xf32>, vector<16x16xf32> -> vector<16x16xf32>
    %cst_20 = arith.constant 0.353553385 : f32
    %27 = vector.broadcast %cst_20 : f32 to vector<16x16xf32>
    %28 = arith.mulf %26, %27 : vector<16x16xf32>
    %29 = arith.addf %28, %12 : vector<16x16xf32>
    %cst_21 = arith.constant dense<0xFF800000> : vector<16xf32>
    %30 = vector.multi_reduction <maximumf>, %29, %cst_21 [1] : vector<16x16xf32> to vector<16xf32>
    %31 = vector.shape_cast %30 : vector<16xf32> to vector<16x1xf32>
    %32 = vector.broadcast %31 : vector<16x1xf32> to vector<16x16xf32>
    %33 = arith.subf %29, %32 : vector<16x16xf32>
    %34 = math.exp %33 : vector<16x16xf32>
    %cst_22 = arith.constant dense<0.000000e+00> : vector<16xf32>
    %35 = vector.multi_reduction <add>, %34, %cst_22 [1] : vector<16x16xf32> to vector<16xf32>
    %36 = vector.shape_cast %35 : vector<16xf32> to vector<16x1xf32>
    %37 = tpu.reciprocal %36 {approx = true} : vector<16x1xf32> -> vector<16x1xf32>
    %38 = vector.broadcast %37 : vector<16x1xf32> to vector<16x16xf32>
    %39 = arith.mulf %34, %38 : vector<16x16xf32>
    %cst_23 = arith.constant dense<0.000000e+00> : vector<16x8xf32>
    %40 = tpu.matmul %39, %25, %cst_23 {dimension_numbers = #tpu.dot_dimension_numbers<[1], [0], [0], [1], [0, 0, 1, 1], [], []>} : vector<16x16xf32>, vector<16x8xf32>, vector<16x8xf32> -> vector<16x8xf32>
    %41 = vector.extract_strided_slice %21 {offsets = [0, 0], sizes = [8, 32], strides = [1, 1]} : vector<32x32xf32> to vector<8x32xf32>
    %cst_24 = arith.constant dense<0.000000e+00> : vector<16x32xf32>
    %42 = tpu.matmul %40, %41, %cst_24 {dimension_numbers = #tpu.dot_dimension_numbers<[1], [0], [0], [1], [0, 0, 1, 1], [], []>} : vector<16x8xf32>, vector<8x32xf32>, vector<16x32xf32> -> vector<16x32xf32>
    %43 = arith.addf %22, %42 : vector<16x32xf32>
    %44 = vector.extract_strided_slice %19 {offsets = [0, 8], sizes = [16, 8], strides = [1, 1]} : vector<16x96xf32> to vector<16x8xf32>
    %45 = vector.extract_strided_slice %19 {offsets = [0, 40], sizes = [16, 8], strides = [1, 1]} : vector<16x96xf32> to vector<16x8xf32>
    %46 = vector.extract_strided_slice %19 {offsets = [0, 72], sizes = [16, 8], strides = [1, 1]} : vector<16x96xf32> to vector<16x8xf32>
    %cst_25 = arith.constant dense<0.000000e+00> : vector<16x16xf32>
    %47 = tpu.matmul %44, %45, %cst_25 {dimension_numbers = #tpu.dot_dimension_numbers<[1], [1], [0], [0], [0, 0, 1, 0], [], []>} : vector<16x8xf32>, vector<16x8xf32>, vector<16x16xf32> -> vector<16x16xf32>
    %cst_26 = arith.constant 0.353553385 : f32
    %48 = vector.broadcast %cst_26 : f32 to vector<16x16xf32>
    %49 = arith.mulf %47, %48 : vector<16x16xf32>
    %50 = arith.addf %49, %12 : vector<16x16xf32>
    %cst_27 = arith.constant dense<0xFF800000> : vector<16xf32>
    %51 = vector.multi_reduction <maximumf>, %50, %cst_27 [1] : vector<16x16xf32> to vector<16xf32>
    %52 = vector.shape_cast %51 : vector<16xf32> to vector<16x1xf32>
    %53 = vector.broadcast %52 : vector<16x1xf32> to vector<16x16xf32>
    %54 = arith.subf %50, %53 : vector<16x16xf32>
    %55 = math.exp %54 : vector<16x16xf32>
    %cst_28 = arith.constant dense<0.000000e+00> : vector<16xf32>
    %56 = vector.multi_reduction <add>, %55, %cst_28 [1] : vector<16x16xf32> to vector<16xf32>
    %57 = vector.shape_cast %56 : vector<16xf32> to vector<16x1xf32>
    %58 = tpu.reciprocal %57 {approx = true} : vector<16x1xf32> -> vector<16x1xf32>
    %59 = vector.broadcast %58 : vector<16x1xf32> to vector<16x16xf32>
    %60 = arith.mulf %55, %59 : vector<16x16xf32>
    %cst_29 = arith.constant dense<0.000000e+00> : vector<16x8xf32>
    %61 = tpu.matmul %60, %46, %cst_29 {dimension_numbers = #tpu.dot_dimension_numbers<[1], [0], [0], [1], [0, 0, 1, 1], [], []>} : vector<16x16xf32>, vector<16x8xf32>, vector<16x8xf32> -> vector<16x8xf32>
    %62 = vector.extract_strided_slice %21 {offsets = [8, 0], sizes = [8, 32], strides = [1, 1]} : vector<32x32xf32> to vector<8x32xf32>
    %cst_30 = arith.constant dense<0.000000e+00> : vector<16x32xf32>
    %63 = tpu.matmul %61, %62, %cst_30 {dimension_numbers = #tpu.dot_dimension_numbers<[1], [0], [0], [1], [0, 0, 1, 1], [], []>} : vector<16x8xf32>, vector<8x32xf32>, vector<16x32xf32> -> vector<16x32xf32>
    %64 = arith.addf %43, %63 : vector<16x32xf32>
    %65 = vector.extract_strided_slice %19 {offsets = [0, 16], sizes = [16, 8], strides = [1, 1]} : vector<16x96xf32> to vector<16x8xf32>
    %66 = vector.extract_strided_slice %19 {offsets = [0, 48], sizes = [16, 8], strides = [1, 1]} : vector<16x96xf32> to vector<16x8xf32>
    %67 = vector.extract_strided_slice %19 {offsets = [0, 80], sizes = [16, 8], strides = [1, 1]} : vector<16x96xf32> to vector<16x8xf32>
    %cst_31 = arith.constant dense<0.000000e+00> : vector<16x16xf32>
    %68 = tpu.matmul %65, %66, %cst_31 {dimension_numbers = #tpu.dot_dimension_numbers<[1], [1], [0], [0], [0, 0, 1, 0], [], []>} : vector<16x8xf32>, vector<16x8xf32>, vector<16x16xf32> -> vector<16x16xf32>
    %cst_32 = arith.constant 0.353553385 : f32
    %69 = vector.broadcast %cst_32 : f32 to vector<16x16xf32>
    %70 = arith.mulf %68, %69 : vector<16x16xf32>
    %71 = arith.addf %70, %12 : vector<16x16xf32>
    %cst_33 = arith.constant dense<0xFF800000> : vector<16xf32>
    %72 = vector.multi_reduction <maximumf>, %71, %cst_33 [1] : vector<16x16xf32> to vector<16xf32>
    %73 = vector.shape_cast %72 : vector<16xf32> to vector<16x1xf32>
    %74 = vector.broadcast %73 : vector<16x1xf32> to vector<16x16xf32>
    %75 = arith.subf %71, %74 : vector<16x16xf32>
    %76 = math.exp %75 : vector<16x16xf32>
    %cst_34 = arith.constant dense<0.000000e+00> : vector<16xf32>
    %77 = vector.multi_reduction <add>, %76, %cst_34 [1] : vector<16x16xf32> to vector<16xf32>
    %78 = vector.shape_cast %77 : vector<16xf32> to vector<16x1xf32>
    %79 = tpu.reciprocal %78 {approx = true} : vector<16x1xf32> -> vector<16x1xf32>
    %80 = vector.broadcast %79 : vector<16x1xf32> to vector<16x16xf32>
    %81 = arith.mulf %76, %80 : vector<16x16xf32>
    %cst_35 = arith.constant dense<0.000000e+00> : vector<16x8xf32>
    %82 = tpu.matmul %81, %67, %cst_35 {dimension_numbers = #tpu.dot_dimension_numbers<[1], [0], [0], [1], [0, 0, 1, 1], [], []>} : vector<16x16xf32>, vector<16x8xf32>, vector<16x8xf32> -> vector<16x8xf32>
    %83 = vector.extract_strided_slice %21 {offsets = [16, 0], sizes = [8, 32], strides = [1, 1]} : vector<32x32xf32> to vector<8x32xf32>
    %cst_36 = arith.constant dense<0.000000e+00> : vector<16x32xf32>
    %84 = tpu.matmul %82, %83, %cst_36 {dimension_numbers = #tpu.dot_dimension_numbers<[1], [0], [0], [1], [0, 0, 1, 1], [], []>} : vector<16x8xf32>, vector<8x32xf32>, vector<16x32xf32> -> vector<16x32xf32>
    %85 = arith.addf %64, %84 : vector<16x32xf32>
    %86 = vector.extract_strided_slice %19 {offsets = [0, 24], sizes = [16, 8], strides = [1, 1]} : vector<16x96xf32> to vector<16x8xf32>
    %87 = vector.extract_strided_slice %19 {offsets = [0, 56], sizes = [16, 8], strides = [1, 1]} : vector<16x96xf32> to vector<16x8xf32>
    %88 = vector.extract_strided_slice %19 {offsets = [0, 88], sizes = [16, 8], strides = [1, 1]} : vector<16x96xf32> to vector<16x8xf32>
    %cst_37 = arith.constant dense<0.000000e+00> : vector<16x16xf32>
    %89 = tpu.matmul %86, %87, %cst_37 {dimension_numbers = #tpu.dot_dimension_numbers<[1], [1], [0], [0], [0, 0, 1, 0], [], []>} : vector<16x8xf32>, vector<16x8xf32>, vector<16x16xf32> -> vector<16x16xf32>
    %cst_38 = arith.constant 0.353553385 : f32
    %90 = vector.broadcast %cst_38 : f32 to vector<16x16xf32>
    %91 = arith.mulf %89, %90 : vector<16x16xf32>
    %92 = arith.addf %91, %12 : vector<16x16xf32>
    %cst_39 = arith.constant dense<0xFF800000> : vector<16xf32>
    %93 = vector.multi_reduction <maximumf>, %92, %cst_39 [1] : vector<16x16xf32> to vector<16xf32>
    %94 = vector.shape_cast %93 : vector<16xf32> to vector<16x1xf32>
    %95 = vector.broadcast %94 : vector<16x1xf32> to vector<16x16xf32>
    %96 = arith.subf %92, %95 : vector<16x16xf32>
    %97 = math.exp %96 : vector<16x16xf32>
    %cst_40 = arith.constant dense<0.000000e+00> : vector<16xf32>
    %98 = vector.multi_reduction <add>, %97, %cst_40 [1] : vector<16x16xf32> to vector<16xf32>
    %99 = vector.shape_cast %98 : vector<16xf32> to vector<16x1xf32>
    %100 = tpu.reciprocal %99 {approx = true} : vector<16x1xf32> -> vector<16x1xf32>
    %101 = vector.broadcast %100 : vector<16x1xf32> to vector<16x16xf32>
    %102 = arith.mulf %97, %101 : vector<16x16xf32>
    %cst_41 = arith.constant dense<0.000000e+00> : vector<16x8xf32>
    %103 = tpu.matmul %102, %88, %cst_41 {dimension_numbers = #tpu.dot_dimension_numbers<[1], [0], [0], [1], [0, 0, 1, 1], [], []>} : vector<16x16xf32>, vector<16x8xf32>, vector<16x8xf32> -> vector<16x8xf32>
    %104 = vector.extract_strided_slice %21 {offsets = [24, 0], sizes = [8, 32], strides = [1, 1]} : vector<32x32xf32> to vector<8x32xf32>
    %cst_42 = arith.constant dense<0.000000e+00> : vector<16x32xf32>
    %105 = tpu.matmul %103, %104, %cst_42 {dimension_numbers = #tpu.dot_dimension_numbers<[1], [0], [0], [1], [0, 0, 1, 1], [], []>} : vector<16x8xf32>, vector<8x32xf32>, vector<16x32xf32> -> vector<16x32xf32>
    %106 = arith.addf %85, %105 : vector<16x32xf32>
    %c0_43 = arith.constant 0 : index
    %c0_44 = arith.constant 0 : index
    %c0_45 = arith.constant 0 : index
    %107 = vector.load %arg10[%c0_43, %c0_44, %c0_45] : memref<2x1x32xf32, #tpu.memory_space<vmem>>, vector<1x1x32xf32>
    %108 = vector.shape_cast %107 : vector<1x1x32xf32> to vector<1x32xf32>
    %109 = vector.broadcast %108 : vector<1x32xf32> to vector<16x32xf32>
    %110 = arith.addf %106, %109 : vector<16x32xf32>
    %111 = arith.addf %11, %110 : vector<16x32xf32>
    %c0_46 = arith.constant 0 : index
    %c0_47 = arith.constant 0 : index
    %c0_48 = arith.constant 0 : index
    %112 = vector.load %arg11[%c0_46, %c0_47, %c0_48] : memref<2x1x32xf32, #tpu.memory_space<vmem>>, vector<1x1x32xf32>
    %113 = vector.shape_cast %112 : vector<1x1x32xf32> to vector<1x32xf32>
    %c0_49 = arith.constant 0 : index
    %c0_50 = arith.constant 0 : index
    %c0_51 = arith.constant 0 : index
    %114 = vector.load %arg12[%c0_49, %c0_50, %c0_51] : memref<2x1x32xf32, #tpu.memory_space<vmem>>, vector<1x1x32xf32>
    %115 = vector.shape_cast %114 : vector<1x1x32xf32> to vector<1x32xf32>
    %cst_52 = arith.constant dense<0.000000e+00> : vector<16xf32>
    %116 = vector.multi_reduction <add>, %111, %cst_52 [1] : vector<16x32xf32> to vector<16xf32>
    %117 = vector.shape_cast %116 : vector<16xf32> to vector<16x1xf32>
    %cst_53 = arith.constant 3.200000e+01 : f32
    %118 = vector.broadcast %cst_53 : f32 to vector<16x1xf32>
    %119 = arith.divf %117, %118 : vector<16x1xf32>
    %120 = vector.broadcast %119 : vector<16x1xf32> to vector<16x32xf32>
    %121 = arith.subf %111, %120 : vector<16x32xf32>
    %122 = arith.mulf %121, %121 : vector<16x32xf32>
    %cst_54 = arith.constant dense<0.000000e+00> : vector<16xf32>
    %123 = vector.multi_reduction <add>, %122, %cst_54 [1] : vector<16x32xf32> to vector<16xf32>
    %124 = vector.shape_cast %123 : vector<16xf32> to vector<16x1xf32>
    %cst_55 = arith.constant 3.200000e+01 : f32
    %125 = vector.broadcast %cst_55 : f32 to vector<16x1xf32>
    %126 = arith.divf %124, %125 : vector<16x1xf32>
    %127 = vector.broadcast %119 : vector<16x1xf32> to vector<16x32xf32>
    %128 = arith.subf %111, %127 : vector<16x32xf32>
    %cst_56 = arith.constant 9.99999974E-6 : f32
    %129 = vector.broadcast %cst_56 : f32 to vector<16x1xf32>
    %130 = arith.addf %126, %129 : vector<16x1xf32>
    %131 = math.rsqrt %130 : vector<16x1xf32>
    %132 = vector.broadcast %131 : vector<16x1xf32> to vector<16x32xf32>
    %133 = arith.mulf %128, %132 : vector<16x32xf32>
    %134 = vector.broadcast %113 : vector<1x32xf32> to vector<16x32xf32>
    %135 = arith.mulf %133, %134 : vector<16x32xf32>
    %136 = vector.broadcast %115 : vector<1x32xf32> to vector<16x32xf32>
    %137 = arith.addf %135, %136 : vector<16x32xf32>
    %c0_57 = arith.constant 0 : index
    %c0_58 = arith.constant 0 : index
    %c0_59 = arith.constant 0 : index
    %138 = vector.load %arg13[%c0_57, %c0_58, %c0_59] : memref<2x32x64xf32, #tpu.memory_space<vmem>>, vector<1x32x64xf32>
    %139 = vector.shape_cast %138 : vector<1x32x64xf32> to vector<32x64xf32>
    %cst_60 = arith.constant dense<0.000000e+00> : vector<16x64xf32>
    %140 = tpu.matmul %137, %139, %cst_60 {dimension_numbers = #tpu.dot_dimension_numbers<[1], [0], [0], [1], [0, 0, 1, 1], [], []>} : vector<16x32xf32>, vector<32x64xf32>, vector<16x64xf32> -> vector<16x64xf32>
    %c0_61 = arith.constant 0 : index
    %c0_62 = arith.constant 0 : index
    %c0_63 = arith.constant 0 : index
    %141 = vector.load %arg14[%c0_61, %c0_62, %c0_63] : memref<2x1x64xf32, #tpu.memory_space<vmem>>, vector<1x1x64xf32>
    %142 = vector.shape_cast %141 : vector<1x1x64xf32> to vector<1x64xf32>
    %143 = vector.broadcast %142 : vector<1x64xf32> to vector<16x64xf32>
    %144 = arith.addf %140, %143 : vector<16x64xf32>
    %cst_64 = arith.constant 0.000000e+00 : f32
    %145 = vector.broadcast %cst_64 : f32 to vector<16x64xf32>
    %146 = arith.maximumf %144, %145 : vector<16x64xf32>
    %c0_65 = arith.constant 0 : index
    %c0_66 = arith.constant 0 : index
    %c0_67 = arith.constant 0 : index
    %147 = vector.load %arg15[%c0_65, %c0_66, %c0_67] : memref<2x64x32xf32, #tpu.memory_space<vmem>>, vector<1x64x32xf32>
    %148 = vector.shape_cast %147 : vector<1x64x32xf32> to vector<64x32xf32>
    %cst_68 = arith.constant dense<0.000000e+00> : vector<16x32xf32>
    %149 = tpu.matmul %146, %148, %cst_68 {dimension_numbers = #tpu.dot_dimension_numbers<[1], [0], [0], [1], [0, 0, 1, 1], [], []>} : vector<16x64xf32>, vector<64x32xf32>, vector<16x32xf32> -> vector<16x32xf32>
    %c0_69 = arith.constant 0 : index
    %c0_70 = arith.constant 0 : index
    %c0_71 = arith.constant 0 : index
    %150 = vector.load %arg16[%c0_69, %c0_70, %c0_71] : memref<2x1x32xf32, #tpu.memory_space<vmem>>, vector<1x1x32xf32>
    %151 = vector.shape_cast %150 : vector<1x1x32xf32> to vector<1x32xf32>
    %152 = vector.broadcast %151 : vector<1x32xf32> to vector<16x32xf32>
    %153 = arith.addf %149, %152 : vector<16x32xf32>
    %154 = arith.addf %137, %153 : vector<16x32xf32>
    %c0_72 = arith.constant 0 : index
    %c0_73 = arith.constant 0 : index
    %c0_74 = arith.constant 0 : index
    %155 = vector.load %arg17[%c0_72, %c0_73, %c0_74] : memref<2x1x32xf32, #tpu.memory_space<vmem>>, vector<1x1x32xf32>
    %156 = vector.shape_cast %155 : vector<1x1x32xf32> to vector<1x32xf32>
    %c0_75 = arith.constant 0 : index
    %c0_76 = arith.constant 0 : index
    %c0_77 = arith.constant 0 : index
    %157 = vector.load %arg18[%c0_75, %c0_76, %c0_77] : memref<2x1x32xf32, #tpu.memory_space<vmem>>, vector<1x1x32xf32>
    %158 = vector.shape_cast %157 : vector<1x1x32xf32> to vector<1x32xf32>
    %cst_78 = arith.constant dense<0.000000e+00> : vector<16xf32>
    %159 = vector.multi_reduction <add>, %154, %cst_78 [1] : vector<16x32xf32> to vector<16xf32>
    %160 = vector.shape_cast %159 : vector<16xf32> to vector<16x1xf32>
    %cst_79 = arith.constant 3.200000e+01 : f32
    %161 = vector.broadcast %cst_79 : f32 to vector<16x1xf32>
    %162 = arith.divf %160, %161 : vector<16x1xf32>
    %163 = vector.broadcast %162 : vector<16x1xf32> to vector<16x32xf32>
    %164 = arith.subf %154, %163 : vector<16x32xf32>
    %165 = arith.mulf %164, %164 : vector<16x32xf32>
    %cst_80 = arith.constant dense<0.000000e+00> : vector<16xf32>
    %166 = vector.multi_reduction <add>, %165, %cst_80 [1] : vector<16x32xf32> to vector<16xf32>
    %167 = vector.shape_cast %166 : vector<16xf32> to vector<16x1xf32>
    %cst_81 = arith.constant 3.200000e+01 : f32
    %168 = vector.broadcast %cst_81 : f32 to vector<16x1xf32>
    %169 = arith.divf %167, %168 : vector<16x1xf32>
    %170 = vector.broadcast %162 : vector<16x1xf32> to vector<16x32xf32>
    %171 = arith.subf %154, %170 : vector<16x32xf32>
    %cst_82 = arith.constant 9.99999974E-6 : f32
    %172 = vector.broadcast %cst_82 : f32 to vector<16x1xf32>
    %173 = arith.addf %169, %172 : vector<16x1xf32>
    %174 = math.rsqrt %173 : vector<16x1xf32>
    %175 = vector.broadcast %174 : vector<16x1xf32> to vector<16x32xf32>
    %176 = arith.mulf %171, %175 : vector<16x32xf32>
    %177 = vector.broadcast %156 : vector<1x32xf32> to vector<16x32xf32>
    %178 = arith.mulf %176, %177 : vector<16x32xf32>
    %179 = vector.broadcast %158 : vector<1x32xf32> to vector<16x32xf32>
    %180 = arith.addf %178, %179 : vector<16x32xf32>
    %c1 = arith.constant 1 : index
    %c0_83 = arith.constant 0 : index
    %c0_84 = arith.constant 0 : index
    %181 = vector.load %arg7[%c1, %c0_83, %c0_84] : memref<2x32x96xf32, #tpu.memory_space<vmem>>, vector<1x32x96xf32>
    %182 = vector.shape_cast %181 : vector<1x32x96xf32> to vector<32x96xf32>
    %cst_85 = arith.constant dense<0.000000e+00> : vector<16x96xf32>
    %183 = tpu.matmul %180, %182, %cst_85 {dimension_numbers = #tpu.dot_dimension_numbers<[1], [0], [0], [1], [0, 0, 1, 1], [], []>} : vector<16x32xf32>, vector<32x96xf32>, vector<16x96xf32> -> vector<16x96xf32>
    %c1_86 = arith.constant 1 : index
    %c0_87 = arith.constant 0 : index
    %c0_88 = arith.constant 0 : index
    %184 = vector.load %arg8[%c1_86, %c0_87, %c0_88] : memref<2x1x96xf32, #tpu.memory_space<vmem>>, vector<1x1x96xf32>
    %185 = vector.shape_cast %184 : vector<1x1x96xf32> to vector<1x96xf32>
    %186 = vector.broadcast %185 : vector<1x96xf32> to vector<16x96xf32>
    %187 = arith.addf %183, %186 : vector<16x96xf32>
    %c1_89 = arith.constant 1 : index
    %c0_90 = arith.constant 0 : index
    %c0_91 = arith.constant 0 : index
    %188 = vector.load %arg9[%c1_89, %c0_90, %c0_91] : memref<2x32x32xf32, #tpu.memory_space<vmem>>, vector<1x32x32xf32>
    %189 = vector.shape_cast %188 : vector<1x32x32xf32> to vector<32x32xf32>
    %cst_92 = arith.constant 0.000000e+00 : f32
    %190 = vector.broadcast %cst_92 : f32 to vector<16x32xf32>
    %191 = vector.extract_strided_slice %187 {offsets = [0, 0], sizes = [16, 8], strides = [1, 1]} : vector<16x96xf32> to vector<16x8xf32>
    %192 = vector.extract_strided_slice %187 {offsets = [0, 32], sizes = [16, 8], strides = [1, 1]} : vector<16x96xf32> to vector<16x8xf32>
    %193 = vector.extract_strided_slice %187 {offsets = [0, 64], sizes = [16, 8], strides = [1, 1]} : vector<16x96xf32> to vector<16x8xf32>
    %cst_93 = arith.constant dense<0.000000e+00> : vector<16x16xf32>
    %194 = tpu.matmul %191, %192, %cst_93 {dimension_numbers = #tpu.dot_dimension_numbers<[1], [1], [0], [0], [0, 0, 1, 0], [], []>} : vector<16x8xf32>, vector<16x8xf32>, vector<16x16xf32> -> vector<16x16xf32>
    %cst_94 = arith.constant 0.353553385 : f32
    %195 = vector.broadcast %cst_94 : f32 to vector<16x16xf32>
    %196 = arith.mulf %194, %195 : vector<16x16xf32>
    %197 = arith.addf %196, %12 : vector<16x16xf32>
    %cst_95 = arith.constant dense<0xFF800000> : vector<16xf32>
    %198 = vector.multi_reduction <maximumf>, %197, %cst_95 [1] : vector<16x16xf32> to vector<16xf32>
    %199 = vector.shape_cast %198 : vector<16xf32> to vector<16x1xf32>
    %200 = vector.broadcast %199 : vector<16x1xf32> to vector<16x16xf32>
    %201 = arith.subf %197, %200 : vector<16x16xf32>
    %202 = math.exp %201 : vector<16x16xf32>
    %cst_96 = arith.constant dense<0.000000e+00> : vector<16xf32>
    %203 = vector.multi_reduction <add>, %202, %cst_96 [1] : vector<16x16xf32> to vector<16xf32>
    %204 = vector.shape_cast %203 : vector<16xf32> to vector<16x1xf32>
    %205 = tpu.reciprocal %204 {approx = true} : vector<16x1xf32> -> vector<16x1xf32>
    %206 = vector.broadcast %205 : vector<16x1xf32> to vector<16x16xf32>
    %207 = arith.mulf %202, %206 : vector<16x16xf32>
    %cst_97 = arith.constant dense<0.000000e+00> : vector<16x8xf32>
    %208 = tpu.matmul %207, %193, %cst_97 {dimension_numbers = #tpu.dot_dimension_numbers<[1], [0], [0], [1], [0, 0, 1, 1], [], []>} : vector<16x16xf32>, vector<16x8xf32>, vector<16x8xf32> -> vector<16x8xf32>
    %209 = vector.extract_strided_slice %189 {offsets = [0, 0], sizes = [8, 32], strides = [1, 1]} : vector<32x32xf32> to vector<8x32xf32>
    %cst_98 = arith.constant dense<0.000000e+00> : vector<16x32xf32>
    %210 = tpu.matmul %208, %209, %cst_98 {dimension_numbers = #tpu.dot_dimension_numbers<[1], [0], [0], [1], [0, 0, 1, 1], [], []>} : vector<16x8xf32>, vector<8x32xf32>, vector<16x32xf32> -> vector<16x32xf32>
    %211 = arith.addf %190, %210 : vector<16x32xf32>
    %212 = vector.extract_strided_slice %187 {offsets = [0, 8], sizes = [16, 8], strides = [1, 1]} : vector<16x96xf32> to vector<16x8xf32>
    %213 = vector.extract_strided_slice %187 {offsets = [0, 40], sizes = [16, 8], strides = [1, 1]} : vector<16x96xf32> to vector<16x8xf32>
    %214 = vector.extract_strided_slice %187 {offsets = [0, 72], sizes = [16, 8], strides = [1, 1]} : vector<16x96xf32> to vector<16x8xf32>
    %cst_99 = arith.constant dense<0.000000e+00> : vector<16x16xf32>
    %215 = tpu.matmul %212, %213, %cst_99 {dimension_numbers = #tpu.dot_dimension_numbers<[1], [1], [0], [0], [0, 0, 1, 0], [], []>} : vector<16x8xf32>, vector<16x8xf32>, vector<16x16xf32> -> vector<16x16xf32>
    %cst_100 = arith.constant 0.353553385 : f32
    %216 = vector.broadcast %cst_100 : f32 to vector<16x16xf32>
    %217 = arith.mulf %215, %216 : vector<16x16xf32>
    %218 = arith.addf %217, %12 : vector<16x16xf32>
    %cst_101 = arith.constant dense<0xFF800000> : vector<16xf32>
    %219 = vector.multi_reduction <maximumf>, %218, %cst_101 [1] : vector<16x16xf32> to vector<16xf32>
    %220 = vector.shape_cast %219 : vector<16xf32> to vector<16x1xf32>
    %221 = vector.broadcast %220 : vector<16x1xf32> to vector<16x16xf32>
    %222 = arith.subf %218, %221 : vector<16x16xf32>
    %223 = math.exp %222 : vector<16x16xf32>
    %cst_102 = arith.constant dense<0.000000e+00> : vector<16xf32>
    %224 = vector.multi_reduction <add>, %223, %cst_102 [1] : vector<16x16xf32> to vector<16xf32>
    %225 = vector.shape_cast %224 : vector<16xf32> to vector<16x1xf32>
    %226 = tpu.reciprocal %225 {approx = true} : vector<16x1xf32> -> vector<16x1xf32>
    %227 = vector.broadcast %226 : vector<16x1xf32> to vector<16x16xf32>
    %228 = arith.mulf %223, %227 : vector<16x16xf32>
    %cst_103 = arith.constant dense<0.000000e+00> : vector<16x8xf32>
    %229 = tpu.matmul %228, %214, %cst_103 {dimension_numbers = #tpu.dot_dimension_numbers<[1], [0], [0], [1], [0, 0, 1, 1], [], []>} : vector<16x16xf32>, vector<16x8xf32>, vector<16x8xf32> -> vector<16x8xf32>
    %230 = vector.extract_strided_slice %189 {offsets = [8, 0], sizes = [8, 32], strides = [1, 1]} : vector<32x32xf32> to vector<8x32xf32>
    %cst_104 = arith.constant dense<0.000000e+00> : vector<16x32xf32>
    %231 = tpu.matmul %229, %230, %cst_104 {dimension_numbers = #tpu.dot_dimension_numbers<[1], [0], [0], [1], [0, 0, 1, 1], [], []>} : vector<16x8xf32>, vector<8x32xf32>, vector<16x32xf32> -> vector<16x32xf32>
    %232 = arith.addf %211, %231 : vector<16x32xf32>
    %233 = vector.extract_strided_slice %187 {offsets = [0, 16], sizes = [16, 8], strides = [1, 1]} : vector<16x96xf32> to vector<16x8xf32>
    %234 = vector.extract_strided_slice %187 {offsets = [0, 48], sizes = [16, 8], strides = [1, 1]} : vector<16x96xf32> to vector<16x8xf32>
    %235 = vector.extract_strided_slice %187 {offsets = [0, 80], sizes = [16, 8], strides = [1, 1]} : vector<16x96xf32> to vector<16x8xf32>
    %cst_105 = arith.constant dense<0.000000e+00> : vector<16x16xf32>
    %236 = tpu.matmul %233, %234, %cst_105 {dimension_numbers = #tpu.dot_dimension_numbers<[1], [1], [0], [0], [0, 0, 1, 0], [], []>} : vector<16x8xf32>, vector<16x8xf32>, vector<16x16xf32> -> vector<16x16xf32>
    %cst_106 = arith.constant 0.353553385 : f32
    %237 = vector.broadcast %cst_106 : f32 to vector<16x16xf32>
    %238 = arith.mulf %236, %237 : vector<16x16xf32>
    %239 = arith.addf %238, %12 : vector<16x16xf32>
    %cst_107 = arith.constant dense<0xFF800000> : vector<16xf32>
    %240 = vector.multi_reduction <maximumf>, %239, %cst_107 [1] : vector<16x16xf32> to vector<16xf32>
    %241 = vector.shape_cast %240 : vector<16xf32> to vector<16x1xf32>
    %242 = vector.broadcast %241 : vector<16x1xf32> to vector<16x16xf32>
    %243 = arith.subf %239, %242 : vector<16x16xf32>
    %244 = math.exp %243 : vector<16x16xf32>
    %cst_108 = arith.constant dense<0.000000e+00> : vector<16xf32>
    %245 = vector.multi_reduction <add>, %244, %cst_108 [1] : vector<16x16xf32> to vector<16xf32>
    %246 = vector.shape_cast %245 : vector<16xf32> to vector<16x1xf32>
    %247 = tpu.reciprocal %246 {approx = true} : vector<16x1xf32> -> vector<16x1xf32>
    %248 = vector.broadcast %247 : vector<16x1xf32> to vector<16x16xf32>
    %249 = arith.mulf %244, %248 : vector<16x16xf32>
    %cst_109 = arith.constant dense<0.000000e+00> : vector<16x8xf32>
    %250 = tpu.matmul %249, %235, %cst_109 {dimension_numbers = #tpu.dot_dimension_numbers<[1], [0], [0], [1], [0, 0, 1, 1], [], []>} : vector<16x16xf32>, vector<16x8xf32>, vector<16x8xf32> -> vector<16x8xf32>
    %251 = vector.extract_strided_slice %189 {offsets = [16, 0], sizes = [8, 32], strides = [1, 1]} : vector<32x32xf32> to vector<8x32xf32>
    %cst_110 = arith.constant dense<0.000000e+00> : vector<16x32xf32>
    %252 = tpu.matmul %250, %251, %cst_110 {dimension_numbers = #tpu.dot_dimension_numbers<[1], [0], [0], [1], [0, 0, 1, 1], [], []>} : vector<16x8xf32>, vector<8x32xf32>, vector<16x32xf32> -> vector<16x32xf32>
    %253 = arith.addf %232, %252 : vector<16x32xf32>
    %254 = vector.extract_strided_slice %187 {offsets = [0, 24], sizes = [16, 8], strides = [1, 1]} : vector<16x96xf32> to vector<16x8xf32>
    %255 = vector.extract_strided_slice %187 {offsets = [0, 56], sizes = [16, 8], strides = [1, 1]} : vector<16x96xf32> to vector<16x8xf32>
    %256 = vector.extract_strided_slice %187 {offsets = [0, 88], sizes = [16, 8], strides = [1, 1]} : vector<16x96xf32> to vector<16x8xf32>
    %cst_111 = arith.constant dense<0.000000e+00> : vector<16x16xf32>
    %257 = tpu.matmul %254, %255, %cst_111 {dimension_numbers = #tpu.dot_dimension_numbers<[1], [1], [0], [0], [0, 0, 1, 0], [], []>} : vector<16x8xf32>, vector<16x8xf32>, vector<16x16xf32> -> vector<16x16xf32>
    %cst_112 = arith.constant 0.353553385 : f32
    %258 = vector.broadcast %cst_112 : f32 to vector<16x16xf32>
    %259 = arith.mulf %257, %258 : vector<16x16xf32>
    %260 = arith.addf %259, %12 : vector<16x16xf32>
    %cst_113 = arith.constant dense<0xFF800000> : vector<16xf32>
    %261 = vector.multi_reduction <maximumf>, %260, %cst_113 [1] : vector<16x16xf32> to vector<16xf32>
    %262 = vector.shape_cast %261 : vector<16xf32> to vector<16x1xf32>
    %263 = vector.broadcast %262 : vector<16x1xf32> to vector<16x16xf32>
    %264 = arith.subf %260, %263 : vector<16x16xf32>
    %265 = math.exp %264 : vector<16x16xf32>
    %cst_114 = arith.constant dense<0.000000e+00> : vector<16xf32>
    %266 = vector.multi_reduction <add>, %265, %cst_114 [1] : vector<16x16xf32> to vector<16xf32>
    %267 = vector.shape_cast %266 : vector<16xf32> to vector<16x1xf32>
    %268 = tpu.reciprocal %267 {approx = true} : vector<16x1xf32> -> vector<16x1xf32>
    %269 = vector.broadcast %268 : vector<16x1xf32> to vector<16x16xf32>
    %270 = arith.mulf %265, %269 : vector<16x16xf32>
    %cst_115 = arith.constant dense<0.000000e+00> : vector<16x8xf32>
    %271 = tpu.matmul %270, %256, %cst_115 {dimension_numbers = #tpu.dot_dimension_numbers<[1], [0], [0], [1], [0, 0, 1, 1], [], []>} : vector<16x16xf32>, vector<16x8xf32>, vector<16x8xf32> -> vector<16x8xf32>
    %272 = vector.extract_strided_slice %189 {offsets = [24, 0], sizes = [8, 32], strides = [1, 1]} : vector<32x32xf32> to vector<8x32xf32>
    %cst_116 = arith.constant dense<0.000000e+00> : vector<16x32xf32>
    %273 = tpu.matmul %271, %272, %cst_116 {dimension_numbers = #tpu.dot_dimension_numbers<[1], [0], [0], [1], [0, 0, 1, 1], [], []>} : vector<16x8xf32>, vector<8x32xf32>, vector<16x32xf32> -> vector<16x32xf32>
    %274 = arith.addf %253, %273 : vector<16x32xf32>
    %c1_117 = arith.constant 1 : index
    %c0_118 = arith.constant 0 : index
    %c0_119 = arith.constant 0 : index
    %275 = vector.load %arg10[%c1_117, %c0_118, %c0_119] : memref<2x1x32xf32, #tpu.memory_space<vmem>>, vector<1x1x32xf32>
    %276 = vector.shape_cast %275 : vector<1x1x32xf32> to vector<1x32xf32>
    %277 = vector.broadcast %276 : vector<1x32xf32> to vector<16x32xf32>
    %278 = arith.addf %274, %277 : vector<16x32xf32>
    %279 = arith.addf %180, %278 : vector<16x32xf32>
    %c1_120 = arith.constant 1 : index
    %c0_121 = arith.constant 0 : index
    %c0_122 = arith.constant 0 : index
    %280 = vector.load %arg11[%c1_120, %c0_121, %c0_122] : memref<2x1x32xf32, #tpu.memory_space<vmem>>, vector<1x1x32xf32>
    %281 = vector.shape_cast %280 : vector<1x1x32xf32> to vector<1x32xf32>
    %c1_123 = arith.constant 1 : index
    %c0_124 = arith.constant 0 : index
    %c0_125 = arith.constant 0 : index
    %282 = vector.load %arg12[%c1_123, %c0_124, %c0_125] : memref<2x1x32xf32, #tpu.memory_space<vmem>>, vector<1x1x32xf32>
    %283 = vector.shape_cast %282 : vector<1x1x32xf32> to vector<1x32xf32>
    %cst_126 = arith.constant dense<0.000000e+00> : vector<16xf32>
    %284 = vector.multi_reduction <add>, %279, %cst_126 [1] : vector<16x32xf32> to vector<16xf32>
    %285 = vector.shape_cast %284 : vector<16xf32> to vector<16x1xf32>
    %cst_127 = arith.constant 3.200000e+01 : f32
    %286 = vector.broadcast %cst_127 : f32 to vector<16x1xf32>
    %287 = arith.divf %285, %286 : vector<16x1xf32>
    %288 = vector.broadcast %287 : vector<16x1xf32> to vector<16x32xf32>
    %289 = arith.subf %279, %288 : vector<16x32xf32>
    %290 = arith.mulf %289, %289 : vector<16x32xf32>
    %cst_128 = arith.constant dense<0.000000e+00> : vector<16xf32>
    %291 = vector.multi_reduction <add>, %290, %cst_128 [1] : vector<16x32xf32> to vector<16xf32>
    %292 = vector.shape_cast %291 : vector<16xf32> to vector<16x1xf32>
    %cst_129 = arith.constant 3.200000e+01 : f32
    %293 = vector.broadcast %cst_129 : f32 to vector<16x1xf32>
    %294 = arith.divf %292, %293 : vector<16x1xf32>
    %295 = vector.broadcast %287 : vector<16x1xf32> to vector<16x32xf32>
    %296 = arith.subf %279, %295 : vector<16x32xf32>
    %cst_130 = arith.constant 9.99999974E-6 : f32
    %297 = vector.broadcast %cst_130 : f32 to vector<16x1xf32>
    %298 = arith.addf %294, %297 : vector<16x1xf32>
    %299 = math.rsqrt %298 : vector<16x1xf32>
    %300 = vector.broadcast %299 : vector<16x1xf32> to vector<16x32xf32>
    %301 = arith.mulf %296, %300 : vector<16x32xf32>
    %302 = vector.broadcast %281 : vector<1x32xf32> to vector<16x32xf32>
    %303 = arith.mulf %301, %302 : vector<16x32xf32>
    %304 = vector.broadcast %283 : vector<1x32xf32> to vector<16x32xf32>
    %305 = arith.addf %303, %304 : vector<16x32xf32>
    %c1_131 = arith.constant 1 : index
    %c0_132 = arith.constant 0 : index
    %c0_133 = arith.constant 0 : index
    %306 = vector.load %arg13[%c1_131, %c0_132, %c0_133] : memref<2x32x64xf32, #tpu.memory_space<vmem>>, vector<1x32x64xf32>
    %307 = vector.shape_cast %306 : vector<1x32x64xf32> to vector<32x64xf32>
    %cst_134 = arith.constant dense<0.000000e+00> : vector<16x64xf32>
    %308 = tpu.matmul %305, %307, %cst_134 {dimension_numbers = #tpu.dot_dimension_numbers<[1], [0], [0], [1], [0, 0, 1, 1], [], []>} : vector<16x32xf32>, vector<32x64xf32>, vector<16x64xf32> -> vector<16x64xf32>
    %c1_135 = arith.constant 1 : index
    %c0_136 = arith.constant 0 : index
    %c0_137 = arith.constant 0 : index
    %309 = vector.load %arg14[%c1_135, %c0_136, %c0_137] : memref<2x1x64xf32, #tpu.memory_space<vmem>>, vector<1x1x64xf32>
    %310 = vector.shape_cast %309 : vector<1x1x64xf32> to vector<1x64xf32>
    %311 = vector.broadcast %310 : vector<1x64xf32> to vector<16x64xf32>
    %312 = arith.addf %308, %311 : vector<16x64xf32>
    %cst_138 = arith.constant 0.000000e+00 : f32
    %313 = vector.broadcast %cst_138 : f32 to vector<16x64xf32>
    %314 = arith.maximumf %312, %313 : vector<16x64xf32>
    %c1_139 = arith.constant 1 : index
    %c0_140 = arith.constant 0 : index
    %c0_141 = arith.constant 0 : index
    %315 = vector.load %arg15[%c1_139, %c0_140, %c0_141] : memref<2x64x32xf32, #tpu.memory_space<vmem>>, vector<1x64x32xf32>
    %316 = vector.shape_cast %315 : vector<1x64x32xf32> to vector<64x32xf32>
    %cst_142 = arith.constant dense<0.000000e+00> : vector<16x32xf32>
    %317 = tpu.matmul %314, %316, %cst_142 {dimension_numbers = #tpu.dot_dimension_numbers<[1], [0], [0], [1], [0, 0, 1, 1], [], []>} : vector<16x64xf32>, vector<64x32xf32>, vector<16x32xf32> -> vector<16x32xf32>
    %c1_143 = arith.constant 1 : index
    %c0_144 = arith.constant 0 : index
    %c0_145 = arith.constant 0 : index
    %318 = vector.load %arg16[%c1_143, %c0_144, %c0_145] : memref<2x1x32xf32, #tpu.memory_space<vmem>>, vector<1x1x32xf32>
    %319 = vector.shape_cast %318 : vector<1x1x32xf32> to vector<1x32xf32>
    %320 = vector.broadcast %319 : vector<1x32xf32> to vector<16x32xf32>
    %321 = arith.addf %317, %320 : vector<16x32xf32>
    %322 = arith.addf %305, %321 : vector<16x32xf32>
    %c1_146 = arith.constant 1 : index
    %c0_147 = arith.constant 0 : index
    %c0_148 = arith.constant 0 : index
    %323 = vector.load %arg17[%c1_146, %c0_147, %c0_148] : memref<2x1x32xf32, #tpu.memory_space<vmem>>, vector<1x1x32xf32>
    %324 = vector.shape_cast %323 : vector<1x1x32xf32> to vector<1x32xf32>
    %c1_149 = arith.constant 1 : index
    %c0_150 = arith.constant 0 : index
    %c0_151 = arith.constant 0 : index
    %325 = vector.load %arg18[%c1_149, %c0_150, %c0_151] : memref<2x1x32xf32, #tpu.memory_space<vmem>>, vector<1x1x32xf32>
    %326 = vector.shape_cast %325 : vector<1x1x32xf32> to vector<1x32xf32>
    %cst_152 = arith.constant dense<0.000000e+00> : vector<16xf32>
    %327 = vector.multi_reduction <add>, %322, %cst_152 [1] : vector<16x32xf32> to vector<16xf32>
    %328 = vector.shape_cast %327 : vector<16xf32> to vector<16x1xf32>
    %cst_153 = arith.constant 3.200000e+01 : f32
    %329 = vector.broadcast %cst_153 : f32 to vector<16x1xf32>
    %330 = arith.divf %328, %329 : vector<16x1xf32>
    %331 = vector.broadcast %330 : vector<16x1xf32> to vector<16x32xf32>
    %332 = arith.subf %322, %331 : vector<16x32xf32>
    %333 = arith.mulf %332, %332 : vector<16x32xf32>
    %cst_154 = arith.constant dense<0.000000e+00> : vector<16xf32>
    %334 = vector.multi_reduction <add>, %333, %cst_154 [1] : vector<16x32xf32> to vector<16xf32>
    %335 = vector.shape_cast %334 : vector<16xf32> to vector<16x1xf32>
    %cst_155 = arith.constant 3.200000e+01 : f32
    %336 = vector.broadcast %cst_155 : f32 to vector<16x1xf32>
    %337 = arith.divf %335, %336 : vector<16x1xf32>
    %338 = vector.broadcast %330 : vector<16x1xf32> to vector<16x32xf32>
    %339 = arith.subf %322, %338 : vector<16x32xf32>
    %cst_156 = arith.constant 9.99999974E-6 : f32
    %340 = vector.broadcast %cst_156 : f32 to vector<16x1xf32>
    %341 = arith.addf %337, %340 : vector<16x1xf32>
    %342 = math.rsqrt %341 : vector<16x1xf32>
    %343 = vector.broadcast %342 : vector<16x1xf32> to vector<16x32xf32>
    %344 = arith.mulf %339, %343 : vector<16x32xf32>
    %345 = vector.broadcast %324 : vector<1x32xf32> to vector<16x32xf32>
    %346 = arith.mulf %344, %345 : vector<16x32xf32>
    %347 = vector.broadcast %326 : vector<1x32xf32> to vector<16x32xf32>
    %348 = arith.addf %346, %347 : vector<16x32xf32>
    %c0_157 = arith.constant 0 : index
    %c0_158 = arith.constant 0 : index
    %349 = vector.load %arg19[%c0_157, %c0_158] : memref<32x128xf32, #tpu.memory_space<vmem>>, vector<32x128xf32>
    %cst_159 = arith.constant dense<0.000000e+00> : vector<16x128xf32>
    %350 = tpu.matmul %348, %349, %cst_159 {dimension_numbers = #tpu.dot_dimension_numbers<[1], [0], [0], [1], [0, 0, 1, 1], [], []>} : vector<16x32xf32>, vector<32x128xf32>, vector<16x128xf32> -> vector<16x128xf32>
    %c0_160 = arith.constant 0 : index
    %c0_161 = arith.constant 0 : index
    %351 = vector.load %arg20[%c0_160, %c0_161] : memref<1x128xf32, #tpu.memory_space<vmem>>, vector<1x128xf32>
    %352 = vector.broadcast %351 : vector<1x128xf32> to vector<16x128xf32>
    %353 = arith.addf %350, %352 : vector<16x128xf32>
    %c0_162 = arith.constant 0 : index
    %c0_163 = arith.constant 0 : index
    %354 = vector.load %arg22[%c0_162, %c0_163] : memref<16x128xf32, #tpu.memory_space<vmem>>, vector<16x128xf32>
    tpu.vector_store %arg22[%c0_162, %c0_163], %353 {strides = array<i32>} : memref<16x128xf32, #tpu.memory_space<vmem>>, vector<16x128xf32>,
    %355 = tpu.iota {dimensions = array<i32: 1>} : vector<16x128xi32>
    %c11_i32 = arith.constant 11 : i32
    %356 = vector.broadcast %c11_i32 : i32 to vector<16x128xi32>
    %357 = arith.cmpi slt, %355, %356 : vector<16x128xi32>
    %cst_164 = arith.constant -1.000000e+30 : f32
    %358 = vector.broadcast %cst_164 : f32 to vector<16x128xf32>
    %359 = arith.select %357, %353, %358 : vector<16x128xi1>, vector<16x128xf32>
    %cst_165 = arith.constant dense<0xFF800000> : vector<16xf32>
    %360 = vector.multi_reduction <maximumf>, %359, %cst_165 [1] : vector<16x128xf32> to vector<16xf32>
    %361 = vector.shape_cast %360 : vector<16xf32> to vector<16x1xf32>
    %362 = vector.broadcast %361 : vector<16x1xf32> to vector<16x128xf32>
    %363 = arith.subf %359, %362 : vector<16x128xf32>
    %364 = math.exp %363 : vector<16x128xf32>
    %cst_166 = arith.constant dense<0.000000e+00> : vector<16xf32>
    %365 = vector.multi_reduction <add>, %364, %cst_166 [1] : vector<16x128xf32> to vector<16xf32>
    %366 = vector.shape_cast %365 : vector<16xf32> to vector<16x1xf32>
    %367 = math.log %366 : vector<16x1xf32>
    %368 = arith.addf %367, %361 : vector<16x1xf32>
    %c0_167 = arith.constant 0 : index
    %c0_168 = arith.constant 0 : index
    %369 = vector.load %arg2[%c0_167, %c0_168] : memref<16x1xi32, #tpu.memory_space<vmem>>, vector<16x1xi32>
    %370 = vector.broadcast %369 : vector<16x1xi32> to vector<16x128xi32>
    %371 = arith.cmpi eq, %355, %370 : vector<16x128xi32>
    %372 = arith.extui %371 : vector<16x128xi1> to vector<16x128xi32>
    %373 = arith.sitofp %372 : vector<16x128xi32> to vector<16x128xf32>
    %374 = arith.mulf %373, %353 : vector<16x128xf32>
    %cst_169 = arith.constant dense<0.000000e+00> : vector<16xf32>
    %375 = vector.multi_reduction <add>, %374, %cst_169 [1] : vector<16x128xf32> to vector<16xf32>
    %376 = vector.shape_cast %375 : vector<16xf32> to vector<16x1xf32>
    %377 = arith.subf %368, %376 : vector<16x1xf32>
    %c0_170 = arith.constant 0 : index
    %c0_171 = arith.constant 0 : index
    %378 = vector.load %arg3[%c0_170, %c0_171] : memref<16x1xf32, #tpu.memory_space<vmem>>, vector<16x1xf32>
    %379 = vector.shape_cast %378 : vector<16x1xf32> to vector<1x16x1xf32>
    %cst_172 = arith.constant dense<0.000000e+00> : vector<1xf32>
    %380 = vector.multi_reduction <add>, %379, %cst_172 [1, 2] : vector<1x16x1xf32> to vector<1xf32>
    %381 = vector.shape_cast %380 : vector<1xf32> to vector<1x1x1xf32>
    %382 = vector.extract %381[0, 0, 0] : f32 from vector<1x1x1xf32>
    %cst_173 = arith.constant 1.000000e-10 : f32
    %383 = arith.addf %382, %cst_173 : f32
    %384 = arith.mulf %377, %378 : vector<16x1xf32>
    %385 = vector.shape_cast %384 : vector<16x1xf32> to vector<1x16x1xf32>
    %cst_174 = arith.constant dense<0.000000e+00> : vector<1xf32>
    %386 = vector.multi_reduction <add>, %385, %cst_174 [1, 2] : vector<1x16x1xf32> to vector<1xf32>
    %387 = vector.shape_cast %386 : vector<1xf32> to vector<1x1x1xf32>
    %388 = vector.extract %387[0, 0, 0] : f32 from vector<1x1x1xf32>
    %389 = arith.divf %388, %383 : f32
    %c0_175 = arith.constant 0 : index
    %c0_176 = arith.constant 0 : index
    %390 = memref.load %arg21[%c0_175, %c0_176] : memref<1x1xf32, #tpu.memory_space<smem>>
    %391 = arith.divf %389, %390 : f32
    %c0_177 = arith.constant 0 : index
    %c0_178 = arith.constant 0 : index
    %392 = memref.load %arg23[%c0_177, %c0_178] : memref<1x1xf32, #tpu.memory_space<smem>>
    memref.store %391, %arg23[%c0_177, %c0_178] : memref<1x1xf32, #tpu.memory_space<smem>>
    return
  }
  func.func @transform_0(%arg0: i32) -> (i32, i32) {
    %c0_i32 = arith.constant 0 : i32
    %c0_i32_0 = arith.constant 0 : i32
    %c0_i32_1 = arith.constant 0 : i32
    return %c0_i32, %c0_i32_0 : i32, i32
  }
  func.func @transform_1(%arg0: i32) -> (i32, i32) {
    %c0_i32 = arith.constant 0 : i32
    %c0_i32_0 = arith.constant 0 : i32
    %c0_i32_1 = arith.constant 0 : i32
    return %c0_i32, %c0_i32_0 : i32, i32
  }
  func.func @transform_2(%arg0: i32) -> (i32, i32) {
    %c0_i32 = arith.constant 0 : i32
    %c0_i32_0 = arith.constant 0 : i32
    %c0_i32_1 = arith.constant 0 : i32
    return %c0_i32, %c0_i32_0 : i32, i32
  }
  func.func @transform_3(%arg0: i32) -> (i32, i32) {
    %c0_i32 = arith.constant 0 : i32
    %c0_i32_0 = arith.constant 0 : i32
    %c0_i32_1 = arith.constant 0 : i32
    return %c0_i32, %c0_i32_0 : i32, i32
  }
  func.func @transform_4(%arg0: i32) -> (i32, i32) {
    %c0_i32 = arith.constant 0 : i32
    %c0_i32_0 = arith.constant 0 : i32
    %c0_i32_1 = arith.constant 0 : i32
    return %c0_i32, %c0_i32_0 : i32, i32
  }
  func.func @transform_5(%arg0: i32) -> (i32, i32) {
    %c0_i32 = arith.constant 0 : i32
    %c0_i32_0 = arith.constant 0 : i32
    %c0_i32_1 = arith.constant 0 : i32
    return %c0_i32, %c0_i32_0 : i32, i32
  }
  func.func @transform_6(%arg0: i32) -> (i32, i32, i32) {
    %c0_i32 = arith.constant 0 : i32
    %c0_i32_0 = arith.constant 0 : i32
    %c0_i32_1 = arith.constant 0 : i32
    %c0_i32_2 = arith.constant 0 : i32
    return %c0_i32, %c0_i32_0, %c0_i32_1 : i32, i32, i32
  }
  func.func @transform_7(%arg0: i32) -> (i32, i32, i32) {
    %c0_i32 = arith.constant 0 : i32
    %c0_i32_0 = arith.constant 0 : i32
    %c0_i32_1 = arith.constant 0 : i32
    %c0_i32_2 = arith.constant 0 : i32
    return %c0_i32, %c0_i32_0, %c0_i32_1 : i32, i32, i32
  }
  func.func @transform_8(%arg0: i32) -> (i32, i32, i32) {
    %c0_i32 = arith.constant 0 : i32
    %c0_i32_0 = arith.constant 0 : i32
    %c0_i32_1 = arith.constant 0 : i32
    %c0_i32_2 = arith.constant 0 : i32
    return %c0_i32, %c0_i32_0, %c0_i32_1 : i32, i32, i32
  }
  func.func @transform_9(%arg0: i32) -> (i32, i32, i32) {
    %c0_i32 = arith.constant 0 : i32
    %c0_i32_0 = arith.constant 0 : i32
    %c0_i32_1 = arith.constant 0 : i32
    %c0_i32_2 = arith.constant 0 : i32
    return %c0_i32, %c0_i32_0, %c0_i32_1 : i32, i32, i32
  }
  func.func @transform_10(%arg0: i32) -> (i32, i32, i32) {
    %c0_i32 = arith.constant 0 : i32
    %c0_i32_0 = arith.constant 0 : i32
    %c0_i32_1 = arith.constant 0 : i32
    %c0_i32_2 = arith.constant 0 : i32
    return %c0_i32, %c0_i32_0, %c0_i32_1 : i32, i32, i32
  }
  func.func @transform_11(%arg0: i32) -> (i32, i32, i32) {
    %c0_i32 = arith.constant 0 : i32
    %c0_i32_0 = arith.constant 0 : i32
    %c0_i32_1 = arith.constant 0 : i32
    %c0_i32_2 = arith.constant 0 : i32
    return %c0_i32, %c0_i32_0, %c0_i32_1 : i32, i32, i32
  }
  func.func @transform_12(%arg0: i32) -> (i32, i32, i32) {
    %c0_i32 = arith.constant 0 : i32
    %c0_i32_0 = arith.constant 0 : i32
    %c0_i32_1 = arith.constant 0 : i32
    %c0_i32_2 = arith.constant 0 : i32
    return %c0_i32, %c0_i32_0, %c0_i32_1 : i32, i32, i32
  }
  func.func @transform_13(%arg0: i32) -> (i32, i32, i32) {
    %c0_i32 = arith.constant 0 : i32
    %c0_i32_0 = arith.constant 0 : i32
    %c0_i32_1 = arith.constant 0 : i32
    %c0_i32_2 = arith.constant 0 : i32
    return %c0_i32, %c0_i32_0, %c0_i32_1 : i32, i32, i32
  }
  func.func @transform_14(%arg0: i32) -> (i32, i32, i32) {
    %c0_i32 = arith.constant 0 : i32
    %c0_i32_0 = arith.constant 0 : i32
    %c0_i32_1 = arith.constant 0 : i32
    %c0_i32_2 = arith.constant 0 : i32
    return %c0_i32, %c0_i32_0, %c0_i32_1 : i32, i32, i32
  }
  func.func @transform_15(%arg0: i32) -> (i32, i32, i32) {
    %c0_i32 = arith.constant 0 : i32
    %c0_i32_0 = arith.constant 0 : i32
    %c0_i32_1 = arith.constant 0 : i32
    %c0_i32_2 = arith.constant 0 : i32
    return %c0_i32, %c0_i32_0, %c0_i32_1 : i32, i32, i32
  }
  func.func @transform_16(%arg0: i32) -> (i32, i32, i32) {
    %c0_i32 = arith.constant 0 : i32
    %c0_i32_0 = arith.constant 0 : i32
    %c0_i32_1 = arith.constant 0 : i32
    %c0_i32_2 = arith.constant 0 : i32
    return %c0_i32, %c0_i32_0, %c0_i32_1 : i32, i32, i32
  }
  func.func @transform_17(%arg0: i32) -> (i32, i32, i32) {
    %c0_i32 = arith.constant 0 : i32
    %c0_i32_0 = arith.constant 0 : i32
    %c0_i32_1 = arith.constant 0 : i32
    %c0_i32_2 = arith.constant 0 : i32
    return %c0_i32, %c0_i32_0, %c0_i32_1 : i32, i32, i32
  }
  func.func @transform_18(%arg0: i32) -> (i32, i32) {
    %c0_i32 = arith.constant 0 : i32
    %c0_i32_0 = arith.constant 0 : i32
    %c0_i32_1 = arith.constant 0 : i32
    return %c0_i32, %c0_i32_0 : i32, i32
  }
  func.func @transform_19(%arg0: i32) -> (i32, i32) {
    %c0_i32 = arith.constant 0 : i32
    %c0_i32_0 = arith.constant 0 : i32
    %c0_i32_1 = arith.constant 0 : i32
    return %c0_i32, %c0_i32_0 : i32, i32
  }
  func.func @transform_20(%arg0: i32) -> (i32, i32) {
    %c0_i32 = arith.constant 0 : i32
    %c0_i32_0 = arith.constant 0 : i32
    %c0_i32_1 = arith.constant 0 : i32
    return %c0_i32, %c0_i32_0 : i32, i32
  }
  func.func @transform_21(%arg0: i32) -> (i32, i32) {
    %c0_i32 = arith.constant 0 : i32
    %c0_i32_0 = arith.constant 0 : i32
    %c0_i32_1 = arith.constant 0 : i32
    return %c0_i32, %c0_i32_0 : i32, i32
  }
  func.func @transform_22(%arg0: i32) -> (i32, i32) {
    %c0_i32 = arith.constant 0 : i32
    %c0_i32_0 = arith.constant 0 : i32
    %c0_i32_1 = arith.constant 0 : i32
    return %c0_i32, %c0_i32_0 : i32, i32
  }
}

</mosaic_0001>

<llo_original>
// kernel: tpu_custom_call.1
$region0: #{tpu_custom_call.1}
  #allocation0 [shape = 'u32[]', space=smem, size = 0x4, offset = 0x4, fixed_abs, tag = 'smem constant byte address 0x4 - core index']
  #allocation1 [shape = 'u32[144,128]{1,0:T(1,128)}', space=vmem, size = 0x12000, scoped, tag = 'internal scratch']
  #allocation2 [shape = 'f32[1,1]{1,0:T(1,128)S(6)}', space=smem, size = 0x200, scoped, tag = 'scoped memory for tpu_custom_call.1']
  %s0 = inlined_call_operand.vmem [shape: s32[16,1], index: 0, kind: input, shape index: {}]
  %s1 = inlined_call_operand.vmem [shape: s32[16,1], index: 1, kind: input, shape index: {}]
  %s2 = inlined_call_operand.vmem [shape: f32[16,1], index: 2, kind: input, shape index: {}]
  %s3 = inlined_call_operand.hbm [shape: f32[16,16], index: 3, kind: input, shape index: {}]
  %s4 = inlined_call_operand.hbm [shape: f32[16,32], index: 4, kind: input, shape index: {}]
  %s5 = inlined_call_operand.hbm [shape: f32[11,32], index: 5, kind: input, shape index: {}]
  %s6 = inlined_call_operand.vmem [shape: f32[2,32,96], index: 6, kind: input, shape index: {}]
  %s7 = inlined_call_operand.vmem [shape: f32[2,1,96], index: 7, kind: input, shape index: {}]
  %s8 = inlined_call_operand.vmem [shape: f32[2,32,32], index: 8, kind: input, shape index: {}]
  %s9 = inlined_call_operand.vmem [shape: f32[2,1,32], index: 9, kind: input, shape index: {}]
  %s10 = inlined_call_operand.vmem [shape: f32[2,1,32], index: 10, kind: input, shape index: {}]
  %s11 = inlined_call_operand.vmem [shape: f32[2,1,32], index: 11, kind: input, shape index: {}]
  %s12 = inlined_call_operand.vmem [shape: f32[2,32,64], index: 12, kind: input, shape index: {}]
  %s13 = inlined_call_operand.vmem [shape: f32[2,1,64], index: 13, kind: input, shape index: {}]
  %s14 = inlined_call_operand.vmem [shape: f32[2,64,32], index: 14, kind: input, shape index: {}]
  %s15 = inlined_call_operand.vmem [shape: f32[2,1,32], index: 15, kind: input, shape index: {}]
  %s16 = inlined_call_operand.vmem [shape: f32[2,1,32], index: 16, kind: input, shape index: {}]
  %s17 = inlined_call_operand.vmem [shape: f32[2,1,32], index: 17, kind: input, shape index: {}]
  %s18 = inlined_call_operand.vmem [shape: f32[32,128], index: 18, kind: input, shape index: {}]
  %s19 = inlined_call_operand.vmem [shape: f32[1,128], index: 19, kind: input, shape index: {}]
  %s20 = inlined_call_operand.<no memory space> [shape: f32[1,1], index: 20, kind: input, shape index: {}]
  %s21 = inlined_call_operand.hbm [shape: f32[16,128], index: 21, kind: output, shape index: {0}]
  %s22 = inlined_call_operand.hbm [shape: f32[1,1], index: 22, kind: output, shape index: {1}]
  %23 = xla_tuple %s21, %s22
  %s24 = sld [smem:[#allocation0]]
  $region114: #{tpu_custom_call.1} parent=0
    _
  %s26 = ssub.s32 1, %s24
  %s27 = scalar_select 0, %s26, %s24
  %28 = sst [smem:[#allocation2]] %s20
  $region1: #{tpu_custom_call.1} parent=0
    #allocation3 [shape = 'u8[8192]{0}', space=vmem, size = 0x2000, scoped, tag = 'input window, operand 3, single buffered']
    #allocation4 [shape = 's32[1]{0}', space=sflag, size = 0x4, scoped, tag = 'scoped memory for tpu_custom_call.1']
    #allocation5 [shape = 's32[1]{0}', space=sflag, size = 0x4, scoped, tag = 'scoped memory for tpu_custom_call.1']
    #allocation6 [shape = 's32[1]{0}', space=sflag, size = 0x4, scoped, tag = 'scoped memory for tpu_custom_call.1']
    #allocation7 [shape = 'u8[8192]{0}', space=vmem, size = 0x2000, scoped, tag = 'input window, operand 4, single buffered']
    #allocation8 [shape = 's32[1]{0}', space=sflag, size = 0x4, scoped, tag = 'scoped memory for tpu_custom_call.1']
    #allocation9 [shape = 'u8[8192]{0}', space=vmem, size = 0x2000, scoped, tag = 'input window, operand 5, single buffered']
    #allocation10 [shape = 'u8[8192]{0}', space=vmem, size = 0x2000, scoped, tag = 'output window, operand 0, single buffered']
    #allocation11 [shape = 'u8[512]{0}', space=smem, size = 0x200, scoped, tag = 'output window, operand 1, single buffered']
    %29 = vsyncpa [#allocation4], 0
    %30 = vsyncpa [#allocation8], 0
    %31 = vsyncpa [#allocation5], 0
    %32 = vsyncpa [#allocation6], 0
    // Predicated region
    $region2: #{tpu_custom_call.1} parent=1 // pred_check
      _
    $region3: #{tpu_custom_call.1} parent=1 // pred_check_branch
      %34 = sbr.rel (0) target = $region5
    $region4: #{tpu_custom_call.1} parent=1 // pred_region
      _
    $region5: #{tpu_custom_call.1} parent=1 // pred_fallthru
      _
    // Predicated region
    $region6: #{tpu_custom_call.1} parent=1 // pred_check
      _
    $region7: #{tpu_custom_call.1} parent=1 // pred_check_branch
      %36 = sbr.rel (0) target = $region9
    $region8: #{tpu_custom_call.1} parent=1 // pred_region
      _
    $region9: #{tpu_custom_call.1} parent=1 // pred_fallthru
      _
    // Predicated region
    $region10: #{tpu_custom_call.1} parent=1 // pred_check
      _
    $region11: #{tpu_custom_call.1} parent=1 // pred_check_branch
      %38 = sbr.rel (0) target = $region13
    $region12: #{tpu_custom_call.1} parent=1 // pred_region
      _
    $region13: #{tpu_custom_call.1} parent=1 // pred_fallthru
      _
    // Predicated region
    $region14: #{tpu_custom_call.1} parent=1 // pred_check
      _
    $region15: #{tpu_custom_call.1} parent=1 // pred_check_branch
      %40 = sbr.rel (0) target = $region17
    $region16: #{tpu_custom_call.1} parent=1 // pred_region
      %s42 = ssub.s32 256, 256
      %43 = vsyncadd [#allocation4], %s42
      %s44 = sshll.u32 [#allocation3], 4
      %s45 = int_to_ptr.vmem [resolvable:$true] %s44
      %50 = dma.hbm_to_vmem [thread:$0]  %s3, 256, %s45, [#allocation4], 128, 128, 8
    $region17: #{tpu_custom_call.1} parent=1 // pred_fallthru
      _
    // Predicated region
    $region18: #{tpu_custom_call.1} parent=1 // pred_check
      _
    $region19: #{tpu_custom_call.1} parent=1 // pred_check_branch
      %52 = sbr.rel (0) target = $region21
    $region20: #{tpu_custom_call.1} parent=1 // pred_region
      %s54 = ssub.s32 256, 256
      %55 = vsyncadd [#allocation8], %s54
      %s56 = sshll.u32 [#allocation7], 4
      %s57 = int_to_ptr.vmem [resolvable:$true] %s56
      %62 = dma.hbm_to_vmem [thread:$0]  %s4, 256, %s57, [#allocation8], 128, 128, 8
    $region21: #{tpu_custom_call.1} parent=1 // pred_fallthru
      _
    // Predicated region
    $region22: #{tpu_custom_call.1} parent=1 // pred_check
      _
    $region23: #{tpu_custom_call.1} parent=1 // pred_check_branch
      %64 = sbr.rel (0) target = $region25
    $region24: #{tpu_custom_call.1} parent=1 // pred_region
      %s66 = ssub.s32 256, 256
      %67 = vsyncadd [#allocation8], %s66
      %s68 = sshll.u32 [#allocation9], 4
      %s69 = int_to_ptr.vmem [resolvable:$true] %s68
      %74 = dma.hbm_to_vmem [thread:$0]  %s5, 256, %s69, [#allocation8], 128, 128, 8
    $region25: #{tpu_custom_call.1} parent=1 // pred_fallthru
      _
    // Predicated region
    $region26: #{tpu_custom_call.1} parent=1 // pred_check
      _
    $region27: #{tpu_custom_call.1} parent=1 // pred_check_branch
      %76 = sbr.rel (0) target = $region29
    $region28: #{tpu_custom_call.1} parent=1 // pred_region
      _
    $region29: #{tpu_custom_call.1} parent=1 // pred_fallthru
      _
    // Predicated region
    $region30: #{tpu_custom_call.1} parent=1 // pred_check
      _
    $region31: #{tpu_custom_call.1} parent=1 // pred_check_branch
      %78 = sbr.rel (0) target = $region33
    $region32: #{tpu_custom_call.1} parent=1 // pred_region
      _
    $region33: #{tpu_custom_call.1} parent=1 // pred_fallthru
      _
    // Predicated region
    $region34: #{tpu_custom_call.1} parent=1 // pred_check
      _
    $region35: #{tpu_custom_call.1} parent=1 // pred_check_branch
      %80 = sbr.rel (0) target = $region37
    $region36: #{tpu_custom_call.1} parent=1 // pred_region
      _
    $region37: #{tpu_custom_call.1} parent=1 // pred_fallthru
      _
    // Predicated region
    $region38: #{tpu_custom_call.1} parent=1 // pred_check
      _
    $region39: #{tpu_custom_call.1} parent=1 // pred_check_branch
      %82 = sbr.rel (0) target = $region41
    $region40: #{tpu_custom_call.1} parent=1 // pred_region
      _
    $region41: #{tpu_custom_call.1} parent=1 // pred_fallthru
      _
    // Predicated region
    $region42: #{tpu_custom_call.1} parent=1 // pred_check
      _
    $region43: #{tpu_custom_call.1} parent=1 // pred_check_branch
      %84 = sbr.rel (0) target = $region45
    $region44: #{tpu_custom_call.1} parent=1 // pred_region
      _
    $region45: #{tpu_custom_call.1} parent=1 // pred_fallthru
      _
    // Predicated region
    $region46: #{tpu_custom_call.1} parent=1 // pred_check
      _
    $region47: #{tpu_custom_call.1} parent=1 // pred_check_branch
      %86 = sbr.rel (0) target = $region49
    $region48: #{tpu_custom_call.1} parent=1 // pred_region
      _
    $region49: #{tpu_custom_call.1} parent=1 // pred_fallthru
      _
    // Predicated region
    $region50: #{tpu_custom_call.1} parent=1 // pred_check
      _
    $region51: #{tpu_custom_call.1} parent=1 // pred_check_branch
      %88 = sbr.rel (0) target = $region53
    $region52: #{tpu_custom_call.1} parent=1 // pred_region
      _
    $region53: #{tpu_custom_call.1} parent=1 // pred_fallthru
      _
    // Predicated region
    $region54: #{tpu_custom_call.1} parent=1 // pred_check
      _
    $region55: #{tpu_custom_call.1} parent=1 // pred_check_branch
      %90 = sbr.rel (0) target = $region57
    $region56: #{tpu_custom_call.1} parent=1 // pred_region
      _
    $region57: #{tpu_custom_call.1} parent=1 // pred_fallthru
      _
    // Predicated region
    $region58: #{tpu_custom_call.1} parent=1 // pred_check
      _
    $region59: #{tpu_custom_call.1} parent=1 // pred_check_branch
      %92 = sbr.rel (0) target = $region61
    $region60: #{tpu_custom_call.1} parent=1 // pred_region
      _
    $region61: #{tpu_custom_call.1} parent=1 // pred_fallthru
      _
    // Predicated region
    $region62: #{tpu_custom_call.1} parent=1 // pred_check
      _
    $region63: #{tpu_custom_call.1} parent=1 // pred_check_branch
      %94 = sbr.rel (0) target = $region65
    $region64: #{tpu_custom_call.1} parent=1 // pred_region
      _
    $region65: #{tpu_custom_call.1} parent=1 // pred_fallthru
      _
    // Predicated region
    $region66: #{tpu_custom_call.1} parent=1 // pred_check
      _
    $region67: #{tpu_custom_call.1} parent=1 // pred_check_branch
      %96 = sbr.rel (0) target = $region69
    $region68: #{tpu_custom_call.1} parent=1 // pred_region
      _
    $region69: #{tpu_custom_call.1} parent=1 // pred_fallthru
      _
    // Predicated region
    $region70: #{tpu_custom_call.1} parent=1 // pred_check
      _
    $region71: #{tpu_custom_call.1} parent=1 // pred_check_branch
      %98 = sbr.rel (0) target = $region73
    $region72: #{tpu_custom_call.1} parent=1 // pred_region
      _
    $region73: #{tpu_custom_call.1} parent=1 // pred_fallthru
      _
    // Predicated region
    $region74: #{tpu_custom_call.1} parent=1 // pred_check
      _
    $region75: #{tpu_custom_call.1} parent=1 // pred_check_branch
      %100 = sbr.rel (0) target = $region77
    $region76: #{tpu_custom_call.1} parent=1 // pred_region
      _
    $region77: #{tpu_custom_call.1} parent=1 // pred_fallthru
      _
    // Predicated region
    $region78: #{tpu_custom_call.1} parent=1 // pred_check
      _
    $region79: #{tpu_custom_call.1} parent=1 // pred_check_branch
      %102 = sbr.rel (0) target = $region81
    $region80: #{tpu_custom_call.1} parent=1 // pred_region
      _
    $region81: #{tpu_custom_call.1} parent=1 // pred_fallthru
      _
    // Predicated region
    $region82: #{tpu_custom_call.1} parent=1 // pred_check
      _
    $region83: #{tpu_custom_call.1} parent=1 // pred_check_branch
      %104 = sbr.rel (0) target = $region85
    $region84: #{tpu_custom_call.1} parent=1 // pred_region
      _
    $region85: #{tpu_custom_call.1} parent=1 // pred_fallthru
      _
    // Predicated region
    $region86: #{tpu_custom_call.1} parent=1 // pred_check
      _
    $region87: #{tpu_custom_call.1} parent=1 // pred_check_branch
      %106 = sbr.rel (0) target = $region89
    $region88: #{tpu_custom_call.1} parent=1 // pred_region
      %107 = dma.done [#allocation4], 256
    $region89: #{tpu_custom_call.1} parent=1 // pred_fallthru
      _
    // Predicated region
    $region90: #{tpu_custom_call.1} parent=1 // pred_check
      _
    $region91: #{tpu_custom_call.1} parent=1 // pred_check_branch
      %109 = sbr.rel (0) target = $region93
    $region92: #{tpu_custom_call.1} parent=1 // pred_region
      %110 = dma.done [#allocation8], 256
    $region93: #{tpu_custom_call.1} parent=1 // pred_fallthru
      _
    // Predicated region
    $region94: #{tpu_custom_call.1} parent=1 // pred_check
      _
    $region95: #{tpu_custom_call.1} parent=1 // pred_check_branch
      %112 = sbr.rel (0) target = $region97
    $region96: #{tpu_custom_call.1} parent=1 // pred_region
      %113 = dma.done [#allocation8], 256
    $region97: #{tpu_custom_call.1} parent=1 // pred_fallthru
      _
    %v114 = vld [vmem:[%s0] sm:$0xff]
    %v115 = vld [vmem:[%s0 + $0x8] sm:$0xff]
    %v116 = vlaneseq
    %v117 = vand.u32 %v116, 127
    %118 = vset.pattern.permute.xlu0 0
    %119 = vperm.xlu0 %118, %v114
    %v120 = vpop.permute.xlu0 %119
    %121 = vset.pattern.permute.xlu0 0
    %122 = vperm.xlu0 %121, %v115
    %v123 = vpop.permute.xlu0 %122
    %vm124 = vcmp.eq.s32.totalorder %v117, %v120
    %vm125 = vcmp.eq.s32.totalorder %v117, %v123
    %v126 = vsel %vm124, 1, 0
    %v127 = vsel %vm125, 1, 0
    %v128 = vcvt.s32.f32 %v126
    %v129 = vcvt.s32.f32 %v127
    %v130 = vld [vmem:[#allocation9] sm:$0xff]
    %v131 = vld [vmem:[#allocation9 + $0x8] sm:$0x7]
    %vm132 = vcmask 89088
    %v134 = vsel %vm132, %v128, 0
    %v137 = vsel %vm132, %v129, 0
    %vm139 = vcmask 1042432
    %v141 = vsel %vm139, %v131, 0
    %143 = vmatprep.subr.mxu0 0.0
    %144 = vmatpush1.msra.mxu0 %v130
    %145 = vmatprep.subr.mxu0 0.0
    %146 = vmatpush1.msra.mxu0 %v141
    %147 = vmatprep.subr.mxu0 0.0
    %148 = vmatpush1.msra.mxu0 0.0
    %149 = vmatprep.subr.mxu0 0.0
    %150 = vmatpush1.msra.mxu0 0.0
    %151 = vmatprep.subr.mxu0 0.0
    %152 = vmatpush1.msra.mxu0 0.0
    %153 = vmatprep.subr.mxu0 0.0
    %154 = vmatpush1.msra.mxu0 0.0
    %155 = vmatprep.subr.mxu0 0.0
    %156 = vmatpush1.msra.mxu0 0.0
    %157 = vmatprep.subr.mxu0 0.0
    %158 = vmatpush1.msra.mxu0 0.0
    %159 = vmatprep.subr.mxu0 0.0
    %160 = vmatpush1.msra.mxu0 0.0
    %161 = vmatprep.subr.mxu0 0.0
    %162 = vmatpush1.msra.mxu0 0.0
    %163 = vmatprep.subr.mxu0 0.0
    %164 = vmatpush1.msra.mxu0 0.0
    %165 = vmatprep.subr.mxu0 0.0
    %166 = vmatpush1.msra.mxu0 0.0
    %167 = vmatprep.subr.mxu0 0.0
    %168 = vmatpush1.msra.mxu0 0.0
    %169 = vmatprep.subr.mxu0 0.0
    %170 = vmatpush1.msra.mxu0 0.0
    %171 = vmatprep.subr.mxu0 0.0
    %172 = vmatpush1.msra.mxu0 0.0
    %173 = vmatprep.subr.mxu0 0.0
    %174 = vmatpush1.msra.mxu0 0.0
    %175 = vmatprep.subr.mxu0 0.0
    %176 = vmatpush1.msra.mxu0 0.0
    %177 = vmatprep.subr.mxu0 0.0
    %178 = vmatpush1.msra.mxu0 0.0
    %179 = vmatprep.subr.mxu0 0.0
    %180 = vmatpush1.msra.mxu0 0.0
    %181 = vmatprep.subr.mxu0 0.0
    %182 = vmatpush1.msra.mxu0 0.0
    %183 = vmatprep.subr.mxu0 0.0
    %184 = vmatpush1.msra.mxu0 0.0
    %185 = vmatprep.subr.mxu0 0.0
    %186 = vmatpush1.msra.mxu0 0.0
    %187 = vmatprep.subr.mxu0 0.0
    %188 = vmatpush1.msra.mxu0 0.0
    %189 = vmatprep.subr.mxu0 0.0
    %190 = vmatpush1.msra.mxu0 0.0
    %191 = vmatprep.subr.mxu0 0.0
    %192 = vmatpush1.msra.mxu0 0.0
    %193 = vmatprep.subr.mxu0 0.0
    %194 = vmatpush1.msra.mxu0 0.0
    %195 = vmatprep.subr.mxu0 0.0
    %196 = vmatpush1.msra.mxu0 0.0
    %197 = vmatprep.subr.mxu0 0.0
    %198 = vmatpush1.msra.mxu0 0.0
    %199 = vmatprep.subr.mxu0 0.0
    %200 = vmatpush1.msra.mxu0 0.0
    %201 = vmatprep.subr.mxu0 0.0
    %202 = vmatpush1.msra.mxu0 0.0
    %203 = vmatprep.subr.mxu0 0.0
    %204 = vmatpush1.msra.mxu0 0.0
    %205 = vmatprep.subr.mxu0 0.0
    %206 = vmatpush1.msra.mxu0 0.0
    %207 = vmatprep.mubr.f32.mxu0 0.0
    %208 = vmatmul.mubr.f32.gmra.mrb[0].mxu0 %v134
    %v209 = vpop.f32.mrb[0].mxu0
    %v210 = vadd.f32 0.0, %v209
    %v211 = vpop.f32.mrb[0].mxu0
    %212 = vmatprep.mubr.f32.mxu0 0.0
    %213 = vmatmul.mubr.f32.gmra.mrb[0].mxu0 %v137
    %v214 = vpop.f32.mrb[0].mxu0
    %v215 = vadd.f32 0.0, %v214
    %v216 = vpop.f32.mrb[0].mxu0
    %217 = vdwg.mxu0
    %v218 = vmul.f32 %v210, 5.656854
    %v219 = vmul.f32 %v215, 5.656854
    %v220 = vld [vmem:[#allocation7] sm:$0xff]
    %v221 = vld [vmem:[#allocation7 + $0x8] sm:$0xff]
    %v222 = vadd.f32 %v218, %v220
    %v223 = vadd.f32 %v219, %v221
    %v224 = vld [vmem:[#allocation3] sm:$0xff]
    %v225 = vld [vmem:[#allocation3 + $0x8] sm:$0xff]
    %v226 = vld [vmem:[%s6] sm:$0xff]
    %v227 = vld [vmem:[%s6 + $0x8] sm:$0xff]
    %v228 = vld [vmem:[%s6 + $0x10] sm:$0xff]
    %v229 = vld [vmem:[%s6 + $0x18] sm:$0xff]
    %v230 = vld [vmem:[%s7] sm:$0x1]
    %v232 = vlaneseq
    %v233 = vshrl.u32 %v232, 7
    %v234 = vsub.s32 0, %v233
    %v235 = vrot.slane %v230, %v234
    %vm237 = vcmask 261120
    %v239 = vsel %vm237, %v222, 0
    %v242 = vsel %vm237, %v223, 0
    %244 = vmatprep.subr.mxu0 0.0
    %245 = vmatpush1.msra.mxu0 %v226
    %246 = vmatprep.subr.mxu0 0.0
    %247 = vmatpush1.msra.mxu0 %v227
    %248 = vmatprep.subr.mxu0 0.0
    %249 = vmatpush1.msra.mxu0 %v228
    %250 = vmatprep.subr.mxu0 0.0
    %251 = vmatpush1.msra.mxu0 %v229
    %252 = vmatprep.subr.mxu0 0.0
    %253 = vmatpush1.msra.mxu0 0.0
    %254 = vmatprep.subr.mxu0 0.0
    %255 = vmatpush1.msra.mxu0 0.0
    %256 = vmatprep.subr.mxu0 0.0
    %257 = vmatpush1.msra.mxu0 0.0
    %258 = vmatprep.subr.mxu0 0.0
    %259 = vmatpush1.msra.mxu0 0.0
    %260 = vmatprep.subr.mxu0 0.0
    %261 = vmatpush1.msra.mxu0 0.0
    %262 = vmatprep.subr.mxu0 0.0
    %263 = vmatpush1.msra.mxu0 0.0
    %264 = vmatprep.subr.mxu0 0.0
    %265 = vmatpush1.msra.mxu0 0.0
    %266 = vmatprep.subr.mxu0 0.0
    %267 = vmatpush1.msra.mxu0 0.0
    %268 = vmatprep.subr.mxu0 0.0
    %269 = vmatpush1.msra.mxu0 0.0
    %270 = vmatprep.subr.mxu0 0.0
    %271 = vmatpush1.msra.mxu0 0.0
    %272 = vmatprep.subr.mxu0 0.0
    %273 = vmatpush1.msra.mxu0 0.0
    %274 = vmatprep.subr.mxu0 0.0
    %275 = vmatpush1.msra.mxu0 0.0
    %276 = vmatprep.subr.mxu0 0.0
    %277 = vmatpush1.msra.mxu0 0.0
    %278 = vmatprep.subr.mxu0 0.0
    %279 = vmatpush1.msra.mxu0 0.0
    %280 = vmatprep.subr.mxu0 0.0
    %281 = vmatpush1.msra.mxu0 0.0
    %282 = vmatprep.subr.mxu0 0.0
    %283 = vmatpush1.msra.mxu0 0.0
    %284 = vmatprep.subr.mxu0 0.0
    %285 = vmatpush1.msra.mxu0 0.0
    %286 = vmatprep.subr.mxu0 0.0
    %287 = vmatpush1.msra.mxu0 0.0
    %288 = vmatprep.subr.mxu0 0.0
    %289 = vmatpush1.msra.mxu0 0.0
    %290 = vmatprep.subr.mxu0 0.0
    %291 = vmatpush1.msra.mxu0 0.0
    %292 = vmatprep.subr.mxu0 0.0
    %293 = vmatpush1.msra.mxu0 0.0
    %294 = vmatprep.subr.mxu0 0.0
    %295 = vmatpush1.msra.mxu0 0.0
    %296 = vmatprep.subr.mxu0 0.0
    %297 = vmatpush1.msra.mxu0 0.0
    %298 = vmatprep.subr.mxu0 0.0
    %299 = vmatpush1.msra.mxu0 0.0
    %300 = vmatprep.subr.mxu0 0.0
    %301 = vmatpush1.msra.mxu0 0.0
    %302 = vmatprep.subr.mxu0 0.0
    %303 = vmatpush1.msra.mxu0 0.0
    %304 = vmatprep.subr.mxu0 0.0
    %305 = vmatpush1.msra.mxu0 0.0
    %306 = vmatprep.subr.mxu0 0.0
    %307 = vmatpush1.msra.mxu0 0.0
    %308 = vmatprep.mubr.f32.mxu0 0.0
    %309 = vmatmul.mubr.f32.gmra.mrb[0].mxu0 %v239
    %v310 = vpop.f32.mrb[0].mxu0
    %v311 = vadd.f32 %v235, %v310
    %v312 = vpop.f32.mrb[0].mxu0
    %313 = vmatprep.mubr.f32.mxu0 0.0
    %314 = vmatmul.mubr.f32.gmra.mrb[0].mxu0 %v242
    %v315 = vpop.f32.mrb[0].mxu0
    %v316 = vadd.f32 %v235, %v315
    %v317 = vpop.f32.mrb[0].mxu0
    %318 = vdwg.mxu0
    %v319 = vld [vmem:[%s8] sm:$0xff]
    %v320 = vld [vmem:[%s8 + $0x8] sm:$0xff]
    %v321 = vld [vmem:[%s8 + $0x10] sm:$0xff]
    %v322 = vld [vmem:[%s8 + $0x18] sm:$0xff]
    %325 = vrot.lane.b32.xlu0 %v311, 96
    %v326 = vpop.permute.xlu0 %325
    %327 = vrot.lane.b32.xlu0 %v316, 96
    %v328 = vpop.permute.xlu0 %327
    %vm329 = vcmask 64512
    %v330 = vsel %vm329, %v311, 0
    %v332 = vsel %vm329, %v316, 0
    %v334 = vsel %vm329, %v326, 0
    %v336 = vsel %vm329, %v328, 0
    %338 = vmatprep.subr.mxu0 0.0
    %339 = vmatpush1.xpose.msra.mxu0 %v334
    %340 = vmatprep.subr.mxu0 0.0
    %341 = vmatpush1.xpose.msra.mxu0 %v336
    %342 = vmatprep.subr.mxu0 0.0
    %343 = vmatpush1.xpose.msra.mxu0 0.0
    %344 = vmatprep.subr.mxu0 0.0
    %345 = vmatpush1.xpose.msra.mxu0 0.0
    %346 = vmatprep.subr.mxu0 0.0
    %347 = vmatpush1.xpose.msra.mxu0 0.0
    %348 = vmatprep.subr.mxu0 0.0
    %349 = vmatpush1.xpose.msra.mxu0 0.0
    %350 = vmatprep.subr.mxu0 0.0
    %351 = vmatpush1.xpose.msra.mxu0 0.0
    %352 = vmatprep.subr.mxu0 0.0
    %353 = vmatpush1.xpose.msra.mxu0 0.0
    %354 = vmatprep.subr.mxu0 0.0
    %355 = vmatpush1.xpose.msra.mxu0 0.0
    %356 = vmatprep.subr.mxu0 0.0
    %357 = vmatpush1.xpose.msra.mxu0 0.0
    %358 = vmatprep.subr.mxu0 0.0
    %359 = vmatpush1.xpose.msra.mxu0 0.0
    %360 = vmatprep.subr.mxu0 0.0
    %361 = vmatpush1.xpose.msra.mxu0 0.0
    %362 = vmatprep.subr.mxu0 0.0
    %363 = vmatpush1.xpose.msra.mxu0 0.0
    %364 = vmatprep.subr.mxu0 0.0
    %365 = vmatpush1.xpose.msra.mxu0 0.0
    %366 = vmatprep.subr.mxu0 0.0
    %367 = vmatpush1.xpose.msra.mxu0 0.0
    %368 = vmatprep.subr.mxu0 0.0
    %369 = vmatpush1.xpose.msra.mxu0 0.0
    %370 = vmatprep.subr.mxu0 0.0
    %371 = vmatpush1.xpose.msra.mxu0 0.0
    %372 = vmatprep.subr.mxu0 0.0
    %373 = vmatpush1.xpose.msra.mxu0 0.0
    %374 = vmatprep.subr.mxu0 0.0
    %375 = vmatpush1.xpose.msra.mxu0 0.0
    %376 = vmatprep.subr.mxu0 0.0
    %377 = vmatpush1.xpose.msra.mxu0 0.0
    %378 = vmatprep.subr.mxu0 0.0
    %379 = vmatpush1.xpose.msra.mxu0 0.0
    %380 = vmatprep.subr.mxu0 0.0
    %381 = vmatpush1.xpose.msra.mxu0 0.0
    %382 = vmatprep.subr.mxu0 0.0
    %383 = vmatpush1.xpose.msra.mxu0 0.0
    %384 = vmatprep.subr.mxu0 0.0
    %385 = vmatpush1.xpose.msra.mxu0 0.0
    %386 = vmatprep.subr.mxu0 0.0
    %387 = vmatpush1.xpose.msra.mxu0 0.0
    %388 = vmatprep.subr.mxu0 0.0
    %389 = vmatpush1.xpose.msra.mxu0 0.0
    %390 = vmatprep.subr.mxu0 0.0
    %391 = vmatpush1.xpose.msra.mxu0 0.0
    %392 = vmatprep.subr.mxu0 0.0
    %393 = vmatpush1.xpose.msra.mxu0 0.0
    %394 = vmatprep.subr.mxu0 0.0
    %395 = vmatpush1.xpose.msra.mxu0 0.0
    %396 = vmatprep.subr.mxu0 0.0
    %397 = vmatpush1.xpose.msra.mxu0 0.0
    %398 = vmatprep.subr.mxu0 0.0
    %399 = vmatpush1.xpose.msra.mxu0 0.0
    %400 = vmatprep.subr.mxu0 0.0
    %401 = vmatpush1.xpose.msra.mxu0 0.0
    %402 = vmatprep.mubr.f32.mxu0 0.0
    %403 = vmatmul.mubr.f32.gmra.mrb[0].mxu0 %v330
    %v404 = vpop.f32.mrb[0].mxu0
    %v405 = vadd.f32 0.0, %v404
    %v406 = vpop.f32.mrb[0].mxu0
    %407 = vmatprep.mubr.f32.mxu0 0.0
    %408 = vmatmul.mubr.f32.gmra.mrb[0].mxu0 %v332
    %v409 = vpop.f32.mrb[0].mxu0
    %v410 = vadd.f32 0.0, %v409
    %v411 = vpop.f32.mrb[0].mxu0
    %412 = vdwg.mxu0
    %v413 = vmul.f32 %v405, 0.35355338
    %v414 = vmul.f32 %v410, 0.35355338
    %v415 = vadd.f32 %v413, %v224
    %v416 = vadd.f32 %v414, %v225
    %vm417 = vcmask 130048
    %v418 = vsel %vm417, %v415, -inf
    %419 = vmax.xlane.f32.xlu0 %v418
    %v420 = vpop.xlane.xlu0 %419
    %v421 = vsel %vm417, %v416, -inf
    %422 = vmax.xlane.f32.xlu0 %v421
    %v423 = vpop.xlane.xlu0 %422
    %v424 = vsub.f32 %v415, %v420
    %v425 = vsub.f32 %v416, %v423
    %v426 = vmul.f32 %v424, 1.442695
    %v427 = vpow.pop %v426
    %v428 = vmul.f32 %v425, 1.442695
    %v429 = vpow.pop %v428
    %v430 = vsel %vm417, %v427, 0.0
    %431 = vadd.xlane.f32.xlu0 %v430
    %v432 = vpop.xlane.xlu0 %431
    %v433 = vsel %vm417, %v429, 0.0
    %434 = vadd.xlane.f32.xlu0 %v433
    %v435 = vpop.xlane.xlu0 %434
    %v436 = vrcp.pop %v432
    %v437 = vrcp.pop %v435
    %v438 = vmul.f32 %v427, %v436
    %v439 = vmul.f32 %v429, %v437
    %440 = vrot.lane.b32.xlu0 %v311, 64
    %v441 = vpop.permute.xlu0 %440
    %442 = vrot.lane.b32.xlu0 %v316, 64
    %v443 = vpop.permute.xlu0 %442
    %v447 = vsel %vm417, %v438, 0
    %v450 = vsel %vm417, %v439, 0
    %452 = vmatprep.subr.mxu0 0.0
    %453 = vmatpush1.msra.mxu0 %v441
    %454 = vmatprep.subr.mxu0 0.0
    %455 = vmatpush1.msra.mxu0 %v443
    %456 = vmatprep.subr.mxu0 0.0
    %457 = vmatpush1.msra.mxu0 0.0
    %458 = vmatprep.subr.mxu0 0.0
    %459 = vmatpush1.msra.mxu0 0.0
    %460 = vmatprep.subr.mxu0 0.0
    %461 = vmatpush1.msra.mxu0 0.0
    %462 = vmatprep.subr.mxu0 0.0
    %463 = vmatpush1.msra.mxu0 0.0
    %464 = vmatprep.subr.mxu0 0.0
    %465 = vmatpush1.msra.mxu0 0.0
    %466 = vmatprep.subr.mxu0 0.0
    %467 = vmatpush1.msra.mxu0 0.0
    %468 = vmatprep.subr.mxu0 0.0
    %469 = vmatpush1.msra.mxu0 0.0
    %470 = vmatprep.subr.mxu0 0.0
    %471 = vmatpush1.msra.mxu0 0.0
    %472 = vmatprep.subr.mxu0 0.0
    %473 = vmatpush1.msra.mxu0 0.0
    %474 = vmatprep.subr.mxu0 0.0
    %475 = vmatpush1.msra.mxu0 0.0
    %476 = vmatprep.subr.mxu0 0.0
    %477 = vmatpush1.msra.mxu0 0.0
    %478 = vmatprep.subr.mxu0 0.0
    %479 = vmatpush1.msra.mxu0 0.0
    %480 = vmatprep.subr.mxu0 0.0
    %481 = vmatpush1.msra.mxu0 0.0
    %482 = vmatprep.subr.mxu0 0.0
    %483 = vmatpush1.msra.mxu0 0.0
    %484 = vmatprep.subr.mxu0 0.0
    %485 = vmatpush1.msra.mxu0 0.0
    %486 = vmatprep.subr.mxu0 0.0
    %487 = vmatpush1.msra.mxu0 0.0
    %488 = vmatprep.subr.mxu0 0.0
    %489 = vmatpush1.msra.mxu0 0.0
    %490 = vmatprep.subr.mxu0 0.0
    %491 = vmatpush1.msra.mxu0 0.0
    %492 = vmatprep.subr.mxu0 0.0
    %493 = vmatpush1.msra.mxu0 0.0
    %494 = vmatprep.subr.mxu0 0.0
    %495 = vmatpush1.msra.mxu0 0.0
    %496 = vmatprep.subr.mxu0 0.0
    %497 = vmatpush1.msra.mxu0 0.0
    %498 = vmatprep.subr.mxu0 0.0
    %499 = vmatpush1.msra.mxu0 0.0
    %500 = vmatprep.subr.mxu0 0.0
    %501 = vmatpush1.msra.mxu0 0.0
    %502 = vmatprep.subr.mxu0 0.0
    %503 = vmatpush1.msra.mxu0 0.0
    %504 = vmatprep.subr.mxu0 0.0
    %505 = vmatpush1.msra.mxu0 0.0
    %506 = vmatprep.subr.mxu0 0.0
    %507 = vmatpush1.msra.mxu0 0.0
    %508 = vmatprep.subr.mxu0 0.0
    %509 = vmatpush1.msra.mxu0 0.0
    %510 = vmatprep.subr.mxu0 0.0
    %511 = vmatpush1.msra.mxu0 0.0
    %512 = vmatprep.subr.mxu0 0.0
    %513 = vmatpush1.msra.mxu0 0.0
    %514 = vmatprep.subr.mxu0 0.0
    %515 = vmatpush1.msra.mxu0 0.0
    %516 = vmatprep.mubr.f32.mxu0 0.0
    %517 = vmatmul.mubr.f32.gmra.mrb[0].mxu0 %v447
    %v518 = vpop.f32.mrb[0].mxu0
    %v519 = vadd.f32 0.0, %v518
    %v520 = vpop.f32.mrb[0].mxu0
    %521 = vmatprep.mubr.f32.mxu0 0.0
    %522 = vmatmul.mubr.f32.gmra.mrb[0].mxu0 %v450
    %v523 = vpop.f32.mrb[0].mxu0
    %v524 = vadd.f32 0.0, %v523
    %v525 = vpop.f32.mrb[0].mxu0
    %526 = vdwg.mxu0
    %527 = vrot.lane.b32.xlu0 %v311, 120
    %v528 = vpop.permute.xlu0 %527
    %529 = vrot.lane.b32.xlu0 %v316, 120
    %v530 = vpop.permute.xlu0 %529
    %531 = vrot.lane.b32.xlu0 %v311, 88
    %v532 = vpop.permute.xlu0 %531
    %533 = vrot.lane.b32.xlu0 %v316, 88
    %v534 = vpop.permute.xlu0 %533
    %v535 = vsel %vm329, %v528, 0
    %v537 = vsel %vm329, %v530, 0
    %v539 = vsel %vm329, %v532, 0
    %v541 = vsel %vm329, %v534, 0
    %543 = vmatprep.subr.mxu0 0.0
    %544 = vmatpush1.xpose.msra.mxu0 %v539
    %545 = vmatprep.subr.mxu0 0.0
    %546 = vmatpush1.xpose.msra.mxu0 %v541
    %547 = vmatprep.subr.mxu0 0.0
    %548 = vmatpush1.xpose.msra.mxu0 0.0
    %549 = vmatprep.subr.mxu0 0.0
    %550 = vmatpush1.xpose.msra.mxu0 0.0
    %551 = vmatprep.subr.mxu0 0.0
    %552 = vmatpush1.xpose.msra.mxu0 0.0
    %553 = vmatprep.subr.mxu0 0.0
    %554 = vmatpush1.xpose.msra.mxu0 0.0
    %555 = vmatprep.subr.mxu0 0.0
    %556 = vmatpush1.xpose.msra.mxu0 0.0
    %557 = vmatprep.subr.mxu0 0.0
    %558 = vmatpush1.xpose.msra.mxu0 0.0
    %559 = vmatprep.subr.mxu0 0.0
    %560 = vmatpush1.xpose.msra.mxu0 0.0
    %561 = vmatprep.subr.mxu0 0.0
    %562 = vmatpush1.xpose.msra.mxu0 0.0
    %563 = vmatprep.subr.mxu0 0.0
    %564 = vmatpush1.xpose.msra.mxu0 0.0
    %565 = vmatprep.subr.mxu0 0.0
    %566 = vmatpush1.xpose.msra.mxu0 0.0
    %567 = vmatprep.subr.mxu0 0.0
    %568 = vmatpush1.xpose.msra.mxu0 0.0
    %569 = vmatprep.subr.mxu0 0.0
    %570 = vmatpush1.xpose.msra.mxu0 0.0
    %571 = vmatprep.subr.mxu0 0.0
    %572 = vmatpush1.xpose.msra.mxu0 0.0
    %573 = vmatprep.subr.mxu0 0.0
    %574 = vmatpush1.xpose.msra.mxu0 0.0
    %575 = vmatprep.subr.mxu0 0.0
    %576 = vmatpush1.xpose.msra.mxu0 0.0
    %577 = vmatprep.subr.mxu0 0.0
    %578 = vmatpush1.xpose.msra.mxu0 0.0
    %579 = vmatprep.subr.mxu0 0.0
    %580 = vmatpush1.xpose.msra.mxu0 0.0
    %581 = vmatprep.subr.mxu0 0.0
    %582 = vmatpush1.xpose.msra.mxu0 0.0
    %583 = vmatprep.subr.mxu0 0.0
    %584 = vmatpush1.xpose.msra.mxu0 0.0
    %585 = vmatprep.subr.mxu0 0.0
    %586 = vmatpush1.xpose.msra.mxu0 0.0
    %587 = vmatprep.subr.mxu0 0.0
    %588 = vmatpush1.xpose.msra.mxu0 0.0
    %589 = vmatprep.subr.mxu0 0.0
    %590 = vmatpush1.xpose.msra.mxu0 0.0
    %591 = vmatprep.subr.mxu0 0.0
    %592 = vmatpush1.xpose.msra.mxu0 0.0
    %593 = vmatprep.subr.mxu0 0.0
    %594 = vmatpush1.xpose.msra.mxu0 0.0
    %595 = vmatprep.subr.mxu0 0.0
    %596 = vmatpush1.xpose.msra.mxu0 0.0
    %597 = vmatprep.subr.mxu0 0.0
    %598 = vmatpush1.xpose.msra.mxu0 0.0
    %599 = vmatprep.subr.mxu0 0.0
    %600 = vmatpush1.xpose.msra.mxu0 0.0
    %601 = vmatprep.subr.mxu0 0.0
    %602 = vmatpush1.xpose.msra.mxu0 0.0
    %603 = vmatprep.subr.mxu0 0.0
    %604 = vmatpush1.xpose.msra.mxu0 0.0
    %605 = vmatprep.subr.mxu0 0.0
    %606 = vmatpush1.xpose.msra.mxu0 0.0
    %607 = vmatprep.mubr.f32.mxu0 0.0
    %608 = vmatmul.mubr.f32.gmra.mrb[0].mxu0 %v535
    %v609 = vpop.f32.mrb[0].mxu0
    %v610 = vadd.f32 0.0, %v609
    %v611 = vpop.f32.mrb[0].mxu0
    %612 = vmatprep.mubr.f32.mxu0 0.0
    %613 = vmatmul.mubr.f32.gmra.mrb[0].mxu0 %v537
    %v614 = vpop.f32.mrb[0].mxu0
    %v615 = vadd.f32 0.0, %v614
    %v616 = vpop.f32.mrb[0].mxu0
    %617 = vdwg.mxu0
    %v618 = vmul.f32 %v610, 0.35355338
    %v619 = vmul.f32 %v615, 0.35355338
    %v620 = vadd.f32 %v618, %v224
    %v621 = vadd.f32 %v619, %v225
    %v622 = vsel %vm417, %v620, -inf
    %623 = vmax.xlane.f32.xlu0 %v622
    %v624 = vpop.xlane.xlu0 %623
    %v625 = vsel %vm417, %v621, -inf
    %626 = vmax.xlane.f32.xlu0 %v625
    %v627 = vpop.xlane.xlu0 %626
    %v628 = vsub.f32 %v620, %v624
    %v629 = vsub.f32 %v621, %v627
    %v630 = vmul.f32 %v628, 1.442695
    %v631 = vpow.pop %v630
    %v632 = vmul.f32 %v629, 1.442695
    %v633 = vpow.pop %v632
    %v634 = vsel %vm417, %v631, 0.0
    %635 = vadd.xlane.f32.xlu0 %v634
    %v636 = vpop.xlane.xlu0 %635
    %v637 = vsel %vm417, %v633, 0.0
    %638 = vadd.xlane.f32.xlu0 %v637
    %v639 = vpop.xlane.xlu0 %638
    %v640 = vrcp.pop %v636
    %v641 = vrcp.pop %v639
    %v642 = vmul.f32 %v631, %v640
    %v643 = vmul.f32 %v633, %v641
    %644 = vrot.lane.b32.xlu0 %v311, 56
    %v645 = vpop.permute.xlu0 %644
    %646 = vrot.lane.b32.xlu0 %v316, 56
    %v647 = vpop.permute.xlu0 %646
    %v651 = vsel %vm417, %v642, 0
    %v654 = vsel %vm417, %v643, 0
    %656 = vmatprep.subr.mxu0 0.0
    %657 = vmatpush1.msra.mxu0 %v645
    %658 = vmatprep.subr.mxu0 0.0
    %659 = vmatpush1.msra.mxu0 %v647
    %660 = vmatprep.subr.mxu0 0.0
    %661 = vmatpush1.msra.mxu0 0.0
    %662 = vmatprep.subr.mxu0 0.0
    %663 = vmatpush1.msra.mxu0 0.0
    %664 = vmatprep.subr.mxu0 0.0
    %665 = vmatpush1.msra.mxu0 0.0
    %666 = vmatprep.subr.mxu0 0.0
    %667 = vmatpush1.msra.mxu0 0.0
    %668 = vmatprep.subr.mxu0 0.0
    %669 = vmatpush1.msra.mxu0 0.0
    %670 = vmatprep.subr.mxu0 0.0
    %671 = vmatpush1.msra.mxu0 0.0
    %672 = vmatprep.subr.mxu0 0.0
    %673 = vmatpush1.msra.mxu0 0.0
    %674 = vmatprep.subr.mxu0 0.0
    %675 = vmatpush1.msra.mxu0 0.0
    %676 = vmatprep.subr.mxu0 0.0
    %677 = vmatpush1.msra.mxu0 0.0
    %678 = vmatprep.subr.mxu0 0.0
    %679 = vmatpush1.msra.mxu0 0.0
    %680 = vmatprep.subr.mxu0 0.0
    %681 = vmatpush1.msra.mxu0 0.0
    %682 = vmatprep.subr.mxu0 0.0
    %683 = vmatpush1.msra.mxu0 0.0
    %684 = vmatprep.subr.mxu0 0.0
    %685 = vmatpush1.msra.mxu0 0.0
    %686 = vmatprep.subr.mxu0 0.0
    %687 = vmatpush1.msra.mxu0 0.0
    %688 = vmatprep.subr.mxu0 0.0
    %689 = vmatpush1.msra.mxu0 0.0
    %690 = vmatprep.subr.mxu0 0.0
    %691 = vmatpush1.msra.mxu0 0.0
    %692 = vmatprep.subr.mxu0 0.0
    %693 = vmatpush1.msra.mxu0 0.0
    %694 = vmatprep.subr.mxu0 0.0
    %695 = vmatpush1.msra.mxu0 0.0
    %696 = vmatprep.subr.mxu0 0.0
    %697 = vmatpush1.msra.mxu0 0.0
    %698 = vmatprep.subr.mxu0 0.0
    %699 = vmatpush1.msra.mxu0 0.0
    %700 = vmatprep.subr.mxu0 0.0
    %701 = vmatpush1.msra.mxu0 0.0
    %702 = vmatprep.subr.mxu0 0.0
    %703 = vmatpush1.msra.mxu0 0.0
    %704 = vmatprep.subr.mxu0 0.0
    %705 = vmatpush1.msra.mxu0 0.0
    %706 = vmatprep.subr.mxu0 0.0
    %707 = vmatpush1.msra.mxu0 0.0
    %708 = vmatprep.subr.mxu0 0.0
    %709 = vmatpush1.msra.mxu0 0.0
    %710 = vmatprep.subr.mxu0 0.0
    %711 = vmatpush1.msra.mxu0 0.0
    %712 = vmatprep.subr.mxu0 0.0
    %713 = vmatpush1.msra.mxu0 0.0
    %714 = vmatprep.subr.mxu0 0.0
    %715 = vmatpush1.msra.mxu0 0.0
    %716 = vmatprep.subr.mxu0 0.0
    %717 = vmatpush1.msra.mxu0 0.0
    %718 = vmatprep.subr.mxu0 0.0
    %719 = vmatpush1.msra.mxu0 0.0
    %720 = vmatprep.mubr.f32.mxu0 0.0
    %721 = vmatmul.mubr.f32.gmra.mrb[0].mxu0 %v651
    %v722 = vpop.f32.mrb[0].mxu0
    %v723 = vadd.f32 0.0, %v722
    %v724 = vpop.f32.mrb[0].mxu0
    %725 = vmatprep.mubr.f32.mxu0 0.0
    %726 = vmatmul.mubr.f32.gmra.mrb[0].mxu0 %v654
    %v727 = vpop.f32.mrb[0].mxu0
    %v728 = vadd.f32 0.0, %v727
    %v729 = vpop.f32.mrb[0].mxu0
    %730 = vdwg.mxu0
    %v732 = vsel %vm329, %v723, 0
    %v735 = vsel %vm329, %v728, 0
    %737 = vmatprep.subr.mxu0 0.0
    %738 = vmatpush1.msra.mxu0 %v320
    %739 = vmatprep.subr.mxu0 0.0
    %740 = vmatpush1.msra.mxu0 0.0
    %741 = vmatprep.subr.mxu0 0.0
    %742 = vmatpush1.msra.mxu0 0.0
    %743 = vmatprep.subr.mxu0 0.0
    %744 = vmatpush1.msra.mxu0 0.0
    %745 = vmatprep.subr.mxu0 0.0
    %746 = vmatpush1.msra.mxu0 0.0
    %747 = vmatprep.subr.mxu0 0.0
    %748 = vmatpush1.msra.mxu0 0.0
    %749 = vmatprep.subr.mxu0 0.0
    %750 = vmatpush1.msra.mxu0 0.0
    %751 = vmatprep.subr.mxu0 0.0
    %752 = vmatpush1.msra.mxu0 0.0
    %753 = vmatprep.subr.mxu0 0.0
    %754 = vmatpush1.msra.mxu0 0.0
    %755 = vmatprep.subr.mxu0 0.0
    %756 = vmatpush1.msra.mxu0 0.0
    %757 = vmatprep.subr.mxu0 0.0
    %758 = vmatpush1.msra.mxu0 0.0
    %759 = vmatprep.subr.mxu0 0.0
    %760 = vmatpush1.msra.mxu0 0.0
    %761 = vmatprep.subr.mxu0 0.0
    %762 = vmatpush1.msra.mxu0 0.0
    %763 = vmatprep.subr.mxu0 0.0
    %764 = vmatpush1.msra.mxu0 0.0
    %765 = vmatprep.subr.mxu0 0.0
    %766 = vmatpush1.msra.mxu0 0.0
    %767 = vmatprep.subr.mxu0 0.0
    %768 = vmatpush1.msra.mxu0 0.0
    %769 = vmatprep.subr.mxu0 0.0
    %770 = vmatpush1.msra.mxu0 0.0
    %771 = vmatprep.subr.mxu0 0.0
    %772 = vmatpush1.msra.mxu0 0.0
    %773 = vmatprep.subr.mxu0 0.0
    %774 = vmatpush1.msra.mxu0 0.0
    %775 = vmatprep.subr.mxu0 0.0
    %776 = vmatpush1.msra.mxu0 0.0
    %777 = vmatprep.subr.mxu0 0.0
    %778 = vmatpush1.msra.mxu0 0.0
    %779 = vmatprep.subr.mxu0 0.0
    %780 = vmatpush1.msra.mxu0 0.0
    %781 = vmatprep.subr.mxu0 0.0
    %782 = vmatpush1.msra.mxu0 0.0
    %783 = vmatprep.subr.mxu0 0.0
    %784 = vmatpush1.msra.mxu0 0.0
    %785 = vmatprep.subr.mxu0 0.0
    %786 = vmatpush1.msra.mxu0 0.0
    %787 = vmatprep.subr.mxu0 0.0
    %788 = vmatpush1.msra.mxu0 0.0
    %789 = vmatprep.subr.mxu0 0.0
    %790 = vmatpush1.msra.mxu0 0.0
    %791 = vmatprep.subr.mxu0 0.0
    %792 = vmatpush1.msra.mxu0 0.0
    %793 = vmatprep.subr.mxu0 0.0
    %794 = vmatpush1.msra.mxu0 0.0
    %795 = vmatprep.subr.mxu0 0.0
    %796 = vmatpush1.msra.mxu0 0.0
    %797 = vmatprep.subr.mxu0 0.0
    %798 = vmatpush1.msra.mxu0 0.0
    %799 = vmatprep.subr.mxu0 0.0
    %800 = vmatpush1.msra.mxu0 0.0
    %801 = vmatprep.mubr.f32.mxu0 0.0
    %802 = vmatmul.mubr.f32.gmra.mrb[0].mxu0 %v732
    %v803 = vpop.f32.mrb[0].mxu0
    %v804 = vadd.f32 0.0, %v803
    %v805 = vpop.f32.mrb[0].mxu0
    %806 = vmatprep.mubr.f32.mxu0 0.0
    %807 = vmatmul.mubr.f32.gmra.mrb[0].mxu0 %v735
    %v808 = vpop.f32.mrb[0].mxu0
    %v809 = vadd.f32 0.0, %v808
    %v810 = vpop.f32.mrb[0].mxu0
    %811 = vdwg.mxu0
    %v813 = vsel %vm329, %v519, 0
    %v816 = vsel %vm329, %v524, 0
    %818 = vmatprep.subr.mxu0 0.0
    %819 = vmatpush1.msra.mxu0 %v319
    %820 = vmatprep.subr.mxu0 0.0
    %821 = vmatpush1.msra.mxu0 0.0
    %822 = vmatprep.subr.mxu0 0.0
    %823 = vmatpush1.msra.mxu0 0.0
    %824 = vmatprep.subr.mxu0 0.0
    %825 = vmatpush1.msra.mxu0 0.0
    %826 = vmatprep.subr.mxu0 0.0
    %827 = vmatpush1.msra.mxu0 0.0
    %828 = vmatprep.subr.mxu0 0.0
    %829 = vmatpush1.msra.mxu0 0.0
    %830 = vmatprep.subr.mxu0 0.0
    %831 = vmatpush1.msra.mxu0 0.0
    %832 = vmatprep.subr.mxu0 0.0
    %833 = vmatpush1.msra.mxu0 0.0
    %834 = vmatprep.subr.mxu0 0.0
    %835 = vmatpush1.msra.mxu0 0.0
    %836 = vmatprep.subr.mxu0 0.0
    %837 = vmatpush1.msra.mxu0 0.0
    %838 = vmatprep.subr.mxu0 0.0
    %839 = vmatpush1.msra.mxu0 0.0
    %840 = vmatprep.subr.mxu0 0.0
    %841 = vmatpush1.msra.mxu0 0.0
    %842 = vmatprep.subr.mxu0 0.0
    %843 = vmatpush1.msra.mxu0 0.0
    %844 = vmatprep.subr.mxu0 0.0
    %845 = vmatpush1.msra.mxu0 0.0
    %846 = vmatprep.subr.mxu0 0.0
    %847 = vmatpush1.msra.mxu0 0.0
    %848 = vmatprep.subr.mxu0 0.0
    %849 = vmatpush1.msra.mxu0 0.0
    %850 = vmatprep.subr.mxu0 0.0
    %851 = vmatpush1.msra.mxu0 0.0
    %852 = vmatprep.subr.mxu0 0.0
    %853 = vmatpush1.msra.mxu0 0.0
    %854 = vmatprep.subr.mxu0 0.0
    %855 = vmatpush1.msra.mxu0 0.0
    %856 = vmatprep.subr.mxu0 0.0
    %857 = vmatpush1.msra.mxu0 0.0
    %858 = vmatprep.subr.mxu0 0.0
    %859 = vmatpush1.msra.mxu0 0.0
    %860 = vmatprep.subr.mxu0 0.0
    %861 = vmatpush1.msra.mxu0 0.0
    %862 = vmatprep.subr.mxu0 0.0
    %863 = vmatpush1.msra.mxu0 0.0
    %864 = vmatprep.subr.mxu0 0.0
    %865 = vmatpush1.msra.mxu0 0.0
    %866 = vmatprep.subr.mxu0 0.0
    %867 = vmatpush1.msra.mxu0 0.0
    %868 = vmatprep.subr.mxu0 0.0
    %869 = vmatpush1.msra.mxu0 0.0
    %870 = vmatprep.subr.mxu0 0.0
    %871 = vmatpush1.msra.mxu0 0.0
    %872 = vmatprep.subr.mxu0 0.0
    %873 = vmatpush1.msra.mxu0 0.0
    %874 = vmatprep.subr.mxu0 0.0
    %875 = vmatpush1.msra.mxu0 0.0
    %876 = vmatprep.subr.mxu0 0.0
    %877 = vmatpush1.msra.mxu0 0.0
    %878 = vmatprep.subr.mxu0 0.0
    %879 = vmatpush1.msra.mxu0 0.0
    %880 = vmatprep.subr.mxu0 0.0
    %881 = vmatpush1.msra.mxu0 0.0
    %882 = vmatprep.mubr.f32.mxu0 0.0
    %883 = vmatmul.mubr.f32.gmra.mrb[0].mxu0 %v813
    %v884 = vpop.f32.mrb[0].mxu0
    %v885 = vadd.f32 %v804, %v884
    %v886 = vpop.f32.mrb[0].mxu0
    %887 = vmatprep.mubr.f32.mxu0 0.0
    %888 = vmatmul.mubr.f32.gmra.mrb[0].mxu0 %v816
    %v889 = vpop.f32.mrb[0].mxu0
    %v890 = vadd.f32 %v809, %v889
    %v891 = vpop.f32.mrb[0].mxu0
    %892 = vdwg.mxu0
    %893 = vrot.lane.b32.xlu0 %v311, 112
    %v894 = vpop.permute.xlu0 %893
    %895 = vrot.lane.b32.xlu0 %v316, 112
    %v896 = vpop.permute.xlu0 %895
    %897 = vrot.lane.b32.xlu0 %v311, 80
    %v898 = vpop.permute.xlu0 %897
    %899 = vrot.lane.b32.xlu0 %v316, 80
    %v900 = vpop.permute.xlu0 %899
    %v901 = vsel %vm329, %v894, 0
    %v903 = vsel %vm329, %v896, 0
    %v905 = vsel %vm329, %v898, 0
    %v907 = vsel %vm329, %v900, 0
    %909 = vmatprep.subr.mxu0 0.0
    %910 = vmatpush1.xpose.msra.mxu0 %v905
    %911 = vmatprep.subr.mxu0 0.0
    %912 = vmatpush1.xpose.msra.mxu0 %v907
    %913 = vmatprep.subr.mxu0 0.0
    %914 = vmatpush1.xpose.msra.mxu0 0.0
    %915 = vmatprep.subr.mxu0 0.0
    %916 = vmatpush1.xpose.msra.mxu0 0.0
    %917 = vmatprep.subr.mxu0 0.0
    %918 = vmatpush1.xpose.msra.mxu0 0.0
    %919 = vmatprep.subr.mxu0 0.0
    %920 = vmatpush1.xpose.msra.mxu0 0.0
    %921 = vmatprep.subr.mxu0 0.0
    %922 = vmatpush1.xpose.msra.mxu0 0.0
    %923 = vmatprep.subr.mxu0 0.0
    %924 = vmatpush1.xpose.msra.mxu0 0.0
    %925 = vmatprep.subr.mxu0 0.0
    %926 = vmatpush1.xpose.msra.mxu0 0.0
    %927 = vmatprep.subr.mxu0 0.0
    %928 = vmatpush1.xpose.msra.mxu0 0.0
    %929 = vmatprep.subr.mxu0 0.0
    %930 = vmatpush1.xpose.msra.mxu0 0.0
    %931 = vmatprep.subr.mxu0 0.0
    %932 = vmatpush1.xpose.msra.mxu0 0.0
    %933 = vmatprep.subr.mxu0 0.0
    %934 = vmatpush1.xpose.msra.mxu0 0.0
    %935 = vmatprep.subr.mxu0 0.0
    %936 = vmatpush1.xpose.msra.mxu0 0.0
    %937 = vmatprep.subr.mxu0 0.0
    %938 = vmatpush1.xpose.msra.mxu0 0.0
    %939 = vmatprep.subr.mxu0 0.0
    %940 = vmatpush1.xpose.msra.mxu0 0.0
    %941 = vmatprep.subr.mxu0 0.0
    %942 = vmatpush1.xpose.msra.mxu0 0.0
    %943 = vmatprep.subr.mxu0 0.0
    %944 = vmatpush1.xpose.msra.mxu0 0.0
    %945 = vmatprep.subr.mxu0 0.0
    %946 = vmatpush1.xpose.msra.mxu0 0.0
    %947 = vmatprep.subr.mxu0 0.0
    %948 = vmatpush1.xpose.msra.mxu0 0.0
    %949 = vmatprep.subr.mxu0 0.0
    %950 = vmatpush1.xpose.msra.mxu0 0.0
    %951 = vmatprep.subr.mxu0 0.0
    %952 = vmatpush1.xpose.msra.mxu0 0.0
    %953 = vmatprep.subr.mxu0 0.0
    %954 = vmatpush1.xpose.msra.mxu0 0.0
    %955 = vmatprep.subr.mxu0 0.0
    %956 = vmatpush1.xpose.msra.mxu0 0.0
    %957 = vmatprep.subr.mxu0 0.0
    %958 = vmatpush1.xpose.msra.mxu0 0.0
    %959 = vmatprep.subr.mxu0 0.0
    %960 = vmatpush1.xpose.msra.mxu0 0.0
    %961 = vmatprep.subr.mxu0 0.0
    %962 = vmatpush1.xpose.msra.mxu0 0.0
    %963 = vmatprep.subr.mxu0 0.0
    %964 = vmatpush1.xpose.msra.mxu0 0.0
    %965 = vmatprep.subr.mxu0 0.0
    %966 = vmatpush1.xpose.msra.mxu0 0.0
    %967 = vmatprep.subr.mxu0 0.0
    %968 = vmatpush1.xpose.msra.mxu0 0.0
    %969 = vmatprep.subr.mxu0 0.0
    %970 = vmatpush1.xpose.msra.mxu0 0.0
    %971 = vmatprep.subr.mxu0 0.0
    %972 = vmatpush1.xpose.msra.mxu0 0.0
    %973 = vmatprep.mubr.f32.mxu0 0.0
    %974 = vmatmul.mubr.f32.gmra.mrb[0].mxu0 %v901
    %v975 = vpop.f32.mrb[0].mxu0
    %v976 = vadd.f32 0.0, %v975
    %v977 = vpop.f32.mrb[0].mxu0
    %978 = vmatprep.mubr.f32.mxu0 0.0
    %979 = vmatmul.mubr.f32.gmra.mrb[0].mxu0 %v903
    %v980 = vpop.f32.mrb[0].mxu0
    %v981 = vadd.f32 0.0, %v980
    %v982 = vpop.f32.mrb[0].mxu0
    %983 = vdwg.mxu0
    %v984 = vmul.f32 %v976, 0.35355338
    %v985 = vmul.f32 %v981, 0.35355338
    %v986 = vadd.f32 %v984, %v224
    %v987 = vadd.f32 %v985, %v225
    %v988 = vsel %vm417, %v986, -inf
    %989 = vmax.xlane.f32.xlu0 %v988
    %v990 = vpop.xlane.xlu0 %989
    %v991 = vsel %vm417, %v987, -inf
    %992 = vmax.xlane.f32.xlu0 %v991
    %v993 = vpop.xlane.xlu0 %992
    %v994 = vsub.f32 %v986, %v990
    %v995 = vsub.f32 %v987, %v993
    %v996 = vmul.f32 %v994, 1.442695
    %v997 = vpow.pop %v996
    %v998 = vmul.f32 %v995, 1.442695
    %v999 = vpow.pop %v998
    %v1000 = vsel %vm417, %v997, 0.0
    %1001 = vadd.xlane.f32.xlu0 %v1000
    %v1002 = vpop.xlane.xlu0 %1001
    %v1003 = vsel %vm417, %v999, 0.0
    %1004 = vadd.xlane.f32.xlu0 %v1003
    %v1005 = vpop.xlane.xlu0 %1004
    %v1006 = vrcp.pop %v1002
    %v1007 = vrcp.pop %v1005
    %v1008 = vmul.f32 %v997, %v1006
    %v1009 = vmul.f32 %v999, %v1007
    %1010 = vrot.lane.b32.xlu0 %v311, 48
    %v1011 = vpop.permute.xlu0 %1010
    %1012 = vrot.lane.b32.xlu0 %v316, 48
    %v1013 = vpop.permute.xlu0 %1012
    %v1017 = vsel %vm417, %v1008, 0
    %v1020 = vsel %vm417, %v1009, 0
    %1022 = vmatprep.subr.mxu0 0.0
    %1023 = vmatpush1.msra.mxu0 %v1011
    %1024 = vmatprep.subr.mxu0 0.0
    %1025 = vmatpush1.msra.mxu0 %v1013
    %1026 = vmatprep.subr.mxu0 0.0
    %1027 = vmatpush1.msra.mxu0 0.0
    %1028 = vmatprep.subr.mxu0 0.0
    %1029 = vmatpush1.msra.mxu0 0.0
    %1030 = vmatprep.subr.mxu0 0.0
    %1031 = vmatpush1.msra.mxu0 0.0
    %1032 = vmatprep.subr.mxu0 0.0
    %1033 = vmatpush1.msra.mxu0 0.0
    %1034 = vmatprep.subr.mxu0 0.0
    %1035 = vmatpush1.msra.mxu0 0.0
    %1036 = vmatprep.subr.mxu0 0.0
    %1037 = vmatpush1.msra.mxu0 0.0
    %1038 = vmatprep.subr.mxu0 0.0
    %1039 = vmatpush1.msra.mxu0 0.0
    %1040 = vmatprep.subr.mxu0 0.0
    %1041 = vmatpush1.msra.mxu0 0.0
    %1042 = vmatprep.subr.mxu0 0.0
    %1043 = vmatpush1.msra.mxu0 0.0
    %1044 = vmatprep.subr.mxu0 0.0
    %1045 = vmatpush1.msra.mxu0 0.0
    %1046 = vmatprep.subr.mxu0 0.0
    %1047 = vmatpush1.msra.mxu0 0.0
    %1048 = vmatprep.subr.mxu0 0.0
    %1049 = vmatpush1.msra.mxu0 0.0
    %1050 = vmatprep.subr.mxu0 0.0
    %1051 = vmatpush1.msra.mxu0 0.0
    %1052 = vmatprep.subr.mxu0 0.0
    %1053 = vmatpush1.msra.mxu0 0.0
    %1054 = vmatprep.subr.mxu0 0.0
    %1055 = vmatpush1.msra.mxu0 0.0
    %1056 = vmatprep.subr.mxu0 0.0
    %1057 = vmatpush1.msra.mxu0 0.0
    %1058 = vmatprep.subr.mxu0 0.0
    %1059 = vmatpush1.msra.mxu0 0.0
    %1060 = vmatprep.subr.mxu0 0.0
    %1061 = vmatpush1.msra.mxu0 0.0
    %1062 = vmatprep.subr.mxu0 0.0
    %1063 = vmatpush1.msra.mxu0 0.0
    %1064 = vmatprep.subr.mxu0 0.0
    %1065 = vmatpush1.msra.mxu0 0.0
    %1066 = vmatprep.subr.mxu0 0.0
    %1067 = vmatpush1.msra.mxu0 0.0
    %1068 = vmatprep.subr.mxu0 0.0
    %1069 = vmatpush1.msra.mxu0 0.0
    %1070 = vmatprep.subr.mxu0 0.0
    %1071 = vmatpush1.msra.mxu0 0.0
    %1072 = vmatprep.subr.mxu0 0.0
    %1073 = vmatpush1.msra.mxu0 0.0
    %1074 = vmatprep.subr.mxu0 0.0
    %1075 = vmatpush1.msra.mxu0 0.0
    %1076 = vmatprep.subr.mxu0 0.0
    %1077 = vmatpush1.msra.mxu0 0.0
    %1078 = vmatprep.subr.mxu0 0.0
    %1079 = vmatpush1.msra.mxu0 0.0
    %1080 = vmatprep.subr.mxu0 0.0
    %1081 = vmatpush1.msra.mxu0 0.0
    %1082 = vmatprep.subr.mxu0 0.0
    %1083 = vmatpush1.msra.mxu0 0.0
    %1084 = vmatprep.subr.mxu0 0.0
    %1085 = vmatpush1.msra.mxu0 0.0
    %1086 = vmatprep.mubr.f32.mxu0 0.0
    %1087 = vmatmul.mubr.f32.gmra.mrb[0].mxu0 %v1017
    %v1088 = vpop.f32.mrb[0].mxu0
    %v1089 = vadd.f32 0.0, %v1088
    %v1090 = vpop.f32.mrb[0].mxu0
    %1091 = vmatprep.mubr.f32.mxu0 0.0
    %1092 = vmatmul.mubr.f32.gmra.mrb[0].mxu0 %v1020
    %v1093 = vpop.f32.mrb[0].mxu0
    %v1094 = vadd.f32 0.0, %v1093
    %v1095 = vpop.f32.mrb[0].mxu0
    %1096 = vdwg.mxu0
    %v1098 = vsel %vm329, %v1089, 0
    %v1101 = vsel %vm329, %v1094, 0
    %1103 = vmatprep.subr.mxu0 0.0
    %1104 = vmatpush1.msra.mxu0 %v321
    %1105 = vmatprep.subr.mxu0 0.0
    %1106 = vmatpush1.msra.mxu0 0.0
    %1107 = vmatprep.subr.mxu0 0.0
    %1108 = vmatpush1.msra.mxu0 0.0
    %1109 = vmatprep.subr.mxu0 0.0
    %1110 = vmatpush1.msra.mxu0 0.0
    %1111 = vmatprep.subr.mxu0 0.0
    %1112 = vmatpush1.msra.mxu0 0.0
    %1113 = vmatprep.subr.mxu0 0.0
    %1114 = vmatpush1.msra.mxu0 0.0
    %1115 = vmatprep.subr.mxu0 0.0
    %1116 = vmatpush1.msra.mxu0 0.0
    %1117 = vmatprep.subr.mxu0 0.0
    %1118 = vmatpush1.msra.mxu0 0.0
    %1119 = vmatprep.subr.mxu0 0.0
    %1120 = vmatpush1.msra.mxu0 0.0
    %1121 = vmatprep.subr.mxu0 0.0
    %1122 = vmatpush1.msra.mxu0 0.0
    %1123 = vmatprep.subr.mxu0 0.0
    %1124 = vmatpush1.msra.mxu0 0.0
    %1125 = vmatprep.subr.mxu0 0.0
    %1126 = vmatpush1.msra.mxu0 0.0
    %1127 = vmatprep.subr.mxu0 0.0
    %1128 = vmatpush1.msra.mxu0 0.0
    %1129 = vmatprep.subr.mxu0 0.0
    %1130 = vmatpush1.msra.mxu0 0.0
    %1131 = vmatprep.subr.mxu0 0.0
    %1132 = vmatpush1.msra.mxu0 0.0
    %1133 = vmatprep.subr.mxu0 0.0
    %1134 = vmatpush1.msra.mxu0 0.0
    %1135 = vmatprep.subr.mxu0 0.0
    %1136 = vmatpush1.msra.mxu0 0.0
    %1137 = vmatprep.subr.mxu0 0.0
    %1138 = vmatpush1.msra.mxu0 0.0
    %1139 = vmatprep.subr.mxu0 0.0
    %1140 = vmatpush1.msra.mxu0 0.0
    %1141 = vmatprep.subr.mxu0 0.0
    %1142 = vmatpush1.msra.mxu0 0.0
    %1143 = vmatprep.subr.mxu0 0.0
    %1144 = vmatpush1.msra.mxu0 0.0
    %1145 = vmatprep.subr.mxu0 0.0
    %1146 = vmatpush1.msra.mxu0 0.0
    %1147 = vmatprep.subr.mxu0 0.0
    %1148 = vmatpush1.msra.mxu0 0.0
    %1149 = vmatprep.subr.mxu0 0.0
    %1150 = vmatpush1.msra.mxu0 0.0
    %1151 = vmatprep.subr.mxu0 0.0
    %1152 = vmatpush1.msra.mxu0 0.0
    %1153 = vmatprep.subr.mxu0 0.0
    %1154 = vmatpush1.msra.mxu0 0.0
    %1155 = vmatprep.subr.mxu0 0.0
    %1156 = vmatpush1.msra.mxu0 0.0
    %1157 = vmatprep.subr.mxu0 0.0
    %1158 = vmatpush1.msra.mxu0 0.0
    %1159 = vmatprep.subr.mxu0 0.0
    %1160 = vmatpush1.msra.mxu0 0.0
    %1161 = vmatprep.subr.mxu0 0.0
    %1162 = vmatpush1.msra.mxu0 0.0
    %1163 = vmatprep.subr.mxu0 0.0
    %1164 = vmatpush1.msra.mxu0 0.0
    %1165 = vmatprep.subr.mxu0 0.0
    %1166 = vmatpush1.msra.mxu0 0.0
    %1167 = vmatprep.mubr.f32.mxu0 0.0
    %1168 = vmatmul.mubr.f32.gmra.mrb[0].mxu0 %v1098
    %v1169 = vpop.f32.mrb[0].mxu0
    %v1170 = vadd.f32 0.0, %v1169
    %v1171 = vpop.f32.mrb[0].mxu0
    %1172 = vmatprep.mubr.f32.mxu0 0.0
    %1173 = vmatmul.mubr.f32.gmra.mrb[0].mxu0 %v1101
    %v1174 = vpop.f32.mrb[0].mxu0
    %v1175 = vadd.f32 0.0, %v1174
    %v1176 = vpop.f32.mrb[0].mxu0
    %1177 = vdwg.mxu0
    %v1178 = vadd.f32 %v885, %v1170
    %v1179 = vadd.f32 %v890, %v1175
    %1180 = vrot.lane.b32.xlu0 %v311, 104
    %v1181 = vpop.permute.xlu0 %1180
    %1182 = vrot.lane.b32.xlu0 %v316, 104
    %v1183 = vpop.permute.xlu0 %1182
    %1184 = vrot.lane.b32.xlu0 %v311, 72
    %v1185 = vpop.permute.xlu0 %1184
    %1186 = vrot.lane.b32.xlu0 %v316, 72
    %v1187 = vpop.permute.xlu0 %1186
    %v1188 = vsel %vm329, %v1181, 0
    %v1190 = vsel %vm329, %v1183, 0
    %v1192 = vsel %vm329, %v1185, 0
    %v1194 = vsel %vm329, %v1187, 0
    %1196 = vmatprep.subr.mxu0 0.0
    %1197 = vmatpush1.xpose.msra.mxu0 %v1192
    %1198 = vmatprep.subr.mxu0 0.0
    %1199 = vmatpush1.xpose.msra.mxu0 %v1194
    %1200 = vmatprep.subr.mxu0 0.0
    %1201 = vmatpush1.xpose.msra.mxu0 0.0
    %1202 = vmatprep.subr.mxu0 0.0
    %1203 = vmatpush1.xpose.msra.mxu0 0.0
    %1204 = vmatprep.subr.mxu0 0.0
    %1205 = vmatpush1.xpose.msra.mxu0 0.0
    %1206 = vmatprep.subr.mxu0 0.0
    %1207 = vmatpush1.xpose.msra.mxu0 0.0
    %1208 = vmatprep.subr.mxu0 0.0
    %1209 = vmatpush1.xpose.msra.mxu0 0.0
    %1210 = vmatprep.subr.mxu0 0.0
    %1211 = vmatpush1.xpose.msra.mxu0 0.0
    %1212 = vmatprep.subr.mxu0 0.0
    %1213 = vmatpush1.xpose.msra.mxu0 0.0
    %1214 = vmatprep.subr.mxu0 0.0
    %1215 = vmatpush1.xpose.msra.mxu0 0.0
    %1216 = vmatprep.subr.mxu0 0.0
    %1217 = vmatpush1.xpose.msra.mxu0 0.0
    %1218 = vmatprep.subr.mxu0 0.0
    %1219 = vmatpush1.xpose.msra.mxu0 0.0
    %1220 = vmatprep.subr.mxu0 0.0
    %1221 = vmatpush1.xpose.msra.mxu0 0.0
    %1222 = vmatprep.subr.mxu0 0.0
    %1223 = vmatpush1.xpose.msra.mxu0 0.0
    %1224 = vmatprep.subr.mxu0 0.0
    %1225 = vmatpush1.xpose.msra.mxu0 0.0
    %1226 = vmatprep.subr.mxu0 0.0
    %1227 = vmatpush1.xpose.msra.mxu0 0.0
    %1228 = vmatprep.subr.mxu0 0.0
    %1229 = vmatpush1.xpose.msra.mxu0 0.0
    %1230 = vmatprep.subr.mxu0 0.0
    %1231 = vmatpush1.xpose.msra.mxu0 0.0
    %1232 = vmatprep.subr.mxu0 0.0
    %1233 = vmatpush1.xpose.msra.mxu0 0.0
    %1234 = vmatprep.subr.mxu0 0.0
    %1235 = vmatpush1.xpose.msra.mxu0 0.0
    %1236 = vmatprep.subr.mxu0 0.0
    %1237 = vmatpush1.xpose.msra.mxu0 0.0
    %1238 = vmatprep.subr.mxu0 0.0
    %1239 = vmatpush1.xpose.msra.mxu0 0.0
    %1240 = vmatprep.subr.mxu0 0.0
    %1241 = vmatpush1.xpose.msra.mxu0 0.0
    %1242 = vmatprep.subr.mxu0 0.0
    %1243 = vmatpush1.xpose.msra.mxu0 0.0
    %1244 = vmatprep.subr.mxu0 0.0
    %1245 = vmatpush1.xpose.msra.mxu0 0.0
    %1246 = vmatprep.subr.mxu0 0.0
    %1247 = vmatpush1.xpose.msra.mxu0 0.0
    %1248 = vmatprep.subr.mxu0 0.0
    %1249 = vmatpush1.xpose.msra.mxu0 0.0
    %1250 = vmatprep.subr.mxu0 0.0
    %1251 = vmatpush1.xpose.msra.mxu0 0.0
    %1252 = vmatprep.subr.mxu0 0.0
    %1253 = vmatpush1.xpose.msra.mxu0 0.0
    %1254 = vmatprep.subr.mxu0 0.0
    %1255 = vmatpush1.xpose.msra.mxu0 0.0
    %1256 = vmatprep.subr.mxu0 0.0
    %1257 = vmatpush1.xpose.msra.mxu0 0.0
    %1258 = vmatprep.subr.mxu0 0.0
    %1259 = vmatpush1.xpose.msra.mxu0 0.0
    %1260 = vmatprep.mubr.f32.mxu0 0.0
    %1261 = vmatmul.mubr.f32.gmra.mrb[0].mxu0 %v1188
    %v1262 = vpop.f32.mrb[0].mxu0
    %v1263 = vadd.f32 0.0, %v1262
    %v1264 = vpop.f32.mrb[0].mxu0
    %1265 = vmatprep.mubr.f32.mxu0 0.0
    %1266 = vmatmul.mubr.f32.gmra.mrb[0].mxu0 %v1190
    %v1267 = vpop.f32.mrb[0].mxu0
    %v1268 = vadd.f32 0.0, %v1267
    %v1269 = vpop.f32.mrb[0].mxu0
    %1270 = vdwg.mxu0
    %v1271 = vmul.f32 %v1263, 0.35355338
    %v1272 = vmul.f32 %v1268, 0.35355338
    %v1273 = vadd.f32 %v1271, %v224
    %v1274 = vadd.f32 %v1272, %v225
    %v1275 = vsel %vm417, %v1273, -inf
    %1276 = vmax.xlane.f32.xlu0 %v1275
    %v1277 = vpop.xlane.xlu0 %1276
    %v1278 = vsel %vm417, %v1274, -inf
    %1279 = vmax.xlane.f32.xlu0 %v1278
    %v1280 = vpop.xlane.xlu0 %1279
    %v1281 = vsub.f32 %v1273, %v1277
    %v1282 = vsub.f32 %v1274, %v1280
    %v1283 = vmul.f32 %v1281, 1.442695
    %v1284 = vpow.pop %v1283
    %v1285 = vmul.f32 %v1282, 1.442695
    %v1286 = vpow.pop %v1285
    %v1287 = vsel %vm417, %v1284, 0.0
    %1288 = vadd.xlane.f32.xlu0 %v1287
    %v1289 = vpop.xlane.xlu0 %1288
    %v1290 = vsel %vm417, %v1286, 0.0
    %1291 = vadd.xlane.f32.xlu0 %v1290
    %v1292 = vpop.xlane.xlu0 %1291
    %v1293 = vrcp.pop %v1289
    %v1294 = vrcp.pop %v1292
    %v1295 = vmul.f32 %v1284, %v1293
    %v1296 = vmul.f32 %v1286, %v1294
    %1297 = vrot.lane.b32.xlu0 %v311, 40
    %v1298 = vpop.permute.xlu0 %1297
    %1299 = vrot.lane.b32.xlu0 %v316, 40
    %v1300 = vpop.permute.xlu0 %1299
    %v1304 = vsel %vm417, %v1295, 0
    %v1307 = vsel %vm417, %v1296, 0
    %1309 = vmatprep.subr.mxu0 0.0
    %1310 = vmatpush1.msra.mxu0 %v1298
    %1311 = vmatprep.subr.mxu0 0.0
    %1312 = vmatpush1.msra.mxu0 %v1300
    %1313 = vmatprep.subr.mxu0 0.0
    %1314 = vmatpush1.msra.mxu0 0.0
    %1315 = vmatprep.subr.mxu0 0.0
    %1316 = vmatpush1.msra.mxu0 0.0
    %1317 = vmatprep.subr.mxu0 0.0
    %1318 = vmatpush1.msra.mxu0 0.0
    %1319 = vmatprep.subr.mxu0 0.0
    %1320 = vmatpush1.msra.mxu0 0.0
    %1321 = vmatprep.subr.mxu0 0.0
    %1322 = vmatpush1.msra.mxu0 0.0
    %1323 = vmatprep.subr.mxu0 0.0
    %1324 = vmatpush1.msra.mxu0 0.0
    %1325 = vmatprep.subr.mxu0 0.0
    %1326 = vmatpush1.msra.mxu0 0.0
    %1327 = vmatprep.subr.mxu0 0.0
    %1328 = vmatpush1.msra.mxu0 0.0
    %1329 = vmatprep.subr.mxu0 0.0
    %1330 = vmatpush1.msra.mxu0 0.0
    %1331 = vmatprep.subr.mxu0 0.0
    %1332 = vmatpush1.msra.mxu0 0.0
    %1333 = vmatprep.subr.mxu0 0.0
    %1334 = vmatpush1.msra.mxu0 0.0
    %1335 = vmatprep.subr.mxu0 0.0
    %1336 = vmatpush1.msra.mxu0 0.0
    %1337 = vmatprep.subr.mxu0 0.0
    %1338 = vmatpush1.msra.mxu0 0.0
    %1339 = vmatprep.subr.mxu0 0.0
    %1340 = vmatpush1.msra.mxu0 0.0
    %1341 = vmatprep.subr.mxu0 0.0
    %1342 = vmatpush1.msra.mxu0 0.0
    %1343 = vmatprep.subr.mxu0 0.0
    %1344 = vmatpush1.msra.mxu0 0.0
    %1345 = vmatprep.subr.mxu0 0.0
    %1346 = vmatpush1.msra.mxu0 0.0
    %1347 = vmatprep.subr.mxu0 0.0
    %1348 = vmatpush1.msra.mxu0 0.0
    %1349 = vmatprep.subr.mxu0 0.0
    %1350 = vmatpush1.msra.mxu0 0.0
    %1351 = vmatprep.subr.mxu0 0.0
    %1352 = vmatpush1.msra.mxu0 0.0
    %1353 = vmatprep.subr.mxu0 0.0
    %1354 = vmatpush1.msra.mxu0 0.0
    %1355 = vmatprep.subr.mxu0 0.0
    %1356 = vmatpush1.msra.mxu0 0.0
    %1357 = vmatprep.subr.mxu0 0.0
    %1358 = vmatpush1.msra.mxu0 0.0
    %1359 = vmatprep.subr.mxu0 0.0
    %1360 = vmatpush1.msra.mxu0 0.0
    %1361 = vmatprep.subr.mxu0 0.0
    %1362 = vmatpush1.msra.mxu0 0.0
    %1363 = vmatprep.subr.mxu0 0.0
    %1364 = vmatpush1.msra.mxu0 0.0
    %1365 = vmatprep.subr.mxu0 0.0
    %1366 = vmatpush1.msra.mxu0 0.0
    %1367 = vmatprep.subr.mxu0 0.0
    %1368 = vmatpush1.msra.mxu0 0.0
    %1369 = vmatprep.subr.mxu0 0.0
    %1370 = vmatpush1.msra.mxu0 0.0
    %1371 = vmatprep.subr.mxu0 0.0
    %1372 = vmatpush1.msra.mxu0 0.0
    %1373 = vmatprep.mubr.f32.mxu0 0.0
    %1374 = vmatmul.mubr.f32.gmra.mrb[0].mxu0 %v1304
    %v1375 = vpop.f32.mrb[0].mxu0
    %v1376 = vadd.f32 0.0, %v1375
    %v1377 = vpop.f32.mrb[0].mxu0
    %1378 = vmatprep.mubr.f32.mxu0 0.0
    %1379 = vmatmul.mubr.f32.gmra.mrb[0].mxu0 %v1307
    %v1380 = vpop.f32.mrb[0].mxu0
    %v1381 = vadd.f32 0.0, %v1380
    %v1382 = vpop.f32.mrb[0].mxu0
    %1383 = vdwg.mxu0
    %v1385 = vsel %vm329, %v1376, 0
    %v1388 = vsel %vm329, %v1381, 0
    %1390 = vmatprep.subr.mxu0 0.0
    %1391 = vmatpush1.msra.mxu0 %v322
    %1392 = vmatprep.subr.mxu0 0.0
    %1393 = vmatpush1.msra.mxu0 0.0
    %1394 = vmatprep.subr.mxu0 0.0
    %1395 = vmatpush1.msra.mxu0 0.0
    %1396 = vmatprep.subr.mxu0 0.0
    %1397 = vmatpush1.msra.mxu0 0.0
    %1398 = vmatprep.subr.mxu0 0.0
    %1399 = vmatpush1.msra.mxu0 0.0
    %1400 = vmatprep.subr.mxu0 0.0
    %1401 = vmatpush1.msra.mxu0 0.0
    %1402 = vmatprep.subr.mxu0 0.0
    %1403 = vmatpush1.msra.mxu0 0.0
    %1404 = vmatprep.subr.mxu0 0.0
    %1405 = vmatpush1.msra.mxu0 0.0
    %1406 = vmatprep.subr.mxu0 0.0
    %1407 = vmatpush1.msra.mxu0 0.0
    %1408 = vmatprep.subr.mxu0 0.0
    %1409 = vmatpush1.msra.mxu0 0.0
    %1410 = vmatprep.subr.mxu0 0.0
    %1411 = vmatpush1.msra.mxu0 0.0
    %1412 = vmatprep.subr.mxu0 0.0
    %1413 = vmatpush1.msra.mxu0 0.0
    %1414 = vmatprep.subr.mxu0 0.0
    %1415 = vmatpush1.msra.mxu0 0.0
    %1416 = vmatprep.subr.mxu0 0.0
    %1417 = vmatpush1.msra.mxu0 0.0
    %1418 = vmatprep.subr.mxu0 0.0
    %1419 = vmatpush1.msra.mxu0 0.0
    %1420 = vmatprep.subr.mxu0 0.0
    %1421 = vmatpush1.msra.mxu0 0.0
    %1422 = vmatprep.subr.mxu0 0.0
    %1423 = vmatpush1.msra.mxu0 0.0
    %1424 = vmatprep.subr.mxu0 0.0
    %1425 = vmatpush1.msra.mxu0 0.0
    %1426 = vmatprep.subr.mxu0 0.0
    %1427 = vmatpush1.msra.mxu0 0.0
    %1428 = vmatprep.subr.mxu0 0.0
    %1429 = vmatpush1.msra.mxu0 0.0
    %1430 = vmatprep.subr.mxu0 0.0
    %1431 = vmatpush1.msra.mxu0 0.0
    %1432 = vmatprep.subr.mxu0 0.0
    %1433 = vmatpush1.msra.mxu0 0.0
    %1434 = vmatprep.subr.mxu0 0.0
    %1435 = vmatpush1.msra.mxu0 0.0
    %1436 = vmatprep.subr.mxu0 0.0
    %1437 = vmatpush1.msra.mxu0 0.0
    %1438 = vmatprep.subr.mxu0 0.0
    %1439 = vmatpush1.msra.mxu0 0.0
    %1440 = vmatprep.subr.mxu0 0.0
    %1441 = vmatpush1.msra.mxu0 0.0
    %1442 = vmatprep.subr.mxu0 0.0
    %1443 = vmatpush1.msra.mxu0 0.0
    %1444 = vmatprep.subr.mxu0 0.0
    %1445 = vmatpush1.msra.mxu0 0.0
    %1446 = vmatprep.subr.mxu0 0.0
    %1447 = vmatpush1.msra.mxu0 0.0
    %1448 = vmatprep.subr.mxu0 0.0
    %1449 = vmatpush1.msra.mxu0 0.0
    %1450 = vmatprep.subr.mxu0 0.0
    %1451 = vmatpush1.msra.mxu0 0.0
    %1452 = vmatprep.subr.mxu0 0.0
    %1453 = vmatpush1.msra.mxu0 0.0
    %1454 = vmatprep.mubr.f32.mxu0 0.0
    %1455 = vmatmul.mubr.f32.gmra.mrb[0].mxu0 %v1385
    %v1456 = vpop.f32.mrb[0].mxu0
    %v1457 = vadd.f32 0.0, %v1456
    %v1458 = vpop.f32.mrb[0].mxu0
    %1459 = vmatprep.mubr.f32.mxu0 0.0
    %1460 = vmatmul.mubr.f32.gmra.mrb[0].mxu0 %v1388
    %v1461 = vpop.f32.mrb[0].mxu0
    %v1462 = vadd.f32 0.0, %v1461
    %v1463 = vpop.f32.mrb[0].mxu0
    %1464 = vdwg.mxu0
    %v1465 = vadd.f32 %v1178, %v1457
    %v1466 = vadd.f32 %v1179, %v1462
    %v1467 = vld [vmem:[%s9] sm:$0x1]
    %v1469 = vlaneseq
    %v1470 = vshrl.u32 %v1469, 7
    %v1471 = vsub.s32 0, %v1470
    %v1472 = vrot.slane %v1467, %v1471
    %v1474 = vadd.f32 %v1465, %v1472
    %v1475 = vadd.f32 %v1466, %v1472
    %v1476 = vadd.f32 %v222, %v1474
    %v1477 = vadd.f32 %v223, %v1475
    %v1478 = vld [vmem:[%s10] sm:$0x1]
    %v1479 = vld [vmem:[%s11] sm:$0x1]
    %v1480 = vsel %vm237, %v1476, 0.0
    %1481 = vadd.xlane.f32.xlu0 %v1480
    %v1482 = vpop.xlane.xlu0 %1481
    %v1483 = vsel %vm237, %v1477, 0.0
    %1484 = vadd.xlane.f32.xlu0 %v1483
    %v1485 = vpop.xlane.xlu0 %1484
    %v1486 = vrcp.pop 32.0
    %v1487 = vmul.f32 %v1482, %v1486
    %v1488 = vmul.f32 %v1485, %v1486
    %v1489 = vsub.f32 %v1476, %v1487
    %v1490 = vsub.f32 %v1477, %v1488
    %v1491 = vmul.f32 %v1489, %v1489
    %v1492 = vmul.f32 %v1490, %v1490
    %v1493 = vsel %vm237, %v1491, 0.0
    %1494 = vadd.xlane.f32.xlu0 %v1493
    %v1495 = vpop.xlane.xlu0 %1494
    %v1496 = vsel %vm237, %v1492, 0.0
    %1497 = vadd.xlane.f32.xlu0 %v1496
    %v1498 = vpop.xlane.xlu0 %1497
    %v1499 = vmul.f32 %v1495, %v1486
    %v1500 = vmul.f32 %v1498, %v1486
    %v1501 = vadd.f32 %v1499, 1e-05
    %v1502 = vadd.f32 %v1500, 1e-05
    %v1503 = vrsqrt.pop %v1501
    %v1504 = vrsqrt.pop %v1502
    %v1505 = vmul.f32 %v1489, %v1503
    %v1506 = vmul.f32 %v1490, %v1504
    %v1508 = vlaneseq
    %v1509 = vshrl.u32 %v1508, 7
    %v1510 = vsub.s32 0, %v1509
    %v1511 = vrot.slane %v1478, %v1510
    %v1513 = vmul.f32 %v1505, %v1511
    %v1514 = vmul.f32 %v1506, %v1511
    %v1516 = vlaneseq
    %v1517 = vshrl.u32 %v1516, 7
    %v1518 = vsub.s32 0, %v1517
    %v1519 = vrot.slane %v1479, %v1518
    %v1521 = vadd.f32 %v1513, %v1519
    %v1522 = vadd.f32 %v1514, %v1519
    %v1523 = vld [vmem:[%s12] sm:$0xff]
    %v1524 = vld [vmem:[%s12 + $0x8] sm:$0xff]
    %v1525 = vld [vmem:[%s12 + $0x10] sm:$0xff]
    %v1526 = vld [vmem:[%s12 + $0x18] sm:$0xff]
    %v1527 = vld [vmem:[%s13] sm:$0x1]
    %v1529 = vlaneseq
    %v1530 = vshrl.u32 %v1529, 7
    %v1531 = vsub.s32 0, %v1530
    %v1532 = vrot.slane %v1527, %v1531
    %v1535 = vsel %vm237, %v1521, 0
    %v1538 = vsel %vm237, %v1522, 0
    %1540 = vmatprep.subr.mxu0 0.0
    %1541 = vmatpush1.msra.mxu0 %v1523
    %1542 = vmatprep.subr.mxu0 0.0
    %1543 = vmatpush1.msra.mxu0 %v1524
    %1544 = vmatprep.subr.mxu0 0.0
    %1545 = vmatpush1.msra.mxu0 %v1525
    %1546 = vmatprep.subr.mxu0 0.0
    %1547 = vmatpush1.msra.mxu0 %v1526
    %1548 = vmatprep.subr.mxu0 0.0
    %1549 = vmatpush1.msra.mxu0 0.0
    %1550 = vmatprep.subr.mxu0 0.0
    %1551 = vmatpush1.msra.mxu0 0.0
    %1552 = vmatprep.subr.mxu0 0.0
    %1553 = vmatpush1.msra.mxu0 0.0
    %1554 = vmatprep.subr.mxu0 0.0
    %1555 = vmatpush1.msra.mxu0 0.0
    %1556 = vmatprep.subr.mxu0 0.0
    %1557 = vmatpush1.msra.mxu0 0.0
    %1558 = vmatprep.subr.mxu0 0.0
    %1559 = vmatpush1.msra.mxu0 0.0
    %1560 = vmatprep.subr.mxu0 0.0
    %1561 = vmatpush1.msra.mxu0 0.0
    %1562 = vmatprep.subr.mxu0 0.0
    %1563 = vmatpush1.msra.mxu0 0.0
    %1564 = vmatprep.subr.mxu0 0.0
    %1565 = vmatpush1.msra.mxu0 0.0
    %1566 = vmatprep.subr.mxu0 0.0
    %1567 = vmatpush1.msra.mxu0 0.0
    %1568 = vmatprep.subr.mxu0 0.0
    %1569 = vmatpush1.msra.mxu0 0.0
    %1570 = vmatprep.subr.mxu0 0.0
    %1571 = vmatpush1.msra.mxu0 0.0
    %1572 = vmatprep.subr.mxu0 0.0
    %1573 = vmatpush1.msra.mxu0 0.0
    %1574 = vmatprep.subr.mxu0 0.0
    %1575 = vmatpush1.msra.mxu0 0.0
    %1576 = vmatprep.subr.mxu0 0.0
    %1577 = vmatpush1.msra.mxu0 0.0
    %1578 = vmatprep.subr.mxu0 0.0
    %1579 = vmatpush1.msra.mxu0 0.0
    %1580 = vmatprep.subr.mxu0 0.0
    %1581 = vmatpush1.msra.mxu0 0.0
    %1582 = vmatprep.subr.mxu0 0.0
    %1583 = vmatpush1.msra.mxu0 0.0
    %1584 = vmatprep.subr.mxu0 0.0
    %1585 = vmatpush1.msra.mxu0 0.0
    %1586 = vmatprep.subr.mxu0 0.0
    %1587 = vmatpush1.msra.mxu0 0.0
    %1588 = vmatprep.subr.mxu0 0.0
    %1589 = vmatpush1.msra.mxu0 0.0
    %1590 = vmatprep.subr.mxu0 0.0
    %1591 = vmatpush1.msra.mxu0 0.0
    %1592 = vmatprep.subr.mxu0 0.0
    %1593 = vmatpush1.msra.mxu0 0.0
    %1594 = vmatprep.subr.mxu0 0.0
    %1595 = vmatpush1.msra.mxu0 0.0
    %1596 = vmatprep.subr.mxu0 0.0
    %1597 = vmatpush1.msra.mxu0 0.0
    %1598 = vmatprep.subr.mxu0 0.0
    %1599 = vmatpush1.msra.mxu0 0.0
    %1600 = vmatprep.subr.mxu0 0.0
    %1601 = vmatpush1.msra.mxu0 0.0
    %1602 = vmatprep.subr.mxu0 0.0
    %1603 = vmatpush1.msra.mxu0 0.0
    %1604 = vmatprep.mubr.f32.mxu0 0.0
    %1605 = vmatmul.mubr.f32.gmra.mrb[0].mxu0 %v1535
    %v1606 = vpop.f32.mrb[0].mxu0
    %v1607 = vadd.f32 %v1532, %v1606
    %v1608 = vpop.f32.mrb[0].mxu0
    %1609 = vmatprep.mubr.f32.mxu0 0.0
    %1610 = vmatmul.mubr.f32.gmra.mrb[0].mxu0 %v1538
    %v1611 = vpop.f32.mrb[0].mxu0
    %v1612 = vadd.f32 %v1532, %v1611
    %v1613 = vpop.f32.mrb[0].mxu0
    %1614 = vdwg.mxu0
    %v1615 = vmax.f32 %v1607, 0.0
    %v1616 = vmax.f32 %v1612, 0.0
    %v1617 = vld [vmem:[%s14] sm:$0xff]
    %v1618 = vld [vmem:[%s14 + $0x8] sm:$0xff]
    %v1619 = vld [vmem:[%s14 + $0x10] sm:$0xff]
    %v1620 = vld [vmem:[%s14 + $0x18] sm:$0xff]
    %v1621 = vld [vmem:[%s14 + $0x20] sm:$0xff]
    %v1622 = vld [vmem:[%s14 + $0x28] sm:$0xff]
    %v1623 = vld [vmem:[%s14 + $0x30] sm:$0xff]
    %v1624 = vld [vmem:[%s14 + $0x38] sm:$0xff]
    %v1625 = vld [vmem:[%s15] sm:$0x1]
    %v1627 = vlaneseq
    %v1628 = vshrl.u32 %v1627, 7
    %v1629 = vsub.s32 0, %v1628
    %v1630 = vrot.slane %v1625, %v1629
    %vm1632 = vcmask 523264
    %v1634 = vsel %vm1632, %v1615, 0
    %v1637 = vsel %vm1632, %v1616, 0
    %1639 = vmatprep.subr.mxu0 0.0
    %1640 = vmatpush1.msra.mxu0 %v1617
    %1641 = vmatprep.subr.mxu0 0.0
    %1642 = vmatpush1.msra.mxu0 %v1618
    %1643 = vmatprep.subr.mxu0 0.0
    %1644 = vmatpush1.msra.mxu0 %v1619
    %1645 = vmatprep.subr.mxu0 0.0
    %1646 = vmatpush1.msra.mxu0 %v1620
    %1647 = vmatprep.subr.mxu0 0.0
    %1648 = vmatpush1.msra.mxu0 %v1621
    %1649 = vmatprep.subr.mxu0 0.0
    %1650 = vmatpush1.msra.mxu0 %v1622
    %1651 = vmatprep.subr.mxu0 0.0
    %1652 = vmatpush1.msra.mxu0 %v1623
    %1653 = vmatprep.subr.mxu0 0.0
    %1654 = vmatpush1.msra.mxu0 %v1624
    %1655 = vmatprep.subr.mxu0 0.0
    %1656 = vmatpush1.msra.mxu0 0.0
    %1657 = vmatprep.subr.mxu0 0.0
    %1658 = vmatpush1.msra.mxu0 0.0
    %1659 = vmatprep.subr.mxu0 0.0
    %1660 = vmatpush1.msra.mxu0 0.0
    %1661 = vmatprep.subr.mxu0 0.0
    %1662 = vmatpush1.msra.mxu0 0.0
    %1663 = vmatprep.subr.mxu0 0.0
    %1664 = vmatpush1.msra.mxu0 0.0
    %1665 = vmatprep.subr.mxu0 0.0
    %1666 = vmatpush1.msra.mxu0 0.0
    %1667 = vmatprep.subr.mxu0 0.0
    %1668 = vmatpush1.msra.mxu0 0.0
    %1669 = vmatprep.subr.mxu0 0.0
    %1670 = vmatpush1.msra.mxu0 0.0
    %1671 = vmatprep.subr.mxu0 0.0
    %1672 = vmatpush1.msra.mxu0 0.0
    %1673 = vmatprep.subr.mxu0 0.0
    %1674 = vmatpush1.msra.mxu0 0.0
    %1675 = vmatprep.subr.mxu0 0.0
    %1676 = vmatpush1.msra.mxu0 0.0
    %1677 = vmatprep.subr.mxu0 0.0
    %1678 = vmatpush1.msra.mxu0 0.0
    %1679 = vmatprep.subr.mxu0 0.0
    %1680 = vmatpush1.msra.mxu0 0.0
    %1681 = vmatprep.subr.mxu0 0.0
    %1682 = vmatpush1.msra.mxu0 0.0
    %1683 = vmatprep.subr.mxu0 0.0
    %1684 = vmatpush1.msra.mxu0 0.0
    %1685 = vmatprep.subr.mxu0 0.0
    %1686 = vmatpush1.msra.mxu0 0.0
    %1687 = vmatprep.subr.mxu0 0.0
    %1688 = vmatpush1.msra.mxu0 0.0
    %1689 = vmatprep.subr.mxu0 0.0
    %1690 = vmatpush1.msra.mxu0 0.0
    %1691 = vmatprep.subr.mxu0 0.0
    %1692 = vmatpush1.msra.mxu0 0.0
    %1693 = vmatprep.subr.mxu0 0.0
    %1694 = vmatpush1.msra.mxu0 0.0
    %1695 = vmatprep.subr.mxu0 0.0
    %1696 = vmatpush1.msra.mxu0 0.0
    %1697 = vmatprep.subr.mxu0 0.0
    %1698 = vmatpush1.msra.mxu0 0.0
    %1699 = vmatprep.subr.mxu0 0.0
    %1700 = vmatpush1.msra.mxu0 0.0
    %1701 = vmatprep.subr.mxu0 0.0
    %1702 = vmatpush1.msra.mxu0 0.0
    %1703 = vmatprep.mubr.f32.mxu0 0.0
    %1704 = vmatmul.mubr.f32.gmra.mrb[0].mxu0 %v1634
    %v1705 = vpop.f32.mrb[0].mxu0
    %v1706 = vadd.f32 %v1630, %v1705
    %v1707 = vpop.f32.mrb[0].mxu0
    %1708 = vmatprep.mubr.f32.mxu0 0.0
    %1709 = vmatmul.mubr.f32.gmra.mrb[0].mxu0 %v1637
    %v1710 = vpop.f32.mrb[0].mxu0
    %v1711 = vadd.f32 %v1630, %v1710
    %v1712 = vpop.f32.mrb[0].mxu0
    %1713 = vdwg.mxu0
    %v1714 = vadd.f32 %v1521, %v1706
    %v1715 = vadd.f32 %v1522, %v1711
    %v1716 = vld [vmem:[%s16] sm:$0x1]
    %v1717 = vld [vmem:[%s17] sm:$0x1]
    %v1718 = vsel %vm237, %v1714, 0.0
    %1719 = vadd.xlane.f32.xlu0 %v1718
    %v1720 = vpop.xlane.xlu0 %1719
    %v1721 = vsel %vm237, %v1715, 0.0
    %1722 = vadd.xlane.f32.xlu0 %v1721
    %v1723 = vpop.xlane.xlu0 %1722
    %v1724 = vmul.f32 %v1720, %v1486
    %v1725 = vmul.f32 %v1723, %v1486
    %v1726 = vsub.f32 %v1714, %v1724
    %v1727 = vsub.f32 %v1715, %v1725
    %v1728 = vmul.f32 %v1726, %v1726
    %v1729 = vmul.f32 %v1727, %v1727
    %v1730 = vsel %vm237, %v1728, 0.0
    %1731 = vadd.xlane.f32.xlu0 %v1730
    %v1732 = vpop.xlane.xlu0 %1731
    %v1733 = vsel %vm237, %v1729, 0.0
    %1734 = vadd.xlane.f32.xlu0 %v1733
    %v1735 = vpop.xlane.xlu0 %1734
    %v1736 = vmul.f32 %v1732, %v1486
    %v1737 = vmul.f32 %v1735, %v1486
    %v1738 = vadd.f32 %v1736, 1e-05
    %v1739 = vadd.f32 %v1737, 1e-05
    %v1740 = vrsqrt.pop %v1738
    %v1741 = vrsqrt.pop %v1739
    %v1742 = vmul.f32 %v1726, %v1740
    %v1743 = vmul.f32 %v1727, %v1741
    %v1745 = vlaneseq
    %v1746 = vshrl.u32 %v1745, 7
    %v1747 = vsub.s32 0, %v1746
    %v1748 = vrot.slane %v1716, %v1747
    %v1750 = vmul.f32 %v1742, %v1748
    %v1751 = vmul.f32 %v1743, %v1748
    %v1753 = vlaneseq
    %v1754 = vshrl.u32 %v1753, 7
    %v1755 = vsub.s32 0, %v1754
    %v1756 = vrot.slane %v1717, %v1755
    %v1758 = vadd.f32 %v1750, %v1756
    %v1759 = vadd.f32 %v1751, %v1756
    %s1760 = scalar_lea.vmem %s6, 32
    %v1761 = vld [vmem:[%s1760] sm:$0xff]
    %v1762 = vld [vmem:[%s1760 + $0x8] sm:$0xff]
    %v1763 = vld [vmem:[%s1760 + $0x10] sm:$0xff]
    %v1764 = vld [vmem:[%s1760 + $0x18] sm:$0xff]
    %s1765 = scalar_lea.vmem %s7, 1
    %v1766 = vld [vmem:[%s1765] sm:$0x1]
    %v1768 = vlaneseq
    %v1769 = vshrl.u32 %v1768, 7
    %v1770 = vsub.s32 0, %v1769
    %v1771 = vrot.slane %v1766, %v1770
    %v1774 = vsel %vm237, %v1758, 0
    %v1777 = vsel %vm237, %v1759, 0
    %1779 = vmatprep.subr.mxu0 0.0
    %1780 = vmatpush1.msra.mxu0 %v1761
    %1781 = vmatprep.subr.mxu0 0.0
    %1782 = vmatpush1.msra.mxu0 %v1762
    %1783 = vmatprep.subr.mxu0 0.0
    %1784 = vmatpush1.msra.mxu0 %v1763
    %1785 = vmatprep.subr.mxu0 0.0
    %1786 = vmatpush1.msra.mxu0 %v1764
    %1787 = vmatprep.subr.mxu0 0.0
    %1788 = vmatpush1.msra.mxu0 0.0
    %1789 = vmatprep.subr.mxu0 0.0
    %1790 = vmatpush1.msra.mxu0 0.0
    %1791 = vmatprep.subr.mxu0 0.0
    %1792 = vmatpush1.msra.mxu0 0.0
    %1793 = vmatprep.subr.mxu0 0.0
    %1794 = vmatpush1.msra.mxu0 0.0
    %1795 = vmatprep.subr.mxu0 0.0
    %1796 = vmatpush1.msra.mxu0 0.0
    %1797 = vmatprep.subr.mxu0 0.0
    %1798 = vmatpush1.msra.mxu0 0.0
    %1799 = vmatprep.subr.mxu0 0.0
    %1800 = vmatpush1.msra.mxu0 0.0
    %1801 = vmatprep.subr.mxu0 0.0
    %1802 = vmatpush1.msra.mxu0 0.0
    %1803 = vmatprep.subr.mxu0 0.0
    %1804 = vmatpush1.msra.mxu0 0.0
    %1805 = vmatprep.subr.mxu0 0.0
    %1806 = vmatpush1.msra.mxu0 0.0
    %1807 = vmatprep.subr.mxu0 0.0
    %1808 = vmatpush1.msra.mxu0 0.0
    %1809 = vmatprep.subr.mxu0 0.0
    %1810 = vmatpush1.msra.mxu0 0.0
    %1811 = vmatprep.subr.mxu0 0.0
    %1812 = vmatpush1.msra.mxu0 0.0
    %1813 = vmatprep.subr.mxu0 0.0
    %1814 = vmatpush1.msra.mxu0 0.0
    %1815 = vmatprep.subr.mxu0 0.0
    %1816 = vmatpush1.msra.mxu0 0.0
    %1817 = vmatprep.subr.mxu0 0.0
    %1818 = vmatpush1.msra.mxu0 0.0
    %1819 = vmatprep.subr.mxu0 0.0
    %1820 = vmatpush1.msra.mxu0 0.0
    %1821 = vmatprep.subr.mxu0 0.0
    %1822 = vmatpush1.msra.mxu0 0.0
    %1823 = vmatprep.subr.mxu0 0.0
    %1824 = vmatpush1.msra.mxu0 0.0
    %1825 = vmatprep.subr.mxu0 0.0
    %1826 = vmatpush1.msra.mxu0 0.0
    %1827 = vmatprep.subr.mxu0 0.0
    %1828 = vmatpush1.msra.mxu0 0.0
    %1829 = vmatprep.subr.mxu0 0.0
    %1830 = vmatpush1.msra.mxu0 0.0
    %1831 = vmatprep.subr.mxu0 0.0
    %1832 = vmatpush1.msra.mxu0 0.0
    %1833 = vmatprep.subr.mxu0 0.0
    %1834 = vmatpush1.msra.mxu0 0.0
    %1835 = vmatprep.subr.mxu0 0.0
    %1836 = vmatpush1.msra.mxu0 0.0
    %1837 = vmatprep.subr.mxu0 0.0
    %1838 = vmatpush1.msra.mxu0 0.0
    %1839 = vmatprep.subr.mxu0 0.0
    %1840 = vmatpush1.msra.mxu0 0.0
    %1841 = vmatprep.subr.mxu0 0.0
    %1842 = vmatpush1.msra.mxu0 0.0
    %1843 = vmatprep.mubr.f32.mxu0 0.0
    %1844 = vmatmul.mubr.f32.gmra.mrb[0].mxu0 %v1774
    %v1845 = vpop.f32.mrb[0].mxu0
    %v1846 = vadd.f32 %v1771, %v1845
    %v1847 = vpop.f32.mrb[0].mxu0
    %1848 = vmatprep.mubr.f32.mxu0 0.0
    %1849 = vmatmul.mubr.f32.gmra.mrb[0].mxu0 %v1777
    %v1850 = vpop.f32.mrb[0].mxu0
    %v1851 = vadd.f32 %v1771, %v1850
    %v1852 = vpop.f32.mrb[0].mxu0
    %1853 = vdwg.mxu0
    %s1854 = scalar_lea.vmem %s8, 32
    %v1855 = vld [vmem:[%s1854] sm:$0xff]
    %v1856 = vld [vmem:[%s1854 + $0x8] sm:$0xff]
    %v1857 = vld [vmem:[%s1854 + $0x10] sm:$0xff]
    %v1858 = vld [vmem:[%s1854 + $0x18] sm:$0xff]
    %1861 = vrot.lane.b32.xlu0 %v1846, 96
    %v1862 = vpop.permute.xlu0 %1861
    %1863 = vrot.lane.b32.xlu0 %v1851, 96
    %v1864 = vpop.permute.xlu0 %1863
    %v1865 = vsel %vm329, %v1846, 0
    %v1867 = vsel %vm329, %v1851, 0
    %v1869 = vsel %vm329, %v1862, 0
    %v1871 = vsel %vm329, %v1864, 0
    %1873 = vmatprep.subr.mxu0 0.0
    %1874 = vmatpush1.xpose.msra.mxu0 %v1869
    %1875 = vmatprep.subr.mxu0 0.0
    %1876 = vmatpush1.xpose.msra.mxu0 %v1871
    %1877 = vmatprep.subr.mxu0 0.0
    %1878 = vmatpush1.xpose.msra.mxu0 0.0
    %1879 = vmatprep.subr.mxu0 0.0
    %1880 = vmatpush1.xpose.msra.mxu0 0.0
    %1881 = vmatprep.subr.mxu0 0.0
    %1882 = vmatpush1.xpose.msra.mxu0 0.0
    %1883 = vmatprep.subr.mxu0 0.0
    %1884 = vmatpush1.xpose.msra.mxu0 0.0
    %1885 = vmatprep.subr.mxu0 0.0
    %1886 = vmatpush1.xpose.msra.mxu0 0.0
    %1887 = vmatprep.subr.mxu0 0.0
    %1888 = vmatpush1.xpose.msra.mxu0 0.0
    %1889 = vmatprep.subr.mxu0 0.0
    %1890 = vmatpush1.xpose.msra.mxu0 0.0
    %1891 = vmatprep.subr.mxu0 0.0
    %1892 = vmatpush1.xpose.msra.mxu0 0.0
    %1893 = vmatprep.subr.mxu0 0.0
    %1894 = vmatpush1.xpose.msra.mxu0 0.0
    %1895 = vmatprep.subr.mxu0 0.0
    %1896 = vmatpush1.xpose.msra.mxu0 0.0
    %1897 = vmatprep.subr.mxu0 0.0
    %1898 = vmatpush1.xpose.msra.mxu0 0.0
    %1899 = vmatprep.subr.mxu0 0.0
    %1900 = vmatpush1.xpose.msra.mxu0 0.0
    %1901 = vmatprep.subr.mxu0 0.0
    %1902 = vmatpush1.xpose.msra.mxu0 0.0
    %1903 = vmatprep.subr.mxu0 0.0
    %1904 = vmatpush1.xpose.msra.mxu0 0.0
    %1905 = vmatprep.subr.mxu0 0.0
    %1906 = vmatpush1.xpose.msra.mxu0 0.0
    %1907 = vmatprep.subr.mxu0 0.0
    %1908 = vmatpush1.xpose.msra.mxu0 0.0
    %1909 = vmatprep.subr.mxu0 0.0
    %1910 = vmatpush1.xpose.msra.mxu0 0.0
    %1911 = vmatprep.subr.mxu0 0.0
    %1912 = vmatpush1.xpose.msra.mxu0 0.0
    %1913 = vmatprep.subr.mxu0 0.0
    %1914 = vmatpush1.xpose.msra.mxu0 0.0
    %1915 = vmatprep.subr.mxu0 0.0
    %1916 = vmatpush1.xpose.msra.mxu0 0.0
    %1917 = vmatprep.subr.mxu0 0.0
    %1918 = vmatpush1.xpose.msra.mxu0 0.0
    %1919 = vmatprep.subr.mxu0 0.0
    %1920 = vmatpush1.xpose.msra.mxu0 0.0
    %1921 = vmatprep.subr.mxu0 0.0
    %1922 = vmatpush1.xpose.msra.mxu0 0.0
    %1923 = vmatprep.subr.mxu0 0.0
    %1924 = vmatpush1.xpose.msra.mxu0 0.0
    %1925 = vmatprep.subr.mxu0 0.0
    %1926 = vmatpush1.xpose.msra.mxu0 0.0
    %1927 = vmatprep.subr.mxu0 0.0
    %1928 = vmatpush1.xpose.msra.mxu0 0.0
    %1929 = vmatprep.subr.mxu0 0.0
    %1930 = vmatpush1.xpose.msra.mxu0 0.0
    %1931 = vmatprep.subr.mxu0 0.0
    %1932 = vmatpush1.xpose.msra.mxu0 0.0
    %1933 = vmatprep.subr.mxu0 0.0
    %1934 = vmatpush1.xpose.msra.mxu0 0.0
    %1935 = vmatprep.subr.mxu0 0.0
    %1936 = vmatpush1.xpose.msra.mxu0 0.0
    %1937 = vmatprep.mubr.f32.mxu0 0.0
    %1938 = vmatmul.mubr.f32.gmra.mrb[0].mxu0 %v1865
    %v1939 = vpop.f32.mrb[0].mxu0
    %v1940 = vadd.f32 0.0, %v1939
    %v1941 = vpop.f32.mrb[0].mxu0
    %1942 = vmatprep.mubr.f32.mxu0 0.0
    %1943 = vmatmul.mubr.f32.gmra.mrb[0].mxu0 %v1867
    %v1944 = vpop.f32.mrb[0].mxu0
    %v1945 = vadd.f32 0.0, %v1944
    %v1946 = vpop.f32.mrb[0].mxu0
    %1947 = vdwg.mxu0
    %v1948 = vmul.f32 %v1940, 0.35355338
    %v1949 = vmul.f32 %v1945, 0.35355338
    %v1950 = vadd.f32 %v1948, %v224
    %v1951 = vadd.f32 %v1949, %v225
    %v1952 = vsel %vm417, %v1950, -inf
    %1953 = vmax.xlane.f32.xlu0 %v1952
    %v1954 = vpop.xlane.xlu0 %1953
    %v1955 = vsel %vm417, %v1951, -inf
    %1956 = vmax.xlane.f32.xlu0 %v1955
    %v1957 = vpop.xlane.xlu0 %1956
    %v1958 = vsub.f32 %v1950, %v1954
    %v1959 = vsub.f32 %v1951, %v1957
    %v1960 = vmul.f32 %v1958, 1.442695
    %v1961 = vpow.pop %v1960
    %v1962 = vmul.f32 %v1959, 1.442695
    %v1963 = vpow.pop %v1962
    %v1964 = vsel %vm417, %v1961, 0.0
    %1965 = vadd.xlane.f32.xlu0 %v1964
    %v1966 = vpop.xlane.xlu0 %1965
    %v1967 = vsel %vm417, %v1963, 0.0
    %1968 = vadd.xlane.f32.xlu0 %v1967
    %v1969 = vpop.xlane.xlu0 %1968
    %v1970 = vrcp.pop %v1966
    %v1971 = vrcp.pop %v1969
    %v1972 = vmul.f32 %v1961, %v1970
    %v1973 = vmul.f32 %v1963, %v1971
    %1974 = vrot.lane.b32.xlu0 %v1846, 64
    %v1975 = vpop.permute.xlu0 %1974
    %1976 = vrot.lane.b32.xlu0 %v1851, 64
    %v1977 = vpop.permute.xlu0 %1976
    %v1981 = vsel %vm417, %v1972, 0
    %v1984 = vsel %vm417, %v1973, 0
    %1986 = vmatprep.subr.mxu0 0.0
    %1987 = vmatpush1.msra.mxu0 %v1975
    %1988 = vmatprep.subr.mxu0 0.0
    %1989 = vmatpush1.msra.mxu0 %v1977
    %1990 = vmatprep.subr.mxu0 0.0
    %1991 = vmatpush1.msra.mxu0 0.0
    %1992 = vmatprep.subr.mxu0 0.0
    %1993 = vmatpush1.msra.mxu0 0.0
    %1994 = vmatprep.subr.mxu0 0.0
    %1995 = vmatpush1.msra.mxu0 0.0
    %1996 = vmatprep.subr.mxu0 0.0
    %1997 = vmatpush1.msra.mxu0 0.0
    %1998 = vmatprep.subr.mxu0 0.0
    %1999 = vmatpush1.msra.mxu0 0.0
    %2000 = vmatprep.subr.mxu0 0.0
    %2001 = vmatpush1.msra.mxu0 0.0
    %2002 = vmatprep.subr.mxu0 0.0
    %2003 = vmatpush1.msra.mxu0 0.0
    %2004 = vmatprep.subr.mxu0 0.0
    %2005 = vmatpush1.msra.mxu0 0.0
    %2006 = vmatprep.subr.mxu0 0.0
    %2007 = vmatpush1.msra.mxu0 0.0
    %2008 = vmatprep.subr.mxu0 0.0
    %2009 = vmatpush1.msra.mxu0 0.0
    %2010 = vmatprep.subr.mxu0 0.0
    %2011 = vmatpush1.msra.mxu0 0.0
    %2012 = vmatprep.subr.mxu0 0.0
    %2013 = vmatpush1.msra.mxu0 0.0
    %2014 = vmatprep.subr.mxu0 0.0
    %2015 = vmatpush1.msra.mxu0 0.0
    %2016 = vmatprep.subr.mxu0 0.0
    %2017 = vmatpush1.msra.mxu0 0.0
    %2018 = vmatprep.subr.mxu0 0.0
    %2019 = vmatpush1.msra.mxu0 0.0
    %2020 = vmatprep.subr.mxu0 0.0
    %2021 = vmatpush1.msra.mxu0 0.0
    %2022 = vmatprep.subr.mxu0 0.0
    %2023 = vmatpush1.msra.mxu0 0.0
    %2024 = vmatprep.subr.mxu0 0.0
    %2025 = vmatpush1.msra.mxu0 0.0
    %2026 = vmatprep.subr.mxu0 0.0
    %2027 = vmatpush1.msra.mxu0 0.0
    %2028 = vmatprep.subr.mxu0 0.0
    %2029 = vmatpush1.msra.mxu0 0.0
    %2030 = vmatprep.subr.mxu0 0.0
    %2031 = vmatpush1.msra.mxu0 0.0
    %2032 = vmatprep.subr.mxu0 0.0
    %2033 = vmatpush1.msra.mxu0 0.0
    %2034 = vmatprep.subr.mxu0 0.0
    %2035 = vmatpush1.msra.mxu0 0.0
    %2036 = vmatprep.subr.mxu0 0.0
    %2037 = vmatpush1.msra.mxu0 0.0
    %2038 = vmatprep.subr.mxu0 0.0
    %2039 = vmatpush1.msra.mxu0 0.0
    %2040 = vmatprep.subr.mxu0 0.0
    %2041 = vmatpush1.msra.mxu0 0.0
    %2042 = vmatprep.subr.mxu0 0.0
    %2043 = vmatpush1.msra.mxu0 0.0
    %2044 = vmatprep.subr.mxu0 0.0
    %2045 = vmatpush1.msra.mxu0 0.0
    %2046 = vmatprep.subr.mxu0 0.0
    %2047 = vmatpush1.msra.mxu0 0.0
    %2048 = vmatprep.subr.mxu0 0.0
    %2049 = vmatpush1.msra.mxu0 0.0
    %2050 = vmatprep.mubr.f32.mxu0 0.0
    %2051 = vmatmul.mubr.f32.gmra.mrb[0].mxu0 %v1981
    %v2052 = vpop.f32.mrb[0].mxu0
    %v2053 = vadd.f32 0.0, %v2052
    %v2054 = vpop.f32.mrb[0].mxu0
    %2055 = vmatprep.mubr.f32.mxu0 0.0
    %2056 = vmatmul.mubr.f32.gmra.mrb[0].mxu0 %v1984
    %v2057 = vpop.f32.mrb[0].mxu0
    %v2058 = vadd.f32 0.0, %v2057
    %v2059 = vpop.f32.mrb[0].mxu0
    %2060 = vdwg.mxu0
    %2061 = vrot.lane.b32.xlu0 %v1846, 120
    %v2062 = vpop.permute.xlu0 %2061
    %2063 = vrot.lane.b32.xlu0 %v1851, 120
    %v2064 = vpop.permute.xlu0 %2063
    %2065 = vrot.lane.b32.xlu0 %v1846, 88
    %v2066 = vpop.permute.xlu0 %2065
    %2067 = vrot.lane.b32.xlu0 %v1851, 88
    %v2068 = vpop.permute.xlu0 %2067
    %v2069 = vsel %vm329, %v2062, 0
    %v2071 = vsel %vm329, %v2064, 0
    %v2073 = vsel %vm329, %v2066, 0
    %v2075 = vsel %vm329, %v2068, 0
    %2077 = vmatprep.subr.mxu0 0.0
    %2078 = vmatpush1.xpose.msra.mxu0 %v2073
    %2079 = vmatprep.subr.mxu0 0.0
    %2080 = vmatpush1.xpose.msra.mxu0 %v2075
    %2081 = vmatprep.subr.mxu0 0.0
    %2082 = vmatpush1.xpose.msra.mxu0 0.0
    %2083 = vmatprep.subr.mxu0 0.0
    %2084 = vmatpush1.xpose.msra.mxu0 0.0
    %2085 = vmatprep.subr.mxu0 0.0
    %2086 = vmatpush1.xpose.msra.mxu0 0.0
    %2087 = vmatprep.subr.mxu0 0.0
    %2088 = vmatpush1.xpose.msra.mxu0 0.0
    %2089 = vmatprep.subr.mxu0 0.0
    %2090 = vmatpush1.xpose.msra.mxu0 0.0
    %2091 = vmatprep.subr.mxu0 0.0
    %2092 = vmatpush1.xpose.msra.mxu0 0.0
    %2093 = vmatprep.subr.mxu0 0.0
    %2094 = vmatpush1.xpose.msra.mxu0 0.0
    %2095 = vmatprep.subr.mxu0 0.0
    %2096 = vmatpush1.xpose.msra.mxu0 0.0
    %2097 = vmatprep.subr.mxu0 0.0
    %2098 = vmatpush1.xpose.msra.mxu0 0.0
    %2099 = vmatprep.subr.mxu0 0.0
    %2100 = vmatpush1.xpose.msra.mxu0 0.0
    %2101 = vmatprep.subr.mxu0 0.0
    %2102 = vmatpush1.xpose.msra.mxu0 0.0
    %2103 = vmatprep.subr.mxu0 0.0
    %2104 = vmatpush1.xpose.msra.mxu0 0.0
    %2105 = vmatprep.subr.mxu0 0.0
    %2106 = vmatpush1.xpose.msra.mxu0 0.0
    %2107 = vmatprep.subr.mxu0 0.0
    %2108 = vmatpush1.xpose.msra.mxu0 0.0
    %2109 = vmatprep.subr.mxu0 0.0
    %2110 = vmatpush1.xpose.msra.mxu0 0.0
    %2111 = vmatprep.subr.mxu0 0.0
    %2112 = vmatpush1.xpose.msra.mxu0 0.0
    %2113 = vmatprep.subr.mxu0 0.0
    %2114 = vmatpush1.xpose.msra.mxu0 0.0
    %2115 = vmatprep.subr.mxu0 0.0
    %2116 = vmatpush1.xpose.msra.mxu0 0.0
    %2117 = vmatprep.subr.mxu0 0.0
    %2118 = vmatpush1.xpose.msra.mxu0 0.0
    %2119 = vmatprep.subr.mxu0 0.0
    %2120 = vmatpush1.xpose.msra.mxu0 0.0
    %2121 = vmatprep.subr.mxu0 0.0
    %2122 = vmatpush1.xpose.msra.mxu0 0.0
    %2123 = vmatprep.subr.mxu0 0.0
    %2124 = vmatpush1.xpose.msra.mxu0 0.0
    %2125 = vmatprep.subr.mxu0 0.0
    %2126 = vmatpush1.xpose.msra.mxu0 0.0
    %2127 = vmatprep.subr.mxu0 0.0
    %2128 = vmatpush1.xpose.msra.mxu0 0.0
    %2129 = vmatprep.subr.mxu0 0.0
    %2130 = vmatpush1.xpose.msra.mxu0 0.0
    %2131 = vmatprep.subr.mxu0 0.0
    %2132 = vmatpush1.xpose.msra.mxu0 0.0
    %2133 = vmatprep.subr.mxu0 0.0
    %2134 = vmatpush1.xpose.msra.mxu0 0.0
    %2135 = vmatprep.subr.mxu0 0.0
    %2136 = vmatpush1.xpose.msra.mxu0 0.0
    %2137 = vmatprep.subr.mxu0 0.0
    %2138 = vmatpush1.xpose.msra.mxu0 0.0
    %2139 = vmatprep.subr.mxu0 0.0
    %2140 = vmatpush1.xpose.msra.mxu0 0.0
    %2141 = vmatprep.mubr.f32.mxu0 0.0
    %2142 = vmatmul.mubr.f32.gmra.mrb[0].mxu0 %v2069
    %v2143 = vpop.f32.mrb[0].mxu0
    %v2144 = vadd.f32 0.0, %v2143
    %v2145 = vpop.f32.mrb[0].mxu0
    %2146 = vmatprep.mubr.f32.mxu0 0.0
    %2147 = vmatmul.mubr.f32.gmra.mrb[0].mxu0 %v2071
    %v2148 = vpop.f32.mrb[0].mxu0
    %v2149 = vadd.f32 0.0, %v2148
    %v2150 = vpop.f32.mrb[0].mxu0
    %2151 = vdwg.mxu0
    %v2152 = vmul.f32 %v2144, 0.35355338
    %v2153 = vmul.f32 %v2149, 0.35355338
    %v2154 = vadd.f32 %v2152, %v224
    %v2155 = vadd.f32 %v2153, %v225
    %v2156 = vsel %vm417, %v2154, -inf
    %2157 = vmax.xlane.f32.xlu0 %v2156
    %v2158 = vpop.xlane.xlu0 %2157
    %v2159 = vsel %vm417, %v2155, -inf
    %2160 = vmax.xlane.f32.xlu0 %v2159
    %v2161 = vpop.xlane.xlu0 %2160
    %v2162 = vsub.f32 %v2154, %v2158
    %v2163 = vsub.f32 %v2155, %v2161
    %v2164 = vmul.f32 %v2162, 1.442695
    %v2165 = vpow.pop %v2164
    %v2166 = vmul.f32 %v2163, 1.442695
    %v2167 = vpow.pop %v2166
    %v2168 = vsel %vm417, %v2165, 0.0
    %2169 = vadd.xlane.f32.xlu0 %v2168
    %v2170 = vpop.xlane.xlu0 %2169
    %v2171 = vsel %vm417, %v2167, 0.0
    %2172 = vadd.xlane.f32.xlu0 %v2171
    %v2173 = vpop.xlane.xlu0 %2172
    %v2174 = vrcp.pop %v2170
    %v2175 = vrcp.pop %v2173
    %v2176 = vmul.f32 %v2165, %v2174
    %v2177 = vmul.f32 %v2167, %v2175
    %2178 = vrot.lane.b32.xlu0 %v1846, 56
    %v2179 = vpop.permute.xlu0 %2178
    %2180 = vrot.lane.b32.xlu0 %v1851, 56
    %v2181 = vpop.permute.xlu0 %2180
    %v2185 = vsel %vm417, %v2176, 0
    %v2188 = vsel %vm417, %v2177, 0
    %2190 = vmatprep.subr.mxu0 0.0
    %2191 = vmatpush1.msra.mxu0 %v2179
    %2192 = vmatprep.subr.mxu0 0.0
    %2193 = vmatpush1.msra.mxu0 %v2181
    %2194 = vmatprep.subr.mxu0 0.0
    %2195 = vmatpush1.msra.mxu0 0.0
    %2196 = vmatprep.subr.mxu0 0.0
    %2197 = vmatpush1.msra.mxu0 0.0
    %2198 = vmatprep.subr.mxu0 0.0
    %2199 = vmatpush1.msra.mxu0 0.0
    %2200 = vmatprep.subr.mxu0 0.0
    %2201 = vmatpush1.msra.mxu0 0.0
    %2202 = vmatprep.subr.mxu0 0.0
    %2203 = vmatpush1.msra.mxu0 0.0
    %2204 = vmatprep.subr.mxu0 0.0
    %2205 = vmatpush1.msra.mxu0 0.0
    %2206 = vmatprep.subr.mxu0 0.0
    %2207 = vmatpush1.msra.mxu0 0.0
    %2208 = vmatprep.subr.mxu0 0.0
    %2209 = vmatpush1.msra.mxu0 0.0
    %2210 = vmatprep.subr.mxu0 0.0
    %2211 = vmatpush1.msra.mxu0 0.0
    %2212 = vmatprep.subr.mxu0 0.0
    %2213 = vmatpush1.msra.mxu0 0.0
    %2214 = vmatprep.subr.mxu0 0.0
    %2215 = vmatpush1.msra.mxu0 0.0
    %2216 = vmatprep.subr.mxu0 0.0
    %2217 = vmatpush1.msra.mxu0 0.0
    %2218 = vmatprep.subr.mxu0 0.0
    %2219 = vmatpush1.msra.mxu0 0.0
    %2220 = vmatprep.subr.mxu0 0.0
    %2221 = vmatpush1.msra.mxu0 0.0
    %2222 = vmatprep.subr.mxu0 0.0
    %2223 = vmatpush1.msra.mxu0 0.0
    %2224 = vmatprep.subr.mxu0 0.0
    %2225 = vmatpush1.msra.mxu0 0.0
    %2226 = vmatprep.subr.mxu0 0.0
    %2227 = vmatpush1.msra.mxu0 0.0
    %2228 = vmatprep.subr.mxu0 0.0
    %2229 = vmatpush1.msra.mxu0 0.0
    %2230 = vmatprep.subr.mxu0 0.0
    %2231 = vmatpush1.msra.mxu0 0.0
    %2232 = vmatprep.subr.mxu0 0.0
    %2233 = vmatpush1.msra.mxu0 0.0
    %2234 = vmatprep.subr.mxu0 0.0
    %2235 = vmatpush1.msra.mxu0 0.0
    %2236 = vmatprep.subr.mxu0 0.0
    %2237 = vmatpush1.msra.mxu0 0.0
    %2238 = vmatprep.subr.mxu0 0.0
    %2239 = vmatpush1.msra.mxu0 0.0
    %2240 = vmatprep.subr.mxu0 0.0
    %2241 = vmatpush1.msra.mxu0 0.0
    %2242 = vmatprep.subr.mxu0 0.0
    %2243 = vmatpush1.msra.mxu0 0.0
    %2244 = vmatprep.subr.mxu0 0.0
    %2245 = vmatpush1.msra.mxu0 0.0
    %2246 = vmatprep.subr.mxu0 0.0
    %2247 = vmatpush1.msra.mxu0 0.0
    %2248 = vmatprep.subr.mxu0 0.0
    %2249 = vmatpush1.msra.mxu0 0.0
    %2250 = vmatprep.subr.mxu0 0.0
    %2251 = vmatpush1.msra.mxu0 0.0
    %2252 = vmatprep.subr.mxu0 0.0
    %2253 = vmatpush1.msra.mxu0 0.0
    %2254 = vmatprep.mubr.f32.mxu0 0.0
    %2255 = vmatmul.mubr.f32.gmra.mrb[0].mxu0 %v2185
    %v2256 = vpop.f32.mrb[0].mxu0
    %v2257 = vadd.f32 0.0, %v2256
    %v2258 = vpop.f32.mrb[0].mxu0
    %2259 = vmatprep.mubr.f32.mxu0 0.0
    %2260 = vmatmul.mubr.f32.gmra.mrb[0].mxu0 %v2188
    %v2261 = vpop.f32.mrb[0].mxu0
    %v2262 = vadd.f32 0.0, %v2261
    %v2263 = vpop.f32.mrb[0].mxu0
    %2264 = vdwg.mxu0
    %v2266 = vsel %vm329, %v2257, 0
    %v2269 = vsel %vm329, %v2262, 0
    %2271 = vmatprep.subr.mxu0 0.0
    %2272 = vmatpush1.msra.mxu0 %v1856
    %2273 = vmatprep.subr.mxu0 0.0
    %2274 = vmatpush1.msra.mxu0 0.0
    %2275 = vmatprep.subr.mxu0 0.0
    %2276 = vmatpush1.msra.mxu0 0.0
    %2277 = vmatprep.subr.mxu0 0.0
    %2278 = vmatpush1.msra.mxu0 0.0
    %2279 = vmatprep.subr.mxu0 0.0
    %2280 = vmatpush1.msra.mxu0 0.0
    %2281 = vmatprep.subr.mxu0 0.0
    %2282 = vmatpush1.msra.mxu0 0.0
    %2283 = vmatprep.subr.mxu0 0.0
    %2284 = vmatpush1.msra.mxu0 0.0
    %2285 = vmatprep.subr.mxu0 0.0
    %2286 = vmatpush1.msra.mxu0 0.0
    %2287 = vmatprep.subr.mxu0 0.0
    %2288 = vmatpush1.msra.mxu0 0.0
    %2289 = vmatprep.subr.mxu0 0.0
    %2290 = vmatpush1.msra.mxu0 0.0
    %2291 = vmatprep.subr.mxu0 0.0
    %2292 = vmatpush1.msra.mxu0 0.0
    %2293 = vmatprep.subr.mxu0 0.0
    %2294 = vmatpush1.msra.mxu0 0.0
    %2295 = vmatprep.subr.mxu0 0.0
    %2296 = vmatpush1.msra.mxu0 0.0
    %2297 = vmatprep.subr.mxu0 0.0
    %2298 = vmatpush1.msra.mxu0 0.0
    %2299 = vmatprep.subr.mxu0 0.0
    %2300 = vmatpush1.msra.mxu0 0.0
    %2301 = vmatprep.subr.mxu0 0.0
    %2302 = vmatpush1.msra.mxu0 0.0
    %2303 = vmatprep.subr.mxu0 0.0
    %2304 = vmatpush1.msra.mxu0 0.0
    %2305 = vmatprep.subr.mxu0 0.0
    %2306 = vmatpush1.msra.mxu0 0.0
    %2307 = vmatprep.subr.mxu0 0.0
    %2308 = vmatpush1.msra.mxu0 0.0
    %2309 = vmatprep.subr.mxu0 0.0
    %2310 = vmatpush1.msra.mxu0 0.0
    %2311 = vmatprep.subr.mxu0 0.0
    %2312 = vmatpush1.msra.mxu0 0.0
    %2313 = vmatprep.subr.mxu0 0.0
    %2314 = vmatpush1.msra.mxu0 0.0
    %2315 = vmatprep.subr.mxu0 0.0
    %2316 = vmatpush1.msra.mxu0 0.0
    %2317 = vmatprep.subr.mxu0 0.0
    %2318 = vmatpush1.msra.mxu0 0.0
    %2319 = vmatprep.subr.mxu0 0.0
    %2320 = vmatpush1.msra.mxu0 0.0
    %2321 = vmatprep.subr.mxu0 0.0
    %2322 = vmatpush1.msra.mxu0 0.0
    %2323 = vmatprep.subr.mxu0 0.0
    %2324 = vmatpush1.msra.mxu0 0.0
    %2325 = vmatprep.subr.mxu0 0.0
    %2326 = vmatpush1.msra.mxu0 0.0
    %2327 = vmatprep.subr.mxu0 0.0
    %2328 = vmatpush1.msra.mxu0 0.0
    %2329 = vmatprep.subr.mxu0 0.0
    %2330 = vmatpush1.msra.mxu0 0.0
    %2331 = vmatprep.subr.mxu0 0.0
    %2332 = vmatpush1.msra.mxu0 0.0
    %2333 = vmatprep.subr.mxu0 0.0
    %2334 = vmatpush1.msra.mxu0 0.0
    %2335 = vmatprep.mubr.f32.mxu0 0.0
    %2336 = vmatmul.mubr.f32.gmra.mrb[0].mxu0 %v2266
    %v2337 = vpop.f32.mrb[0].mxu0
    %v2338 = vadd.f32 0.0, %v2337
    %v2339 = vpop.f32.mrb[0].mxu0
    %2340 = vmatprep.mubr.f32.mxu0 0.0
    %2341 = vmatmul.mubr.f32.gmra.mrb[0].mxu0 %v2269
    %v2342 = vpop.f32.mrb[0].mxu0
    %v2343 = vadd.f32 0.0, %v2342
    %v2344 = vpop.f32.mrb[0].mxu0
    %2345 = vdwg.mxu0
    %v2347 = vsel %vm329, %v2053, 0
    %v2350 = vsel %vm329, %v2058, 0
    %2352 = vmatprep.subr.mxu0 0.0
    %2353 = vmatpush1.msra.mxu0 %v1855
    %2354 = vmatprep.subr.mxu0 0.0
    %2355 = vmatpush1.msra.mxu0 0.0
    %2356 = vmatprep.subr.mxu0 0.0
    %2357 = vmatpush1.msra.mxu0 0.0
    %2358 = vmatprep.subr.mxu0 0.0
    %2359 = vmatpush1.msra.mxu0 0.0
    %2360 = vmatprep.subr.mxu0 0.0
    %2361 = vmatpush1.msra.mxu0 0.0
    %2362 = vmatprep.subr.mxu0 0.0
    %2363 = vmatpush1.msra.mxu0 0.0
    %2364 = vmatprep.subr.mxu0 0.0
    %2365 = vmatpush1.msra.mxu0 0.0
    %2366 = vmatprep.subr.mxu0 0.0
    %2367 = vmatpush1.msra.mxu0 0.0
    %2368 = vmatprep.subr.mxu0 0.0
    %2369 = vmatpush1.msra.mxu0 0.0
    %2370 = vmatprep.subr.mxu0 0.0
    %2371 = vmatpush1.msra.mxu0 0.0
    %2372 = vmatprep.subr.mxu0 0.0
    %2373 = vmatpush1.msra.mxu0 0.0
    %2374 = vmatprep.subr.mxu0 0.0
    %2375 = vmatpush1.msra.mxu0 0.0
    %2376 = vmatprep.subr.mxu0 0.0
    %2377 = vmatpush1.msra.mxu0 0.0
    %2378 = vmatprep.subr.mxu0 0.0
    %2379 = vmatpush1.msra.mxu0 0.0
    %2380 = vmatprep.subr.mxu0 0.0
    %2381 = vmatpush1.msra.mxu0 0.0
    %2382 = vmatprep.subr.mxu0 0.0
    %2383 = vmatpush1.msra.mxu0 0.0
    %2384 = vmatprep.subr.mxu0 0.0
    %2385 = vmatpush1.msra.mxu0 0.0
    %2386 = vmatprep.subr.mxu0 0.0
    %2387 = vmatpush1.msra.mxu0 0.0
    %2388 = vmatprep.subr.mxu0 0.0
    %2389 = vmatpush1.msra.mxu0 0.0
    %2390 = vmatprep.subr.mxu0 0.0
    %2391 = vmatpush1.msra.mxu0 0.0
    %2392 = vmatprep.subr.mxu0 0.0
    %2393 = vmatpush1.msra.mxu0 0.0
    %2394 = vmatprep.subr.mxu0 0.0
    %2395 = vmatpush1.msra.mxu0 0.0
    %2396 = vmatprep.subr.mxu0 0.0
    %2397 = vmatpush1.msra.mxu0 0.0
    %2398 = vmatprep.subr.mxu0 0.0
    %2399 = vmatpush1.msra.mxu0 0.0
    %2400 = vmatprep.subr.mxu0 0.0
    %2401 = vmatpush1.msra.mxu0 0.0
    %2402 = vmatprep.subr.mxu0 0.0
    %2403 = vmatpush1.msra.mxu0 0.0
    %2404 = vmatprep.subr.mxu0 0.0
    %2405 = vmatpush1.msra.mxu0 0.0
    %2406 = vmatprep.subr.mxu0 0.0
    %2407 = vmatpush1.msra.mxu0 0.0
    %2408 = vmatprep.subr.mxu0 0.0
    %2409 = vmatpush1.msra.mxu0 0.0
    %2410 = vmatprep.subr.mxu0 0.0
    %2411 = vmatpush1.msra.mxu0 0.0
    %2412 = vmatprep.subr.mxu0 0.0
    %2413 = vmatpush1.msra.mxu0 0.0
    %2414 = vmatprep.subr.mxu0 0.0
    %2415 = vmatpush1.msra.mxu0 0.0
    %2416 = vmatprep.mubr.f32.mxu0 0.0
    %2417 = vmatmul.mubr.f32.gmra.mrb[0].mxu0 %v2347
    %v2418 = vpop.f32.mrb[0].mxu0
    %v2419 = vadd.f32 %v2338, %v2418
    %v2420 = vpop.f32.mrb[0].mxu0
    %2421 = vmatprep.mubr.f32.mxu0 0.0
    %2422 = vmatmul.mubr.f32.gmra.mrb[0].mxu0 %v2350
    %v2423 = vpop.f32.mrb[0].mxu0
    %v2424 = vadd.f32 %v2343, %v2423
    %v2425 = vpop.f32.mrb[0].mxu0
    %2426 = vdwg.mxu0
    %2427 = vrot.lane.b32.xlu0 %v1846, 112
    %v2428 = vpop.permute.xlu0 %2427
    %2429 = vrot.lane.b32.xlu0 %v1851, 112
    %v2430 = vpop.permute.xlu0 %2429
    %2431 = vrot.lane.b32.xlu0 %v1846, 80
    %v2432 = vpop.permute.xlu0 %2431
    %2433 = vrot.lane.b32.xlu0 %v1851, 80
    %v2434 = vpop.permute.xlu0 %2433
    %v2435 = vsel %vm329, %v2428, 0
    %v2437 = vsel %vm329, %v2430, 0
    %v2439 = vsel %vm329, %v2432, 0
    %v2441 = vsel %vm329, %v2434, 0
    %2443 = vmatprep.subr.mxu0 0.0
    %2444 = vmatpush1.xpose.msra.mxu0 %v2439
    %2445 = vmatprep.subr.mxu0 0.0
    %2446 = vmatpush1.xpose.msra.mxu0 %v2441
    %2447 = vmatprep.subr.mxu0 0.0
    %2448 = vmatpush1.xpose.msra.mxu0 0.0
    %2449 = vmatprep.subr.mxu0 0.0
    %2450 = vmatpush1.xpose.msra.mxu0 0.0
    %2451 = vmatprep.subr.mxu0 0.0
    %2452 = vmatpush1.xpose.msra.mxu0 0.0
    %2453 = vmatprep.subr.mxu0 0.0
    %2454 = vmatpush1.xpose.msra.mxu0 0.0
    %2455 = vmatprep.subr.mxu0 0.0
    %2456 = vmatpush1.xpose.msra.mxu0 0.0
    %2457 = vmatprep.subr.mxu0 0.0
    %2458 = vmatpush1.xpose.msra.mxu0 0.0
    %2459 = vmatprep.subr.mxu0 0.0
    %2460 = vmatpush1.xpose.msra.mxu0 0.0
    %2461 = vmatprep.subr.mxu0 0.0
    %2462 = vmatpush1.xpose.msra.mxu0 0.0
    %2463 = vmatprep.subr.mxu0 0.0
    %2464 = vmatpush1.xpose.msra.mxu0 0.0
    %2465 = vmatprep.subr.mxu0 0.0
    %2466 = vmatpush1.xpose.msra.mxu0 0.0
    %2467 = vmatprep.subr.mxu0 0.0
    %2468 = vmatpush1.xpose.msra.mxu0 0.0
    %2469 = vmatprep.subr.mxu0 0.0
    %2470 = vmatpush1.xpose.msra.mxu0 0.0
    %2471 = vmatprep.subr.mxu0 0.0
    %2472 = vmatpush1.xpose.msra.mxu0 0.0
    %2473 = vmatprep.subr.mxu0 0.0
    %2474 = vmatpush1.xpose.msra.mxu0 0.0
    %2475 = vmatprep.subr.mxu0 0.0
    %2476 = vmatpush1.xpose.msra.mxu0 0.0
    %2477 = vmatprep.subr.mxu0 0.0
    %2478 = vmatpush1.xpose.msra.mxu0 0.0
    %2479 = vmatprep.subr.mxu0 0.0
    %2480 = vmatpush1.xpose.msra.mxu0 0.0
    %2481 = vmatprep.subr.mxu0 0.0
    %2482 = vmatpush1.xpose.msra.mxu0 0.0
    %2483 = vmatprep.subr.mxu0 0.0
    %2484 = vmatpush1.xpose.msra.mxu0 0.0
    %2485 = vmatprep.subr.mxu0 0.0
    %2486 = vmatpush1.xpose.msra.mxu0 0.0
    %2487 = vmatprep.subr.mxu0 0.0
    %2488 = vmatpush1.xpose.msra.mxu0 0.0
    %2489 = vmatprep.subr.mxu0 0.0
    %2490 = vmatpush1.xpose.msra.mxu0 0.0
    %2491 = vmatprep.subr.mxu0 0.0
    %2492 = vmatpush1.xpose.msra.mxu0 0.0
    %2493 = vmatprep.subr.mxu0 0.0
    %2494 = vmatpush1.xpose.msra.mxu0 0.0
    %2495 = vmatprep.subr.mxu0 0.0
    %2496 = vmatpush1.xpose.msra.mxu0 0.0
    %2497 = vmatprep.subr.mxu0 0.0
    %2498 = vmatpush1.xpose.msra.mxu0 0.0
    %2499 = vmatprep.subr.mxu0 0.0
    %2500 = vmatpush1.xpose.msra.mxu0 0.0
    %2501 = vmatprep.subr.mxu0 0.0
    %2502 = vmatpush1.xpose.msra.mxu0 0.0
    %2503 = vmatprep.subr.mxu0 0.0
    %2504 = vmatpush1.xpose.msra.mxu0 0.0
    %2505 = vmatprep.subr.mxu0 0.0
    %2506 = vmatpush1.xpose.msra.mxu0 0.0
    %2507 = vmatprep.mubr.f32.mxu0 0.0
    %2508 = vmatmul.mubr.f32.gmra.mrb[0].mxu0 %v2435
    %v2509 = vpop.f32.mrb[0].mxu0
    %v2510 = vadd.f32 0.0, %v2509
    %v2511 = vpop.f32.mrb[0].mxu0
    %2512 = vmatprep.mubr.f32.mxu0 0.0
    %2513 = vmatmul.mubr.f32.gmra.mrb[0].mxu0 %v2437
    %v2514 = vpop.f32.mrb[0].mxu0
    %v2515 = vadd.f32 0.0, %v2514
    %v2516 = vpop.f32.mrb[0].mxu0
    %2517 = vdwg.mxu0
    %v2518 = vmul.f32 %v2510, 0.35355338
    %v2519 = vmul.f32 %v2515, 0.35355338
    %v2520 = vadd.f32 %v2518, %v224
    %v2521 = vadd.f32 %v2519, %v225
    %v2522 = vsel %vm417, %v2520, -inf
    %2523 = vmax.xlane.f32.xlu0 %v2522
    %v2524 = vpop.xlane.xlu0 %2523
    %v2525 = vsel %vm417, %v2521, -inf
    %2526 = vmax.xlane.f32.xlu0 %v2525
    %v2527 = vpop.xlane.xlu0 %2526
    %v2528 = vsub.f32 %v2520, %v2524
    %v2529 = vsub.f32 %v2521, %v2527
    %v2530 = vmul.f32 %v2528, 1.442695
    %v2531 = vpow.pop %v2530
    %v2532 = vmul.f32 %v2529, 1.442695
    %v2533 = vpow.pop %v2532
    %v2534 = vsel %vm417, %v2531, 0.0
    %2535 = vadd.xlane.f32.xlu0 %v2534
    %v2536 = vpop.xlane.xlu0 %2535
    %v2537 = vsel %vm417, %v2533, 0.0
    %2538 = vadd.xlane.f32.xlu0 %v2537
    %v2539 = vpop.xlane.xlu0 %2538
    %v2540 = vrcp.pop %v2536
    %v2541 = vrcp.pop %v2539
    %v2542 = vmul.f32 %v2531, %v2540
    %v2543 = vmul.f32 %v2533, %v2541
    %2544 = vrot.lane.b32.xlu0 %v1846, 48
    %v2545 = vpop.permute.xlu0 %2544
    %2546 = vrot.lane.b32.xlu0 %v1851, 48
    %v2547 = vpop.permute.xlu0 %2546
    %v2551 = vsel %vm417, %v2542, 0
    %v2554 = vsel %vm417, %v2543, 0
    %2556 = vmatprep.subr.mxu0 0.0
    %2557 = vmatpush1.msra.mxu0 %v2545
    %2558 = vmatprep.subr.mxu0 0.0
    %2559 = vmatpush1.msra.mxu0 %v2547
    %2560 = vmatprep.subr.mxu0 0.0
    %2561 = vmatpush1.msra.mxu0 0.0
    %2562 = vmatprep.subr.mxu0 0.0
    %2563 = vmatpush1.msra.mxu0 0.0
    %2564 = vmatprep.subr.mxu0 0.0
    %2565 = vmatpush1.msra.mxu0 0.0
    %2566 = vmatprep.subr.mxu0 0.0
    %2567 = vmatpush1.msra.mxu0 0.0
    %2568 = vmatprep.subr.mxu0 0.0
    %2569 = vmatpush1.msra.mxu0 0.0
    %2570 = vmatprep.subr.mxu0 0.0
    %2571 = vmatpush1.msra.mxu0 0.0
    %2572 = vmatprep.subr.mxu0 0.0
    %2573 = vmatpush1.msra.mxu0 0.0
    %2574 = vmatprep.subr.mxu0 0.0
    %2575 = vmatpush1.msra.mxu0 0.0
    %2576 = vmatprep.subr.mxu0 0.0
    %2577 = vmatpush1.msra.mxu0 0.0
    %2578 = vmatprep.subr.mxu0 0.0
    %2579 = vmatpush1.msra.mxu0 0.0
    %2580 = vmatprep.subr.mxu0 0.0
    %2581 = vmatpush1.msra.mxu0 0.0
    %2582 = vmatprep.subr.mxu0 0.0
    %2583 = vmatpush1.msra.mxu0 0.0
    %2584 = vmatprep.subr.mxu0 0.0
    %2585 = vmatpush1.msra.mxu0 0.0
    %2586 = vmatprep.subr.mxu0 0.0
    %2587 = vmatpush1.msra.mxu0 0.0
    %2588 = vmatprep.subr.mxu0 0.0
    %2589 = vmatpush1.msra.mxu0 0.0
    %2590 = vmatprep.subr.mxu0 0.0
    %2591 = vmatpush1.msra.mxu0 0.0
    %2592 = vmatprep.subr.mxu0 0.0
    %2593 = vmatpush1.msra.mxu0 0.0
    %2594 = vmatprep.subr.mxu0 0.0
    %2595 = vmatpush1.msra.mxu0 0.0
    %2596 = vmatprep.subr.mxu0 0.0
    %2597 = vmatpush1.msra.mxu0 0.0
    %2598 = vmatprep.subr.mxu0 0.0
    %2599 = vmatpush1.msra.mxu0 0.0
    %2600 = vmatprep.subr.mxu0 0.0
    %2601 = vmatpush1.msra.mxu0 0.0
    %2602 = vmatprep.subr.mxu0 0.0
    %2603 = vmatpush1.msra.mxu0 0.0
    %2604 = vmatprep.subr.mxu0 0.0
    %2605 = vmatpush1.msra.mxu0 0.0
    %2606 = vmatprep.subr.mxu0 0.0
    %2607 = vmatpush1.msra.mxu0 0.0
    %2608 = vmatprep.subr.mxu0 0.0
    %2609 = vmatpush1.msra.mxu0 0.0
    %2610 = vmatprep.subr.mxu0 0.0
    %2611 = vmatpush1.msra.mxu0 0.0
    %2612 = vmatprep.subr.mxu0 0.0
    %2613 = vmatpush1.msra.mxu0 0.0
    %2614 = vmatprep.subr.mxu0 0.0
    %2615 = vmatpush1.msra.mxu0 0.0
    %2616 = vmatprep.subr.mxu0 0.0
    %2617 = vmatpush1.msra.mxu0 0.0
    %2618 = vmatprep.subr.mxu0 0.0
    %2619 = vmatpush1.msra.mxu0 0.0
    %2620 = vmatprep.mubr.f32.mxu0 0.0
    %2621 = vmatmul.mubr.f32.gmra.mrb[0].mxu0 %v2551
    %v2622 = vpop.f32.mrb[0].mxu0
    %v2623 = vadd.f32 0.0, %v2622
    %v2624 = vpop.f32.mrb[0].mxu0
    %2625 = vmatprep.mubr.f32.mxu0 0.0
    %2626 = vmatmul.mubr.f32.gmra.mrb[0].mxu0 %v2554
    %v2627 = vpop.f32.mrb[0].mxu0
    %v2628 = vadd.f32 0.0, %v2627
    %v2629 = vpop.f32.mrb[0].mxu0
    %2630 = vdwg.mxu0
    %v2632 = vsel %vm329, %v2623, 0
    %v2635 = vsel %vm329, %v2628, 0
    %2637 = vmatprep.subr.mxu0 0.0
    %2638 = vmatpush1.msra.mxu0 %v1857
    %2639 = vmatprep.subr.mxu0 0.0
    %2640 = vmatpush1.msra.mxu0 0.0
    %2641 = vmatprep.subr.mxu0 0.0
    %2642 = vmatpush1.msra.mxu0 0.0
    %2643 = vmatprep.subr.mxu0 0.0
    %2644 = vmatpush1.msra.mxu0 0.0
    %2645 = vmatprep.subr.mxu0 0.0
    %2646 = vmatpush1.msra.mxu0 0.0
    %2647 = vmatprep.subr.mxu0 0.0
    %2648 = vmatpush1.msra.mxu0 0.0
    %2649 = vmatprep.subr.mxu0 0.0
    %2650 = vmatpush1.msra.mxu0 0.0
    %2651 = vmatprep.subr.mxu0 0.0
    %2652 = vmatpush1.msra.mxu0 0.0
    %2653 = vmatprep.subr.mxu0 0.0
    %2654 = vmatpush1.msra.mxu0 0.0
    %2655 = vmatprep.subr.mxu0 0.0
    %2656 = vmatpush1.msra.mxu0 0.0
    %2657 = vmatprep.subr.mxu0 0.0
    %2658 = vmatpush1.msra.mxu0 0.0
    %2659 = vmatprep.subr.mxu0 0.0
    %2660 = vmatpush1.msra.mxu0 0.0
    %2661 = vmatprep.subr.mxu0 0.0
    %2662 = vmatpush1.msra.mxu0 0.0
    %2663 = vmatprep.subr.mxu0 0.0
    %2664 = vmatpush1.msra.mxu0 0.0
    %2665 = vmatprep.subr.mxu0 0.0
    %2666 = vmatpush1.msra.mxu0 0.0
    %2667 = vmatprep.subr.mxu0 0.0
    %2668 = vmatpush1.msra.mxu0 0.0
    %2669 = vmatprep.subr.mxu0 0.0
    %2670 = vmatpush1.msra.mxu0 0.0
    %2671 = vmatprep.subr.mxu0 0.0
    %2672 = vmatpush1.msra.mxu0 0.0
    %2673 = vmatprep.subr.mxu0 0.0
    %2674 = vmatpush1.msra.mxu0 0.0
    %2675 = vmatprep.subr.mxu0 0.0
    %2676 = vmatpush1.msra.mxu0 0.0
    %2677 = vmatprep.subr.mxu0 0.0
    %2678 = vmatpush1.msra.mxu0 0.0
    %2679 = vmatprep.subr.mxu0 0.0
    %2680 = vmatpush1.msra.mxu0 0.0
    %2681 = vmatprep.subr.mxu0 0.0
    %2682 = vmatpush1.msra.mxu0 0.0
    %2683 = vmatprep.subr.mxu0 0.0
    %2684 = vmatpush1.msra.mxu0 0.0
    %2685 = vmatprep.subr.mxu0 0.0
    %2686 = vmatpush1.msra.mxu0 0.0
    %2687 = vmatprep.subr.mxu0 0.0
    %2688 = vmatpush1.msra.mxu0 0.0
    %2689 = vmatprep.subr.mxu0 0.0
    %2690 = vmatpush1.msra.mxu0 0.0
    %2691 = vmatprep.subr.mxu0 0.0
    %2692 = vmatpush1.msra.mxu0 0.0
    %2693 = vmatprep.subr.mxu0 0.0
    %2694 = vmatpush1.msra.mxu0 0.0
    %2695 = vmatprep.subr.mxu0 0.0
    %2696 = vmatpush1.msra.mxu0 0.0
    %2697 = vmatprep.subr.mxu0 0.0
    %2698 = vmatpush1.msra.mxu0 0.0
    %2699 = vmatprep.subr.mxu0 0.0
    %2700 = vmatpush1.msra.mxu0 0.0
    %2701 = vmatprep.mubr.f32.mxu0 0.0
    %2702 = vmatmul.mubr.f32.gmra.mrb[0].mxu0 %v2632
    %v2703 = vpop.f32.mrb[0].mxu0
    %v2704 = vadd.f32 0.0, %v2703
    %v2705 = vpop.f32.mrb[0].mxu0
    %2706 = vmatprep.mubr.f32.mxu0 0.0
    %2707 = vmatmul.mubr.f32.gmra.mrb[0].mxu0 %v2635
    %v2708 = vpop.f32.mrb[0].mxu0
    %v2709 = vadd.f32 0.0, %v2708
    %v2710 = vpop.f32.mrb[0].mxu0
    %2711 = vdwg.mxu0
    %v2712 = vadd.f32 %v2419, %v2704
    %v2713 = vadd.f32 %v2424, %v2709
    %2714 = vrot.lane.b32.xlu0 %v1846, 104
    %v2715 = vpop.permute.xlu0 %2714
    %2716 = vrot.lane.b32.xlu0 %v1851, 104
    %v2717 = vpop.permute.xlu0 %2716
    %2718 = vrot.lane.b32.xlu0 %v1846, 72
    %v2719 = vpop.permute.xlu0 %2718
    %2720 = vrot.lane.b32.xlu0 %v1851, 72
    %v2721 = vpop.permute.xlu0 %2720
    %v2722 = vsel %vm329, %v2715, 0
    %v2724 = vsel %vm329, %v2717, 0
    %v2726 = vsel %vm329, %v2719, 0
    %v2728 = vsel %vm329, %v2721, 0
    %2730 = vmatprep.subr.mxu0 0.0
    %2731 = vmatpush1.xpose.msra.mxu0 %v2726
    %2732 = vmatprep.subr.mxu0 0.0
    %2733 = vmatpush1.xpose.msra.mxu0 %v2728
    %2734 = vmatprep.subr.mxu0 0.0
    %2735 = vmatpush1.xpose.msra.mxu0 0.0
    %2736 = vmatprep.subr.mxu0 0.0
    %2737 = vmatpush1.xpose.msra.mxu0 0.0
    %2738 = vmatprep.subr.mxu0 0.0
    %2739 = vmatpush1.xpose.msra.mxu0 0.0
    %2740 = vmatprep.subr.mxu0 0.0
    %2741 = vmatpush1.xpose.msra.mxu0 0.0
    %2742 = vmatprep.subr.mxu0 0.0
    %2743 = vmatpush1.xpose.msra.mxu0 0.0
    %2744 = vmatprep.subr.mxu0 0.0
    %2745 = vmatpush1.xpose.msra.mxu0 0.0
    %2746 = vmatprep.subr.mxu0 0.0
    %2747 = vmatpush1.xpose.msra.mxu0 0.0
    %2748 = vmatprep.subr.mxu0 0.0
    %2749 = vmatpush1.xpose.msra.mxu0 0.0
    %2750 = vmatprep.subr.mxu0 0.0
    %2751 = vmatpush1.xpose.msra.mxu0 0.0
    %2752 = vmatprep.subr.mxu0 0.0
    %2753 = vmatpush1.xpose.msra.mxu0 0.0
    %2754 = vmatprep.subr.mxu0 0.0
    %2755 = vmatpush1.xpose.msra.mxu0 0.0
    %2756 = vmatprep.subr.mxu0 0.0
    %2757 = vmatpush1.xpose.msra.mxu0 0.0
    %2758 = vmatprep.subr.mxu0 0.0
    %2759 = vmatpush1.xpose.msra.mxu0 0.0
    %2760 = vmatprep.subr.mxu0 0.0
    %2761 = vmatpush1.xpose.msra.mxu0 0.0
    %2762 = vmatprep.subr.mxu0 0.0
    %2763 = vmatpush1.xpose.msra.mxu0 0.0
    %2764 = vmatprep.subr.mxu0 0.0
    %2765 = vmatpush1.xpose.msra.mxu0 0.0
    %2766 = vmatprep.subr.mxu0 0.0
    %2767 = vmatpush1.xpose.msra.mxu0 0.0
    %2768 = vmatprep.subr.mxu0 0.0
    %2769 = vmatpush1.xpose.msra.mxu0 0.0
    %2770 = vmatprep.subr.mxu0 0.0
    %2771 = vmatpush1.xpose.msra.mxu0 0.0
    %2772 = vmatprep.subr.mxu0 0.0
    %2773 = vmatpush1.xpose.msra.mxu0 0.0
    %2774 = vmatprep.subr.mxu0 0.0
    %2775 = vmatpush1.xpose.msra.mxu0 0.0
    %2776 = vmatprep.subr.mxu0 0.0
    %2777 = vmatpush1.xpose.msra.mxu0 0.0
    %2778 = vmatprep.subr.mxu0 0.0
    %2779 = vmatpush1.xpose.msra.mxu0 0.0
    %2780 = vmatprep.subr.mxu0 0.0
    %2781 = vmatpush1.xpose.msra.mxu0 0.0
    %2782 = vmatprep.subr.mxu0 0.0
    %2783 = vmatpush1.xpose.msra.mxu0 0.0
    %2784 = vmatprep.subr.mxu0 0.0
    %2785 = vmatpush1.xpose.msra.mxu0 0.0
    %2786 = vmatprep.subr.mxu0 0.0
    %2787 = vmatpush1.xpose.msra.mxu0 0.0
    %2788 = vmatprep.subr.mxu0 0.0
    %2789 = vmatpush1.xpose.msra.mxu0 0.0
    %2790 = vmatprep.subr.mxu0 0.0
    %2791 = vmatpush1.xpose.msra.mxu0 0.0
    %2792 = vmatprep.subr.mxu0 0.0
    %2793 = vmatpush1.xpose.msra.mxu0 0.0
    %2794 = vmatprep.mubr.f32.mxu0 0.0
    %2795 = vmatmul.mubr.f32.gmra.mrb[0].mxu0 %v2722
    %v2796 = vpop.f32.mrb[0].mxu0
    %v2797 = vadd.f32 0.0, %v2796
    %v2798 = vpop.f32.mrb[0].mxu0
    %2799 = vmatprep.mubr.f32.mxu0 0.0
    %2800 = vmatmul.mubr.f32.gmra.mrb[0].mxu0 %v2724
    %v2801 = vpop.f32.mrb[0].mxu0
    %v2802 = vadd.f32 0.0, %v2801
    %v2803 = vpop.f32.mrb[0].mxu0
    %2804 = vdwg.mxu0
    %v2805 = vmul.f32 %v2797, 0.35355338
    %v2806 = vmul.f32 %v2802, 0.35355338
    %v2807 = vadd.f32 %v2805, %v224
    %v2808 = vadd.f32 %v2806, %v225
    %v2809 = vsel %vm417, %v2807, -inf
    %2810 = vmax.xlane.f32.xlu0 %v2809
    %v2811 = vpop.xlane.xlu0 %2810
    %v2812 = vsel %vm417, %v2808, -inf
    %2813 = vmax.xlane.f32.xlu0 %v2812
    %v2814 = vpop.xlane.xlu0 %2813
    %v2815 = vsub.f32 %v2807, %v2811
    %v2816 = vsub.f32 %v2808, %v2814
    %v2817 = vmul.f32 %v2815, 1.442695
    %v2818 = vpow.pop %v2817
    %v2819 = vmul.f32 %v2816, 1.442695
    %v2820 = vpow.pop %v2819
    %v2821 = vsel %vm417, %v2818, 0.0
    %2822 = vadd.xlane.f32.xlu0 %v2821
    %v2823 = vpop.xlane.xlu0 %2822
    %v2824 = vsel %vm417, %v2820, 0.0
    %2825 = vadd.xlane.f32.xlu0 %v2824
    %v2826 = vpop.xlane.xlu0 %2825
    %v2827 = vrcp.pop %v2823
    %v2828 = vrcp.pop %v2826
    %v2829 = vmul.f32 %v2818, %v2827
    %v2830 = vmul.f32 %v2820, %v2828
    %2831 = vrot.lane.b32.xlu0 %v1846, 40
    %v2832 = vpop.permute.xlu0 %2831
    %2833 = vrot.lane.b32.xlu0 %v1851, 40
    %v2834 = vpop.permute.xlu0 %2833
    %v2838 = vsel %vm417, %v2829, 0
    %v2841 = vsel %vm417, %v2830, 0
    %2843 = vmatprep.subr.mxu0 0.0
    %2844 = vmatpush1.msra.mxu0 %v2832
    %2845 = vmatprep.subr.mxu0 0.0
    %2846 = vmatpush1.msra.mxu0 %v2834
    %2847 = vmatprep.subr.mxu0 0.0
    %2848 = vmatpush1.msra.mxu0 0.0
    %2849 = vmatprep.subr.mxu0 0.0
    %2850 = vmatpush1.msra.mxu0 0.0
    %2851 = vmatprep.subr.mxu0 0.0
    %2852 = vmatpush1.msra.mxu0 0.0
    %2853 = vmatprep.subr.mxu0 0.0
    %2854 = vmatpush1.msra.mxu0 0.0
    %2855 = vmatprep.subr.mxu0 0.0
    %2856 = vmatpush1.msra.mxu0 0.0
    %2857 = vmatprep.subr.mxu0 0.0
    %2858 = vmatpush1.msra.mxu0 0.0
    %2859 = vmatprep.subr.mxu0 0.0
    %2860 = vmatpush1.msra.mxu0 0.0
    %2861 = vmatprep.subr.mxu0 0.0
    %2862 = vmatpush1.msra.mxu0 0.0
    %2863 = vmatprep.subr.mxu0 0.0
    %2864 = vmatpush1.msra.mxu0 0.0
    %2865 = vmatprep.subr.mxu0 0.0
    %2866 = vmatpush1.msra.mxu0 0.0
    %2867 = vmatprep.subr.mxu0 0.0
    %2868 = vmatpush1.msra.mxu0 0.0
    %2869 = vmatprep.subr.mxu0 0.0
    %2870 = vmatpush1.msra.mxu0 0.0
    %2871 = vmatprep.subr.mxu0 0.0
    %2872 = vmatpush1.msra.mxu0 0.0
    %2873 = vmatprep.subr.mxu0 0.0
    %2874 = vmatpush1.msra.mxu0 0.0
    %2875 = vmatprep.subr.mxu0 0.0
    %2876 = vmatpush1.msra.mxu0 0.0
    %2877 = vmatprep.subr.mxu0 0.0
    %2878 = vmatpush1.msra.mxu0 0.0
    %2879 = vmatprep.subr.mxu0 0.0
    %2880 = vmatpush1.msra.mxu0 0.0
    %2881 = vmatprep.subr.mxu0 0.0
    %2882 = vmatpush1.msra.mxu0 0.0
    %2883 = vmatprep.subr.mxu0 0.0
    %2884 = vmatpush1.msra.mxu0 0.0
    %2885 = vmatprep.subr.mxu0 0.0
    %2886 = vmatpush1.msra.mxu0 0.0
    %2887 = vmatprep.subr.mxu0 0.0
    %2888 = vmatpush1.msra.mxu0 0.0
    %2889 = vmatprep.subr.mxu0 0.0
    %2890 = vmatpush1.msra.mxu0 0.0
    %2891 = vmatprep.subr.mxu0 0.0
    %2892 = vmatpush1.msra.mxu0 0.0
    %2893 = vmatprep.subr.mxu0 0.0
    %2894 = vmatpush1.msra.mxu0 0.0
    %2895 = vmatprep.subr.mxu0 0.0
    %2896 = vmatpush1.msra.mxu0 0.0
    %2897 = vmatprep.subr.mxu0 0.0
    %2898 = vmatpush1.msra.mxu0 0.0
    %2899 = vmatprep.subr.mxu0 0.0
    %2900 = vmatpush1.msra.mxu0 0.0
    %2901 = vmatprep.subr.mxu0 0.0
    %2902 = vmatpush1.msra.mxu0 0.0
    %2903 = vmatprep.subr.mxu0 0.0
    %2904 = vmatpush1.msra.mxu0 0.0
    %2905 = vmatprep.subr.mxu0 0.0
    %2906 = vmatpush1.msra.mxu0 0.0
    %2907 = vmatprep.mubr.f32.mxu0 0.0
    %2908 = vmatmul.mubr.f32.gmra.mrb[0].mxu0 %v2838
    %v2909 = vpop.f32.mrb[0].mxu0
    %v2910 = vadd.f32 0.0, %v2909
    %v2911 = vpop.f32.mrb[0].mxu0
    %2912 = vmatprep.mubr.f32.mxu0 0.0
    %2913 = vmatmul.mubr.f32.gmra.mrb[0].mxu0 %v2841
    %v2914 = vpop.f32.mrb[0].mxu0
    %v2915 = vadd.f32 0.0, %v2914
    %v2916 = vpop.f32.mrb[0].mxu0
    %2917 = vdwg.mxu0
    %v2919 = vsel %vm329, %v2910, 0
    %v2922 = vsel %vm329, %v2915, 0
    %2924 = vmatprep.subr.mxu0 0.0
    %2925 = vmatpush1.msra.mxu0 %v1858
    %2926 = vmatprep.subr.mxu0 0.0
    %2927 = vmatpush1.msra.mxu0 0.0
    %2928 = vmatprep.subr.mxu0 0.0
    %2929 = vmatpush1.msra.mxu0 0.0
    %2930 = vmatprep.subr.mxu0 0.0
    %2931 = vmatpush1.msra.mxu0 0.0
    %2932 = vmatprep.subr.mxu0 0.0
    %2933 = vmatpush1.msra.mxu0 0.0
    %2934 = vmatprep.subr.mxu0 0.0
    %2935 = vmatpush1.msra.mxu0 0.0
    %2936 = vmatprep.subr.mxu0 0.0
    %2937 = vmatpush1.msra.mxu0 0.0
    %2938 = vmatprep.subr.mxu0 0.0
    %2939 = vmatpush1.msra.mxu0 0.0
    %2940 = vmatprep.subr.mxu0 0.0
    %2941 = vmatpush1.msra.mxu0 0.0
    %2942 = vmatprep.subr.mxu0 0.0
    %2943 = vmatpush1.msra.mxu0 0.0
    %2944 = vmatprep.subr.mxu0 0.0
    %2945 = vmatpush1.msra.mxu0 0.0
    %2946 = vmatprep.subr.mxu0 0.0
    %2947 = vmatpush1.msra.mxu0 0.0
    %2948 = vmatprep.subr.mxu0 0.0
    %2949 = vmatpush1.msra.mxu0 0.0
    %2950 = vmatprep.subr.mxu0 0.0
    %2951 = vmatpush1.msra.mxu0 0.0
    %2952 = vmatprep.subr.mxu0 0.0
    %2953 = vmatpush1.msra.mxu0 0.0
    %2954 = vmatprep.subr.mxu0 0.0
    %2955 = vmatpush1.msra.mxu0 0.0
    %2956 = vmatprep.subr.mxu0 0.0
    %2957 = vmatpush1.msra.mxu0 0.0
    %2958 = vmatprep.subr.mxu0 0.0
    %2959 = vmatpush1.msra.mxu0 0.0
    %2960 = vmatprep.subr.mxu0 0.0
    %2961 = vmatpush1.msra.mxu0 0.0
    %2962 = vmatprep.subr.mxu0 0.0
    %2963 = vmatpush1.msra.mxu0 0.0
    %2964 = vmatprep.subr.mxu0 0.0
    %2965 = vmatpush1.msra.mxu0 0.0
    %2966 = vmatprep.subr.mxu0 0.0
    %2967 = vmatpush1.msra.mxu0 0.0
    %2968 = vmatprep.subr.mxu0 0.0
    %2969 = vmatpush1.msra.mxu0 0.0
    %2970 = vmatprep.subr.mxu0 0.0
    %2971 = vmatpush1.msra.mxu0 0.0
    %2972 = vmatprep.subr.mxu0 0.0
    %2973 = vmatpush1.msra.mxu0 0.0
    %2974 = vmatprep.subr.mxu0 0.0
    %2975 = vmatpush1.msra.mxu0 0.0
    %2976 = vmatprep.subr.mxu0 0.0
    %2977 = vmatpush1.msra.mxu0 0.0
    %2978 = vmatprep.subr.mxu0 0.0
    %2979 = vmatpush1.msra.mxu0 0.0
    %2980 = vmatprep.subr.mxu0 0.0
    %2981 = vmatpush1.msra.mxu0 0.0
    %2982 = vmatprep.subr.mxu0 0.0
    %2983 = vmatpush1.msra.mxu0 0.0
    %2984 = vmatprep.subr.mxu0 0.0
    %2985 = vmatpush1.msra.mxu0 0.0
    %2986 = vmatprep.subr.mxu0 0.0
    %2987 = vmatpush1.msra.mxu0 0.0
    %2988 = vmatprep.mubr.f32.mxu0 0.0
    %2989 = vmatmul.mubr.f32.gmra.mrb[0].mxu0 %v2919
    %v2990 = vpop.f32.mrb[0].mxu0
    %v2991 = vadd.f32 0.0, %v2990
    %v2992 = vpop.f32.mrb[0].mxu0
    %2993 = vmatprep.mubr.f32.mxu0 0.0
    %2994 = vmatmul.mubr.f32.gmra.mrb[0].mxu0 %v2922
    %v2995 = vpop.f32.mrb[0].mxu0
    %v2996 = vadd.f32 0.0, %v2995
    %v2997 = vpop.f32.mrb[0].mxu0
    %2998 = vdwg.mxu0
    %v2999 = vadd.f32 %v2712, %v2991
    %v3000 = vadd.f32 %v2713, %v2996
    %s3001 = scalar_lea.vmem %s9, 1
    %v3002 = vld [vmem:[%s3001] sm:$0x1]
    %v3004 = vlaneseq
    %v3005 = vshrl.u32 %v3004, 7
    %v3006 = vsub.s32 0, %v3005
    %v3007 = vrot.slane %v3002, %v3006
    %v3009 = vadd.f32 %v2999, %v3007
    %v3010 = vadd.f32 %v3000, %v3007
    %v3011 = vadd.f32 %v1758, %v3009
    %v3012 = vadd.f32 %v1759, %v3010
    %s3013 = scalar_lea.vmem %s10, 1
    %v3014 = vld [vmem:[%s3013] sm:$0x1]
    %s3015 = scalar_lea.vmem %s11, 1
    %v3016 = vld [vmem:[%s3015] sm:$0x1]
    %v3017 = vsel %vm237, %v3011, 0.0
    %3018 = vadd.xlane.f32.xlu0 %v3017
    %v3019 = vpop.xlane.xlu0 %3018
    %v3020 = vsel %vm237, %v3012, 0.0
    %3021 = vadd.xlane.f32.xlu0 %v3020
    %v3022 = vpop.xlane.xlu0 %3021
    %v3023 = vmul.f32 %v3019, %v1486
    %v3024 = vmul.f32 %v3022, %v1486
    %v3025 = vsub.f32 %v3011, %v3023
    %v3026 = vsub.f32 %v3012, %v3024
    %v3027 = vmul.f32 %v3025, %v3025
    %v3028 = vmul.f32 %v3026, %v3026
    %v3029 = vsel %vm237, %v3027, 0.0
    %3030 = vadd.xlane.f32.xlu0 %v3029
    %v3031 = vpop.xlane.xlu0 %3030
    %v3032 = vsel %vm237, %v3028, 0.0
    %3033 = vadd.xlane.f32.xlu0 %v3032
    %v3034 = vpop.xlane.xlu0 %3033
    %v3035 = vmul.f32 %v3031, %v1486
    %v3036 = vmul.f32 %v3034, %v1486
    %v3037 = vadd.f32 %v3035, 1e-05
    %v3038 = vadd.f32 %v3036, 1e-05
    %v3039 = vrsqrt.pop %v3037
    %v3040 = vrsqrt.pop %v3038
    %v3041 = vmul.f32 %v3025, %v3039
    %v3042 = vmul.f32 %v3026, %v3040
    %v3044 = vlaneseq
    %v3045 = vshrl.u32 %v3044, 7
    %v3046 = vsub.s32 0, %v3045
    %v3047 = vrot.slane %v3014, %v3046
    %v3049 = vmul.f32 %v3041, %v3047
    %v3050 = vmul.f32 %v3042, %v3047
    %v3052 = vlaneseq
    %v3053 = vshrl.u32 %v3052, 7
    %v3054 = vsub.s32 0, %v3053
    %v3055 = vrot.slane %v3016, %v3054
    %v3057 = vadd.f32 %v3049, %v3055
    %v3058 = vadd.f32 %v3050, %v3055
    %s3059 = scalar_lea.vmem %s12, 32
    %v3060 = vld [vmem:[%s3059] sm:$0xff]
    %v3061 = vld [vmem:[%s3059 + $0x8] sm:$0xff]
    %v3062 = vld [vmem:[%s3059 + $0x10] sm:$0xff]
    %v3063 = vld [vmem:[%s3059 + $0x18] sm:$0xff]
    %s3064 = scalar_lea.vmem %s13, 1
    %v3065 = vld [vmem:[%s3064] sm:$0x1]
    %v3067 = vlaneseq
    %v3068 = vshrl.u32 %v3067, 7
    %v3069 = vsub.s32 0, %v3068
    %v3070 = vrot.slane %v3065, %v3069
    %v3073 = vsel %vm237, %v3057, 0
    %v3076 = vsel %vm237, %v3058, 0
    %3078 = vmatprep.subr.mxu0 0.0
    %3079 = vmatpush1.msra.mxu0 %v3060
    %3080 = vmatprep.subr.mxu0 0.0
    %3081 = vmatpush1.msra.mxu0 %v3061
    %3082 = vmatprep.subr.mxu0 0.0
    %3083 = vmatpush1.msra.mxu0 %v3062
    %3084 = vmatprep.subr.mxu0 0.0
    %3085 = vmatpush1.msra.mxu0 %v3063
    %3086 = vmatprep.subr.mxu0 0.0
    %3087 = vmatpush1.msra.mxu0 0.0
    %3088 = vmatprep.subr.mxu0 0.0
    %3089 = vmatpush1.msra.mxu0 0.0
    %3090 = vmatprep.subr.mxu0 0.0
    %3091 = vmatpush1.msra.mxu0 0.0
    %3092 = vmatprep.subr.mxu0 0.0
    %3093 = vmatpush1.msra.mxu0 0.0
    %3094 = vmatprep.subr.mxu0 0.0
    %3095 = vmatpush1.msra.mxu0 0.0
    %3096 = vmatprep.subr.mxu0 0.0
    %3097 = vmatpush1.msra.mxu0 0.0
    %3098 = vmatprep.subr.mxu0 0.0
    %3099 = vmatpush1.msra.mxu0 0.0
    %3100 = vmatprep.subr.mxu0 0.0
    %3101 = vmatpush1.msra.mxu0 0.0
    %3102 = vmatprep.subr.mxu0 0.0
    %3103 = vmatpush1.msra.mxu0 0.0
    %3104 = vmatprep.subr.mxu0 0.0
    %3105 = vmatpush1.msra.mxu0 0.0
    %3106 = vmatprep.subr.mxu0 0.0
    %3107 = vmatpush1.msra.mxu0 0.0
    %3108 = vmatprep.subr.mxu0 0.0
    %3109 = vmatpush1.msra.mxu0 0.0
    %3110 = vmatprep.subr.mxu0 0.0
    %3111 = vmatpush1.msra.mxu0 0.0
    %3112 = vmatprep.subr.mxu0 0.0
    %3113 = vmatpush1.msra.mxu0 0.0
    %3114 = vmatprep.subr.mxu0 0.0
    %3115 = vmatpush1.msra.mxu0 0.0
    %3116 = vmatprep.subr.mxu0 0.0
    %3117 = vmatpush1.msra.mxu0 0.0
    %3118 = vmatprep.subr.mxu0 0.0
    %3119 = vmatpush1.msra.mxu0 0.0
    %3120 = vmatprep.subr.mxu0 0.0
    %3121 = vmatpush1.msra.mxu0 0.0
    %3122 = vmatprep.subr.mxu0 0.0
    %3123 = vmatpush1.msra.mxu0 0.0
    %3124 = vmatprep.subr.mxu0 0.0
    %3125 = vmatpush1.msra.mxu0 0.0
    %3126 = vmatprep.subr.mxu0 0.0
    %3127 = vmatpush1.msra.mxu0 0.0
    %3128 = vmatprep.subr.mxu0 0.0
    %3129 = vmatpush1.msra.mxu0 0.0
    %3130 = vmatprep.subr.mxu0 0.0
    %3131 = vmatpush1.msra.mxu0 0.0
    %3132 = vmatprep.subr.mxu0 0.0
    %3133 = vmatpush1.msra.mxu0 0.0
    %3134 = vmatprep.subr.mxu0 0.0
    %3135 = vmatpush1.msra.mxu0 0.0
    %3136 = vmatprep.subr.mxu0 0.0
    %3137 = vmatpush1.msra.mxu0 0.0
    %3138 = vmatprep.subr.mxu0 0.0
    %3139 = vmatpush1.msra.mxu0 0.0
    %3140 = vmatprep.subr.mxu0 0.0
    %3141 = vmatpush1.msra.mxu0 0.0
    %3142 = vmatprep.mubr.f32.mxu0 0.0
    %3143 = vmatmul.mubr.f32.gmra.mrb[0].mxu0 %v3073
    %v3144 = vpop.f32.mrb[0].mxu0
    %v3145 = vadd.f32 %v3070, %v3144
    %v3146 = vpop.f32.mrb[0].mxu0
    %3147 = vmatprep.mubr.f32.mxu0 0.0
    %3148 = vmatmul.mubr.f32.gmra.mrb[0].mxu0 %v3076
    %v3149 = vpop.f32.mrb[0].mxu0
    %v3150 = vadd.f32 %v3070, %v3149
    %v3151 = vpop.f32.mrb[0].mxu0
    %3152 = vdwg.mxu0
    %v3153 = vmax.f32 %v3145, 0.0
    %v3154 = vmax.f32 %v3150, 0.0
    %s3155 = scalar_lea.vmem %s14, 64
    %v3156 = vld [vmem:[%s3155] sm:$0xff]
    %v3157 = vld [vmem:[%s3155 + $0x8] sm:$0xff]
    %v3158 = vld [vmem:[%s3155 + $0x10] sm:$0xff]
    %v3159 = vld [vmem:[%s3155 + $0x18] sm:$0xff]
    %v3160 = vld [vmem:[%s3155 + $0x20] sm:$0xff]
    %v3161 = vld [vmem:[%s3155 + $0x28] sm:$0xff]
    %v3162 = vld [vmem:[%s3155 + $0x30] sm:$0xff]
    %v3163 = vld [vmem:[%s3155 + $0x38] sm:$0xff]
    %s3164 = scalar_lea.vmem %s15, 1
    %v3165 = vld [vmem:[%s3164] sm:$0x1]
    %v3167 = vlaneseq
    %v3168 = vshrl.u32 %v3167, 7
    %v3169 = vsub.s32 0, %v3168
    %v3170 = vrot.slane %v3165, %v3169
    %v3173 = vsel %vm1632, %v3153, 0
    %v3176 = vsel %vm1632, %v3154, 0
    %3178 = vmatprep.subr.mxu0 0.0
    %3179 = vmatpush1.msra.mxu0 %v3156
    %3180 = vmatprep.subr.mxu0 0.0
    %3181 = vmatpush1.msra.mxu0 %v3157
    %3182 = vmatprep.subr.mxu0 0.0
    %3183 = vmatpush1.msra.mxu0 %v3158
    %3184 = vmatprep.subr.mxu0 0.0
    %3185 = vmatpush1.msra.mxu0 %v3159
    %3186 = vmatprep.subr.mxu0 0.0
    %3187 = vmatpush1.msra.mxu0 %v3160
    %3188 = vmatprep.subr.mxu0 0.0
    %3189 = vmatpush1.msra.mxu0 %v3161
    %3190 = vmatprep.subr.mxu0 0.0
    %3191 = vmatpush1.msra.mxu0 %v3162
    %3192 = vmatprep.subr.mxu0 0.0
    %3193 = vmatpush1.msra.mxu0 %v3163
    %3194 = vmatprep.subr.mxu0 0.0
    %3195 = vmatpush1.msra.mxu0 0.0
    %3196 = vmatprep.subr.mxu0 0.0
    %3197 = vmatpush1.msra.mxu0 0.0
    %3198 = vmatprep.subr.mxu0 0.0
    %3199 = vmatpush1.msra.mxu0 0.0
    %3200 = vmatprep.subr.mxu0 0.0
    %3201 = vmatpush1.msra.mxu0 0.0
    %3202 = vmatprep.subr.mxu0 0.0
    %3203 = vmatpush1.msra.mxu0 0.0
    %3204 = vmatprep.subr.mxu0 0.0
    %3205 = vmatpush1.msra.mxu0 0.0
    %3206 = vmatprep.subr.mxu0 0.0
    %3207 = vmatpush1.msra.mxu0 0.0
    %3208 = vmatprep.subr.mxu0 0.0
    %3209 = vmatpush1.msra.mxu0 0.0
    %3210 = vmatprep.subr.mxu0 0.0
    %3211 = vmatpush1.msra.mxu0 0.0
    %3212 = vmatprep.subr.mxu0 0.0
    %3213 = vmatpush1.msra.mxu0 0.0
    %3214 = vmatprep.subr.mxu0 0.0
    %3215 = vmatpush1.msra.mxu0 0.0
    %3216 = vmatprep.subr.mxu0 0.0
    %3217 = vmatpush1.msra.mxu0 0.0
    %3218 = vmatprep.subr.mxu0 0.0
    %3219 = vmatpush1.msra.mxu0 0.0
    %3220 = vmatprep.subr.mxu0 0.0
    %3221 = vmatpush1.msra.mxu0 0.0
    %3222 = vmatprep.subr.mxu0 0.0
    %3223 = vmatpush1.msra.mxu0 0.0
    %3224 = vmatprep.subr.mxu0 0.0
    %3225 = vmatpush1.msra.mxu0 0.0
    %3226 = vmatprep.subr.mxu0 0.0
    %3227 = vmatpush1.msra.mxu0 0.0
    %3228 = vmatprep.subr.mxu0 0.0
    %3229 = vmatpush1.msra.mxu0 0.0
    %3230 = vmatprep.subr.mxu0 0.0
    %3231 = vmatpush1.msra.mxu0 0.0
    %3232 = vmatprep.subr.mxu0 0.0
    %3233 = vmatpush1.msra.mxu0 0.0
    %3234 = vmatprep.subr.mxu0 0.0
    %3235 = vmatpush1.msra.mxu0 0.0
    %3236 = vmatprep.subr.mxu0 0.0
    %3237 = vmatpush1.msra.mxu0 0.0
    %3238 = vmatprep.subr.mxu0 0.0
    %3239 = vmatpush1.msra.mxu0 0.0
    %3240 = vmatprep.subr.mxu0 0.0
    %3241 = vmatpush1.msra.mxu0 0.0
    %3242 = vmatprep.mubr.f32.mxu0 0.0
    %3243 = vmatmul.mubr.f32.gmra.mrb[0].mxu0 %v3173
    %v3244 = vpop.f32.mrb[0].mxu0
    %v3245 = vadd.f32 %v3170, %v3244
    %v3246 = vpop.f32.mrb[0].mxu0
    %3247 = vmatprep.mubr.f32.mxu0 0.0
    %3248 = vmatmul.mubr.f32.gmra.mrb[0].mxu0 %v3176
    %v3249 = vpop.f32.mrb[0].mxu0
    %v3250 = vadd.f32 %v3170, %v3249
    %v3251 = vpop.f32.mrb[0].mxu0
    %3252 = vdwg.mxu0
    %v3253 = vadd.f32 %v3057, %v3245
    %v3254 = vadd.f32 %v3058, %v3250
    %s3255 = scalar_lea.vmem %s16, 1
    %v3256 = vld [vmem:[%s3255] sm:$0x1]
    %s3257 = scalar_lea.vmem %s17, 1
    %v3258 = vld [vmem:[%s3257] sm:$0x1]
    %v3259 = vsel %vm237, %v3253, 0.0
    %3260 = vadd.xlane.f32.xlu0 %v3259
    %v3261 = vpop.xlane.xlu0 %3260
    %v3262 = vsel %vm237, %v3254, 0.0
    %3263 = vadd.xlane.f32.xlu0 %v3262
    %v3264 = vpop.xlane.xlu0 %3263
    %v3265 = vmul.f32 %v3261, %v1486
    %v3266 = vmul.f32 %v3264, %v1486
    %v3267 = vsub.f32 %v3253, %v3265
    %v3268 = vsub.f32 %v3254, %v3266
    %v3269 = vmul.f32 %v3267, %v3267
    %v3270 = vmul.f32 %v3268, %v3268
    %v3271 = vsel %vm237, %v3269, 0.0
    %3272 = vadd.xlane.f32.xlu0 %v3271
    %v3273 = vpop.xlane.xlu0 %3272
    %v3274 = vsel %vm237, %v3270, 0.0
    %3275 = vadd.xlane.f32.xlu0 %v3274
    %v3276 = vpop.xlane.xlu0 %3275
    %v3277 = vmul.f32 %v3273, %v1486
    %v3278 = vmul.f32 %v3276, %v1486
    %v3279 = vadd.f32 %v3277, 1e-05
    %v3280 = vadd.f32 %v3278, 1e-05
    %v3281 = vrsqrt.pop %v3279
    %v3282 = vrsqrt.pop %v3280
    %v3283 = vmul.f32 %v3267, %v3281
    %v3284 = vmul.f32 %v3268, %v3282
    %v3286 = vlaneseq
    %v3287 = vshrl.u32 %v3286, 7
    %v3288 = vsub.s32 0, %v3287
    %v3289 = vrot.slane %v3256, %v3288
    %v3291 = vmul.f32 %v3283, %v3289
    %v3292 = vmul.f32 %v3284, %v3289
    %v3294 = vlaneseq
    %v3295 = vshrl.u32 %v3294, 7
    %v3296 = vsub.s32 0, %v3295
    %v3297 = vrot.slane %v3258, %v3296
    %v3299 = vadd.f32 %v3291, %v3297
    %v3300 = vadd.f32 %v3292, %v3297
    %v3301 = vld [vmem:[%s18] sm:$0xff]
    %v3302 = vld [vmem:[%s18 + $0x8] sm:$0xff]
    %v3303 = vld [vmem:[%s18 + $0x10] sm:$0xff]
    %v3304 = vld [vmem:[%s18 + $0x18] sm:$0xff]
    %v3305 = vld [vmem:[%s19] sm:$0x1]
    %v3307 = vlaneseq
    %v3308 = vshrl.u32 %v3307, 7
    %v3309 = vsub.s32 0, %v3308
    %v3310 = vrot.slane %v3305, %v3309
    %v3313 = vsel %vm237, %v3299, 0
    %v3316 = vsel %vm237, %v3300, 0
    %3318 = vmatprep.subr.mxu0 0.0
    %3319 = vmatpush1.msra.mxu0 %v3301
    %3320 = vmatprep.subr.mxu0 0.0
    %3321 = vmatpush1.msra.mxu0 %v3302
    %3322 = vmatprep.subr.mxu0 0.0
    %3323 = vmatpush1.msra.mxu0 %v3303
    %3324 = vmatprep.subr.mxu0 0.0
    %3325 = vmatpush1.msra.mxu0 %v3304
    %3326 = vmatprep.subr.mxu0 0.0
    %3327 = vmatpush1.msra.mxu0 0.0
    %3328 = vmatprep.subr.mxu0 0.0
    %3329 = vmatpush1.msra.mxu0 0.0
    %3330 = vmatprep.subr.mxu0 0.0
    %3331 = vmatpush1.msra.mxu0 0.0
    %3332 = vmatprep.subr.mxu0 0.0
    %3333 = vmatpush1.msra.mxu0 0.0
    %3334 = vmatprep.subr.mxu0 0.0
    %3335 = vmatpush1.msra.mxu0 0.0
    %3336 = vmatprep.subr.mxu0 0.0
    %3337 = vmatpush1.msra.mxu0 0.0
    %3338 = vmatprep.subr.mxu0 0.0
    %3339 = vmatpush1.msra.mxu0 0.0
    %3340 = vmatprep.subr.mxu0 0.0
    %3341 = vmatpush1.msra.mxu0 0.0
    %3342 = vmatprep.subr.mxu0 0.0
    %3343 = vmatpush1.msra.mxu0 0.0
    %3344 = vmatprep.subr.mxu0 0.0
    %3345 = vmatpush1.msra.mxu0 0.0
    %3346 = vmatprep.subr.mxu0 0.0
    %3347 = vmatpush1.msra.mxu0 0.0
    %3348 = vmatprep.subr.mxu0 0.0
    %3349 = vmatpush1.msra.mxu0 0.0
    %3350 = vmatprep.subr.mxu0 0.0
    %3351 = vmatpush1.msra.mxu0 0.0
    %3352 = vmatprep.subr.mxu0 0.0
    %3353 = vmatpush1.msra.mxu0 0.0
    %3354 = vmatprep.subr.mxu0 0.0
    %3355 = vmatpush1.msra.mxu0 0.0
    %3356 = vmatprep.subr.mxu0 0.0
    %3357 = vmatpush1.msra.mxu0 0.0
    %3358 = vmatprep.subr.mxu0 0.0
    %3359 = vmatpush1.msra.mxu0 0.0
    %3360 = vmatprep.subr.mxu0 0.0
    %3361 = vmatpush1.msra.mxu0 0.0
    %3362 = vmatprep.subr.mxu0 0.0
    %3363 = vmatpush1.msra.mxu0 0.0
    %3364 = vmatprep.subr.mxu0 0.0
    %3365 = vmatpush1.msra.mxu0 0.0
    %3366 = vmatprep.subr.mxu0 0.0
    %3367 = vmatpush1.msra.mxu0 0.0
    %3368 = vmatprep.subr.mxu0 0.0
    %3369 = vmatpush1.msra.mxu0 0.0
    %3370 = vmatprep.subr.mxu0 0.0
    %3371 = vmatpush1.msra.mxu0 0.0
    %3372 = vmatprep.subr.mxu0 0.0
    %3373 = vmatpush1.msra.mxu0 0.0
    %3374 = vmatprep.subr.mxu0 0.0
    %3375 = vmatpush1.msra.mxu0 0.0
    %3376 = vmatprep.subr.mxu0 0.0
    %3377 = vmatpush1.msra.mxu0 0.0
    %3378 = vmatprep.subr.mxu0 0.0
    %3379 = vmatpush1.msra.mxu0 0.0
    %3380 = vmatprep.subr.mxu0 0.0
    %3381 = vmatpush1.msra.mxu0 0.0
    %3382 = vmatprep.mubr.f32.mxu0 0.0
    %3383 = vmatmul.mubr.f32.gmra.mrb[0].mxu0 %v3313
    %v3384 = vpop.f32.mrb[0].mxu0
    %v3385 = vadd.f32 %v3310, %v3384
    %v3386 = vpop.f32.mrb[0].mxu0
    %3387 = vmatprep.mubr.f32.mxu0 0.0
    %3388 = vmatmul.mubr.f32.gmra.mrb[0].mxu0 %v3316
    %v3389 = vpop.f32.mrb[0].mxu0
    %v3390 = vadd.f32 %v3310, %v3389
    %v3391 = vpop.f32.mrb[0].mxu0
    %3392 = vdwg.mxu0
    %3393 = vst [vmem:[#allocation10] sm:$0xff] %v3385
    %3394 = vst [vmem:[#allocation10 + $0x8] sm:$0xff] %v3390
    %vm3395 = vcmp.lt.s32.totalorder %v117, 11
    %v3396 = vsel %vm3395, %v3385, -1e+30
    %v3397 = vsel %vm3395, %v3390, -1e+30
    %3398 = vmax.xlane.f32.xlu0 %v3396
    %v3399 = vpop.xlane.xlu0 %3398
    %3400 = vmax.xlane.f32.xlu0 %v3397
    %v3401 = vpop.xlane.xlu0 %3400
    %v3402 = vsub.f32 %v3396, %v3399
    %v3403 = vsub.f32 %v3397, %v3401
    %v3404 = vmul.f32 %v3402, 1.442695
    %v3405 = vpow.pop %v3404
    %v3406 = vmul.f32 %v3403, 1.442695
    %v3407 = vpow.pop %v3406
    %3408 = vadd.xlane.f32.xlu0 %v3405
    %v3409 = vpop.xlane.xlu0 %3408
    %3410 = vadd.xlane.f32.xlu0 %v3407
    %v3411 = vpop.xlane.xlu0 %3410
    %v3412 = vlog2.pop %v3409
    %v3413 = vmul.f32 %v3412, 0.6931472
    %v3414 = vlog2.pop %v3411
    %v3415 = vmul.f32 %v3414, 0.6931472
    %v3416 = vadd.f32 %v3413, %v3399
    %v3417 = vadd.f32 %v3415, %v3401
    %v3418 = vld [vmem:[%s1] sm:$0xff]
    %v3419 = vld [vmem:[%s1 + $0x8] sm:$0xff]
    %3420 = vset.pattern.permute.xlu0 0
    %3421 = vperm.xlu0 %3420, %v3418
    %v3422 = vpop.permute.xlu0 %3421
    %3423 = vset.pattern.permute.xlu0 0
    %3424 = vperm.xlu0 %3423, %v3419
    %v3425 = vpop.permute.xlu0 %3424
    %vm3426 = vcmp.eq.s32.totalorder %v117, %v3422
    %vm3427 = vcmp.eq.s32.totalorder %v117, %v3425
    %v3428 = vsel %vm3426, 1, 0
    %v3429 = vsel %vm3427, 1, 0
    %v3430 = vcvt.s32.f32 %v3428
    %v3431 = vcvt.s32.f32 %v3429
    %v3432 = vmul.f32 %v3430, %v3385
    %v3433 = vmul.f32 %v3431, %v3390
    %3434 = vadd.xlane.f32.xlu0 %v3432
    %v3435 = vpop.xlane.xlu0 %3434
    %3436 = vadd.xlane.f32.xlu0 %v3433
    %v3437 = vpop.xlane.xlu0 %3436
    %v3438 = vsub.f32 %v3416, %v3435
    %v3439 = vsub.f32 %v3417, %v3437
    %v3440 = vld [vmem:[%s2] sm:$0xff]
    %v3441 = vld [vmem:[%s2 + $0x8] sm:$0xff]
    %vm3442 = vcmask 7168
    %v3443 = vsel %vm3442, %v3440, 0.0
    %v3444 = vsel %vm3442, %v3441, 0.0
    %v3445 = vadd.f32 %v3443, %v3444
    %3446 = vadd.xlane.f32.xlu0 %v3445
    %v3447 = vpop.xlane.xlu0 %3446
    %v3448 = vrot.slane %v3447, 4
    %v3449 = vadd.f32 %v3447, %v3448
    %v3450 = vrot.slane %v3449, 2
    %v3451 = vadd.f32 %v3449, %v3450
    %v3452 = vrot.slane %v3451, 1
    %v3453 = vadd.f32 %v3451, %v3452
    %s3454 = vtos %v3453
    %s3455 = sadd.f32 %s3454, 1e-10
    %v3456 = vmul.f32 %v3438, %v3440
    %v3457 = vmul.f32 %v3439, %v3441
    %v3458 = vsel %vm3442, %v3456, 0.0
    %v3459 = vsel %vm3442, %v3457, 0.0
    %v3460 = vadd.f32 %v3458, %v3459
    %3461 = vadd.xlane.f32.xlu0 %v3460
    %v3462 = vpop.xlane.xlu0 %3461
    %v3463 = vrot.slane %v3462, 4
    %v3464 = vadd.f32 %v3462, %v3463
    %v3465 = vrot.slane %v3464, 2
    %v3466 = vadd.f32 %v3464, %v3465
    %v3467 = vrot.slane %v3466, 1
    %v3468 = vadd.f32 %v3466, %v3467
    %s3469 = vtos %v3468
    %v3470 = vstv %s3455
    %v3471 = vrcp.pop %v3470
    %s3472 = vtos %v3471
    %s3473 = smul.f32 %s3469, %s3472
    %s3474 = sld [smem:[#allocation2]]
    %v3475 = vstv %s3474
    %v3476 = vrcp.pop %v3475
    %s3477 = vtos %v3476
    %s3478 = smul.f32 %s3473, %s3477
    %s3479 = scalar_lea.smem [#allocation11], 0
    %3480 = sst [smem:[%s3479]] %s3478
    // Predicated region
    $region98: #{tpu_custom_call.1} parent=1 // pred_check
      _
    $region99: #{tpu_custom_call.1} parent=1 // pred_check_branch
      %3482 = sbr.rel (0) target = $region101
    $region100: #{tpu_custom_call.1} parent=1 // pred_region
      %s3484 = ssub.s32 256, 256
      %3485 = vsyncadd [#allocation5], %s3484
      %s3486 = sshll.u32 [#allocation10], 4
      %s3487 = int_to_ptr.vmem [resolvable:$true] %s3486
      %3492 = dma.vmem_to_hbm [thread:$0]  %s3487, 256, %s21, [#allocation5], 128, 128, 8
    $region101: #{tpu_custom_call.1} parent=1 // pred_fallthru
      _
    // Predicated region
    $region102: #{tpu_custom_call.1} parent=1 // pred_check
      _
    $region103: #{tpu_custom_call.1} parent=1 // pred_check_branch
      %3494 = sbr.rel (0) target = $region105
    $region104: #{tpu_custom_call.1} parent=1 // pred_region
      %s3496 = ssub.s32 16, 16
      %3497 = vsyncadd [#allocation6], %s3496
      %3500 = dma.smem_to_hbm [#allocation11], 16, %s22, [#allocation6]
    $region105: #{tpu_custom_call.1} parent=1 // pred_fallthru
      _
    // Predicated region
    $region106: #{tpu_custom_call.1} parent=1 // pred_check
      _
    $region107: #{tpu_custom_call.1} parent=1 // pred_check_branch
      %3502 = sbr.rel (0) target = $region109
    $region108: #{tpu_custom_call.1} parent=1 // pred_region
      %3503 = dma.done [#allocation5], 256
    $region109: #{tpu_custom_call.1} parent=1 // pred_fallthru
      _
    // Predicated region
    $region110: #{tpu_custom_call.1} parent=1 // pred_check
      _
    $region111: #{tpu_custom_call.1} parent=1 // pred_check_branch
      %3505 = sbr.rel (0) target = $region113
    $region112: #{tpu_custom_call.1} parent=1 // pred_region
      %3506 = dma.done [#allocation6], 16
    $region113: #{tpu_custom_call.1} parent=1 // pred_fallthru
      _
    %3507 = sfence
    %3508 = vsyncpa [#allocation4], 1
    %3509 = vsyncpa [#allocation8], 1
    %3510 = vsyncpa [#allocation5], 1
    %3511 = vsyncpa [#allocation6], 1

</llo_original>
